<compile_context>
chip_gen: v7x
topology: tpu7x:2x2x1
jax: 0.10.0
libtpu: 0.0.40
codegen_flags: <defaults>
</compile_context>

<pallas_src>
import functools

import jax
import jax.numpy as jnp
import numpy as np
from jax import lax
from jax.experimental import pallas as pl
from jax.experimental.pallas import tpu as pltpu

LANE = 128


def _round_up(x, m):
    return (x + m - 1) // m * m


def _vmem_cap_bytes():
    """Physical VMEM of the current chip (fallback: v7x's 64 MiB)."""
    try:
        info_fn = getattr(pltpu, "get_tpu_info", None)
        if info_fn is not None:
            return int(info_fn().vmem_capacity_bytes)
    except Exception:
        pass
    return 64 << 20


def _clamp_vmem(need_bytes):
    cap = (_vmem_cap_bytes() * 7) // 8   # leave headroom for internal scratch
    return int(min(max(2 * need_bytes, 16 << 20), cap))


def _pick_oh_tile(oh, ow, max_rows):
    """Largest divisor d of oh with d*ow <= max_rows and (d*ow) % 8 == 0."""
    if oh * ow <= max_rows:
        return oh
    best = None
    for d in range(1, oh):
        if oh % d == 0 and d * ow <= max_rows and (d * ow) % 8 == 0:
            best = d
    # TODO(synk): halo-DMA input tiling for huge images with no usable divisor.
    return best if best is not None else oh


def _pick_spatial_tile(sp, target=2048):
    """Divisor of sp that is a multiple of 128 (lane-dense NCHW store), or sp."""
    if sp <= target:
        return sp
    d = (target // LANE) * LANE
    while d >= LANE:
        if sp % d == 0:
            return d
        d -= LANE
    # TODO(synk): ragged masking for sp with no multiple-of-128 divisor.
    return sp


# ---------------------------------------------------------------------------
# Kernel 1: fused conv (single concatenated-K MXU matmul) + BN partial stats
# ---------------------------------------------------------------------------
def _conv_stats_kernel(x_ref, w_ref, y_ref, stats_ref, patch_ref, acc_ref, *,
                       kh, kw, oh_t, ow, stride, dilation, cin, n_oht):
    # x_ref:     (1, HP, WP, Cin)      padded NHWC image for this sample
    # w_ref:     (KH*KW*Cin, TC)       weights for this Cout tile
    # y_ref:     (1, oh_t*ow, TC)      conv intermediate (bf16/f32)
    # stats_ref: (1, 1, 2, TC)         per-(sample, OH-tile) (sum, sum_sq)
    # patch_ref: (oh_t*ow, KH*KW*Cin)  VMEM im2col patch scratch
    # acc_ref:   (oh_t*ow, TC)         f32 MXU accumulator scratch
    oht = pl.program_id(1)
    ct = pl.program_id(2)

    # Build the im2col patch once per (sample, OH-tile); it is reused across
    # all Cout tiles (the ct grid axis is "arbitrary", so this is safe).
    @pl.when(ct == 0)
    def _build_patch():
        for i in range(kh):
            for j in range(kw):
                if n_oht == 1:
                    h0 = i * dilation                          # static slice
                else:
                    h0 = oht * (oh_t * stride) + i * dilation  # dynamic row offset
                w0 = j * dilation
                if stride == 1:
                    win = x_ref[0, pl.ds(h0, oh_t), pl.ds(w0, ow), :]
                else:
                    win = x_ref[0, pl.ds(h0, oh_t, stride),
                                pl.ds(w0, ow, stride), :]
                t = i * kw + j
                patch_ref[:, t * cin:(t + 1) * cin] = win.reshape(oh_t * ow, cin)

    # One MXU matmul with the full contraction K = KH*KW*Cin, f32 accumulate.
    acc_ref[...] = jnp.dot(patch_ref[...], w_ref[...],
                           preferred_element_type=jnp.float32)

    y_ref[...] = acc_ref[...].astype(y_ref.dtype)[None]

    # BN pass-1 partials straight off the f32 accumulator (no extra HBM read).
    # TODO(synk): E[x^2]-E[x]^2 can lose precision for large-mean activations;
    #             switch to a centered/compensated reduction if that matters.
    stats_ref[0, 0, 0:1, :] = jnp.sum(acc_ref[...], axis=0, keepdims=True)
    a = acc_ref[...]
    stats_ref[0, 0, 1:2, :] = jnp.sum(a * a, axis=0, keepdims=True)


# ---------------------------------------------------------------------------
# Kernel 2: streaming BN apply, emits the final f32 output directly in NCHW
# ---------------------------------------------------------------------------
def _bn_apply_nchw_kernel(y_ref, scale_ref, bias_ref, out_ref, *, cout):
    # y_ref:   (1, TS, Cout_pad)  conv intermediate (bf16/f32)
    # scale/bias: (1, Cout_pad)   fused per-channel BN scale / bias (f32)
    # out_ref: (1, Cout, TS)      final output, channel-major (NCHW), f32
    z = y_ref[0].astype(jnp.float32) * scale_ref[...] + bias_ref[...]
    out_ref[0] = z.T[:cout, :]


# ---------------------------------------------------------------------------
# Wrapper: BasicConv2d forward (Conv2d no-bias -> BatchNorm2d, training stats)
# ---------------------------------------------------------------------------
def basic_conv2d(x, weight, gamma, beta, *, stride=1, padding=0, dilation=1,
                 eps=1e-5, mxu_dtype=jnp.bfloat16, max_rows_per_tile=1024):
    """x: (N, Cin, H, W); weight: (Cout, Cin, KH, KW); gamma/beta: (Cout,).

    Returns (N, Cout, OH, OW) float32.
    """
    n, cin, h, w = x.shape
    cout, _, kh, kw = weight.shape

    hp, wp = h + 2 * padding, w + 2 * padding
    oh = (hp - (dilation * (kh - 1) + 1)) // stride + 1
    ow = (wp - (dilation * (kw - 1) + 1)) // stride + 1
    sp = oh * ow
    m = n * sp
    k_dim = kh * kw * cin

    # Cout padded so MXU columns / stores are lane-dense; 256-wide tiles feed
    # the full v6e/v7x MXU (on v5e a 256 tile is just two internal passes).
    cout_pad = _round_up(cout, LANE)
    tcout = 256 if cout_pad % 256 == 0 else LANE
    n_ct = cout_pad // tcout

    oh_t = _pick_oh_tile(oh, ow, max_rows_per_tile)
    n_oht = oh // oh_t
    mt = oh_t * ow

    mxu_dt = jnp.dtype(mxu_dtype)
    mxu_bytes = mxu_dt.itemsize
    y_dtype = jnp.bfloat16 if mxu_dt == jnp.dtype(jnp.bfloat16) else jnp.float32
    y_bytes = jnp.dtype(y_dtype).itemsize

    # ---- layout plumbing on the (small, Cin-channel) input ------------------
    # TODO(synk): accept NHWC input directly and skip this transpose+pad pass.
    x_pad = jnp.pad(jnp.transpose(x.astype(mxu_dtype), (0, 2, 3, 1)),
                    ((0, 0), (padding, padding), (padding, padding), (0, 0)))
    # weight (Cout, Cin, KH, KW) -> (KH*KW*Cin, Cout_pad), zero-padded columns.
    w2 = jnp.transpose(weight.astype(mxu_dtype), (2, 3, 1, 0)).reshape(k_dim, cout)
    w2 = jnp.pad(w2, ((0, 0), (0, cout_pad - cout)))

    # ---- pass 1: fused conv + BN partial statistics --------------------------
    conv_need = (2 * hp * wp * cin * mxu_bytes
                 + 2 * k_dim * tcout * mxu_bytes
                 + 2 * mt * tcout * y_bytes
                 + 2 * 2 * tcout * 4
                 + mt * k_dim * mxu_bytes
                 + mt * tcout * 4)
    conv_cost = pl.CostEstimate(
        flops=2 * m * k_dim * cout_pad, transcendentals=0,
        bytes_accessed=int(n * hp * wp * cin * mxu_bytes
                           + n * k_dim * cout_pad * mxu_bytes
                           + m * cout_pad * y_bytes
                           + n * n_oht * 2 * cout_pad * 4))

    y_pix, stats = pl.pallas_call(
        functools.partial(_conv_stats_kernel, kh=kh, kw=kw, oh_t=oh_t, ow=ow,
                          stride=stride, dilation=dilation, cin=cin,
                          n_oht=n_oht),
        out_shape=(jax.ShapeDtypeStruct((n, sp, cout_pad), y_dtype),
                   jax.ShapeDtypeStruct((n, n_oht, 2, cout_pad), jnp.float32)),
        grid=(n, n_oht, n_ct),
        in_specs=[
            pl.BlockSpec((1, hp, wp, cin), lambda b, t, c: (b, 0, 0, 0)),
            pl.BlockSpec((k_dim, tcout), lambda b, t, c: (0, c)),
        ],
        out_specs=(
            pl.BlockSpec((1, mt, tcout), lambda b, t, c: (b, t, c)),
            pl.BlockSpec((1, 1, 2, tcout), lambda b, t, c: (b, t, 0, c)),
        ),
        scratch_shapes=[pltpu.VMEM((mt, k_dim), mxu_dtype),
                        pltpu.VMEM((mt, tcout), jnp.float32)],
        compiler_params=pltpu.CompilerParams(
            dimension_semantics=("parallel", "parallel", "arbitrary"),
            vmem_limit_bytes=_clamp_vmem(conv_need)),
        cost_estimate=conv_cost,
    )(x_pad, w2)

    # ---- finalize: batch stats -> fused per-channel scale / bias (tiny) -----
    ssum = jnp.sum(stats[:, :, 0, :], axis=(0, 1))
    ssq = jnp.sum(stats[:, :, 1, :], axis=(0, 1))
    mean = ssum / m
    var = jnp.maximum(ssq / m - mean * mean, 0.0)   # biased var (PyTorch training)
    gamma_pad = jnp.pad(gamma.astype(jnp.float32), (0, cout_pad - cout))
    beta_pad = jnp.pad(beta.astype(jnp.float32), (0, cout_pad - cout))
    inv_std = lax.rsqrt(var + eps)
    scale_v = gamma_pad * inv_std
    bias_v = beta_pad - mean * scale_v
    scale = scale_v.reshape(1, cout_pad)
    bias = bias_v.reshape(1, cout_pad)

    # ---- pass 2: stream tiles, out = y * scale + bias, write NCHW directly --
    ts = _pick_spatial_tile(sp)
    n_sp = sp // ts
    bn_need = (2 * ts * cout_pad * y_bytes + 2 * cout * ts * 4
               + 2 * 2 * cout_pad * 4)
    bn_cost = pl.CostEstimate(
        flops=2 * m * cout_pad, transcendentals=0,
        bytes_accessed=int(m * cout_pad * y_bytes + m * cout * 4
                           + 2 * cout_pad * 4))

    out_nc = pl.pallas_call(
        functools.partial(_bn_apply_nchw_kernel, cout=cout),
        out_shape=jax.ShapeDtypeStruct((n, cout, sp), jnp.float32),
        grid=(n, n_sp),
        in_specs=[
            pl.BlockSpec((1, ts, cout_pad), lambda b, s: (b, s, 0)),
            pl.BlockSpec((1, cout_pad), lambda b, s: (0, 0)),
            pl.BlockSpec((1, cout_pad), lambda b, s: (0, 0)),
        ],
        out_specs=pl.BlockSpec((1, cout, ts), lambda b, s: (b, 0, s)),
        compiler_params=pltpu.CompilerParams(
            dimension_semantics=("parallel", "parallel"),
            vmem_limit_bytes=_clamp_vmem(bn_need)),
        cost_estimate=bn_cost,
    )(y_pix, scale, bias)

    # (N, Cout, OH*OW) -> (N, Cout, OH, OW): contiguous reshape, no HBM pass.
    return out_nc.reshape(n, cout, oh, ow)


# ---------------------------------------------------------------------------
# Pure-JAX f32 reference (for correctness check)
# ---------------------------------------------------------------------------
def _reference(x, weight, gamma, beta, *, stride, padding, dilation, eps=1e-5):
    y = lax.conv_general_dilated(
        x.astype(jnp.float32), weight.astype(jnp.float32),
        window_strides=(stride, stride),
        padding=[(padding, padding), (padding, padding)],
        rhs_dilation=(dilation, dilation),
        dimension_numbers=("NCHW", "OIHW", "NCHW"))
    mean = jnp.mean(y, axis=(0, 2, 3), keepdims=True)
    var = jnp.mean((y - mean) ** 2, axis=(0, 2, 3), keepdims=True)
    yhat = (y - mean) * lax.rsqrt(var + eps)
    return yhat * gamma.reshape(1, -1, 1, 1) + beta.reshape(1, -1, 1, 1)


if __name__ == "__main__":
    # BasicConv2d(in_planes=4, out_planes=8, kernel_size=3, stride=1, padding=1)
    in_planes, out_planes = 4, 8
    kernel_size, stride, padding, dilation = 3, 1, 1, 1

    key = jax.random.PRNGKey(0)
    kx, kw_, kg, kb = jax.random.split(key, 4)

    x = jax.random.normal(kx, (2, in_planes, 16, 16), dtype=jnp.float32)
    weight = 0.1 * jax.random.normal(
        kw_, (out_planes, in_planes, kernel_size, kernel_size), dtype=jnp.float32)
    gamma = 0.5 + jax.random.uniform(kg, (out_planes,), dtype=jnp.float32)
    beta = 0.1 * jax.random.normal(kb, (out_planes,), dtype=jnp.float32)

    out = basic_conv2d(x, weight, gamma, beta,
                       stride=stride, padding=padding, dilation=dilation)
    out = jax.block_until_ready(out)

    # Reference with bf16-quantized inputs (what the kernel's MXU consumes);
    # the tolerance covers the bf16 storage of the conv intermediate.
    x_q = x.astype(jnp.bfloat16).astype(jnp.float32)
    w_q = weight.astype(jnp.bfloat16).astype(jnp.float32)
    ref = _reference(x_q, w_q, gamma, beta,
                     stride=stride, padding=padding, dilation=dilation)
    np.testing.assert_allclose(np.asarray(out), np.asarray(ref),
                               rtol=2e-2, atol=3e-2)

    # Also exercise the OH-tiled path (multi-tile grid, dynamic row offsets).
    out_tiled = basic_conv2d(x, weight, gamma, beta,
                             stride=stride, padding=padding, dilation=dilation,
                             max_rows_per_tile=64)
    out_tiled = jax.block_until_ready(out_tiled)
    np.testing.assert_allclose(np.asarray(out_tiled), np.asarray(ref),
                               rtol=2e-2, atol=3e-2)

    print("KERNEL_OK")
</pallas_src>

<mosaic_0001>
module attributes {stable_mosaic.version = 11 : i64} {
  func.func @_conv_stats_kernel(%arg0: i32, %arg1: i32, %arg2: i32, %arg3: memref<1x18x18x4xbf16, #tpu.memory_space<vmem>>, %arg4: memref<36x128xbf16, #tpu.memory_space<vmem>>, %arg5: memref<1x256x128xbf16, #tpu.memory_space<vmem>>, %arg6: memref<1x1x2x128xf32, #tpu.memory_space<vmem>>, %arg7: memref<256x36xbf16, #tpu.memory_space<vmem>>, %arg8: memref<256x128xf32, #tpu.memory_space<vmem>>) attributes {dimension_semantics = [#tpu.dimension_semantics<parallel>, #tpu.dimension_semantics<parallel>, #tpu.dimension_semantics<arbitrary>], iteration_bounds = array<i64: 2, 1, 1>, scalar_prefetch = 0 : i64, scratch_operands = 2 : i64, tpu.core_type = #tpu.core_type<tc>, window_params = [{transform_indices = @transform_0, window_bounds = array<i64: 1, 18, 18, 4>}, {transform_indices = @transform_1, window_bounds = array<i64: 36, 128>}, {transform_indices = @transform_2, window_bounds = array<i64: 1, 256, 128>}, {transform_indices = @transform_3, window_bounds = array<i64: 1, 1, 2, 128>}]} {
    %c0_i32 = arith.constant 0 : i32
    %0 = arith.cmpi eq, %arg2, %c0_i32 : i32
    %1 = arith.extui %0 : i1 to i32
    %c0_i32_0 = arith.constant 0 : i32
    %2 = arith.cmpi ne, %1, %c0_i32_0 : i32
    scf.if %2 {
      %c0_24 = arith.constant 0 : index
      %c0_25 = arith.constant 0 : index
      %c0_26 = arith.constant 0 : index
      %c0_27 = arith.constant 0 : index
      %24 = vector.load %arg3[%c0_24, %c0_25, %c0_26, %c0_27] : memref<1x18x18x4xbf16, #tpu.memory_space<vmem>>, vector<1x16x16x4xbf16>
      %25 = vector.shape_cast %24 : vector<1x16x16x4xbf16> to vector<16x16x4xbf16>
      %26 = vector.shape_cast %25 : vector<16x16x4xbf16> to vector<256x4xbf16>
      %c0_28 = arith.constant 0 : index
      %c0_29 = arith.constant 0 : index
      %27 = vector.load %arg7[%c0_28, %c0_29] : memref<256x36xbf16, #tpu.memory_space<vmem>>, vector<256x4xbf16>
      tpu.vector_store %arg7[%c0_28, %c0_29], %26 {strides = array<i32>} : memref<256x36xbf16, #tpu.memory_space<vmem>>, vector<256x4xbf16>,
      %c0_30 = arith.constant 0 : index
      %c0_31 = arith.constant 0 : index
      %c1_32 = arith.constant 1 : index
      %c0_33 = arith.constant 0 : index
      %28 = vector.load %arg3[%c0_30, %c0_31, %c1_32, %c0_33] : memref<1x18x18x4xbf16, #tpu.memory_space<vmem>>, vector<1x16x16x4xbf16>
      %29 = vector.shape_cast %28 : vector<1x16x16x4xbf16> to vector<16x16x4xbf16>
      %30 = vector.shape_cast %29 : vector<16x16x4xbf16> to vector<256x4xbf16>
      %c0_34 = arith.constant 0 : index
      %c4 = arith.constant 4 : index
      %31 = vector.load %arg7[%c0_34, %c4] : memref<256x36xbf16, #tpu.memory_space<vmem>>, vector<256x4xbf16>
      tpu.vector_store %arg7[%c0_34, %c4], %30 {strides = array<i32>} : memref<256x36xbf16, #tpu.memory_space<vmem>>, vector<256x4xbf16>,
      %c0_35 = arith.constant 0 : index
      %c0_36 = arith.constant 0 : index
      %c2 = arith.constant 2 : index
      %c0_37 = arith.constant 0 : index
      %32 = vector.load %arg3[%c0_35, %c0_36, %c2, %c0_37] : memref<1x18x18x4xbf16, #tpu.memory_space<vmem>>, vector<1x16x16x4xbf16>
      %33 = vector.shape_cast %32 : vector<1x16x16x4xbf16> to vector<16x16x4xbf16>
      %34 = vector.shape_cast %33 : vector<16x16x4xbf16> to vector<256x4xbf16>
      %c0_38 = arith.constant 0 : index
      %c8 = arith.constant 8 : index
      %35 = vector.load %arg7[%c0_38, %c8] : memref<256x36xbf16, #tpu.memory_space<vmem>>, vector<256x4xbf16>
      tpu.vector_store %arg7[%c0_38, %c8], %34 {strides = array<i32>} : memref<256x36xbf16, #tpu.memory_space<vmem>>, vector<256x4xbf16>,
      %c0_39 = arith.constant 0 : index
      %c1_40 = arith.constant 1 : index
      %c0_41 = arith.constant 0 : index
      %c0_42 = arith.constant 0 : index
      %36 = vector.load %arg3[%c0_39, %c1_40, %c0_41, %c0_42] : memref<1x18x18x4xbf16, #tpu.memory_space<vmem>>, vector<1x16x16x4xbf16>
      %37 = vector.shape_cast %36 : vector<1x16x16x4xbf16> to vector<16x16x4xbf16>
      %38 = vector.shape_cast %37 : vector<16x16x4xbf16> to vector<256x4xbf16>
      %c0_43 = arith.constant 0 : index
      %c12 = arith.constant 12 : index
      %39 = vector.load %arg7[%c0_43, %c12] : memref<256x36xbf16, #tpu.memory_space<vmem>>, vector<256x4xbf16>
      tpu.vector_store %arg7[%c0_43, %c12], %38 {strides = array<i32>} : memref<256x36xbf16, #tpu.memory_space<vmem>>, vector<256x4xbf16>,
      %c0_44 = arith.constant 0 : index
      %c1_45 = arith.constant 1 : index
      %c1_46 = arith.constant 1 : index
      %c0_47 = arith.constant 0 : index
      %40 = vector.load %arg3[%c0_44, %c1_45, %c1_46, %c0_47] : memref<1x18x18x4xbf16, #tpu.memory_space<vmem>>, vector<1x16x16x4xbf16>
      %41 = vector.shape_cast %40 : vector<1x16x16x4xbf16> to vector<16x16x4xbf16>
      %42 = vector.shape_cast %41 : vector<16x16x4xbf16> to vector<256x4xbf16>
      %c0_48 = arith.constant 0 : index
      %c16 = arith.constant 16 : index
      %43 = vector.load %arg7[%c0_48, %c16] : memref<256x36xbf16, #tpu.memory_space<vmem>>, vector<256x4xbf16>
      tpu.vector_store %arg7[%c0_48, %c16], %42 {strides = array<i32>} : memref<256x36xbf16, #tpu.memory_space<vmem>>, vector<256x4xbf16>,
      %c0_49 = arith.constant 0 : index
      %c1_50 = arith.constant 1 : index
      %c2_51 = arith.constant 2 : index
      %c0_52 = arith.constant 0 : index
      %44 = vector.load %arg3[%c0_49, %c1_50, %c2_51, %c0_52] : memref<1x18x18x4xbf16, #tpu.memory_space<vmem>>, vector<1x16x16x4xbf16>
      %45 = vector.shape_cast %44 : vector<1x16x16x4xbf16> to vector<16x16x4xbf16>
      %46 = vector.shape_cast %45 : vector<16x16x4xbf16> to vector<256x4xbf16>
      %c0_53 = arith.constant 0 : index
      %c20 = arith.constant 20 : index
      %47 = vector.load %arg7[%c0_53, %c20] : memref<256x36xbf16, #tpu.memory_space<vmem>>, vector<256x4xbf16>
      tpu.vector_store %arg7[%c0_53, %c20], %46 {strides = array<i32>} : memref<256x36xbf16, #tpu.memory_space<vmem>>, vector<256x4xbf16>,
      %c0_54 = arith.constant 0 : index
      %c2_55 = arith.constant 2 : index
      %c0_56 = arith.constant 0 : index
      %c0_57 = arith.constant 0 : index
      %48 = vector.load %arg3[%c0_54, %c2_55, %c0_56, %c0_57] : memref<1x18x18x4xbf16, #tpu.memory_space<vmem>>, vector<1x16x16x4xbf16>
      %49 = vector.shape_cast %48 : vector<1x16x16x4xbf16> to vector<16x16x4xbf16>
      %50 = vector.shape_cast %49 : vector<16x16x4xbf16> to vector<256x4xbf16>
      %c0_58 = arith.constant 0 : index
      %c24 = arith.constant 24 : index
      %51 = vector.load %arg7[%c0_58, %c24] : memref<256x36xbf16, #tpu.memory_space<vmem>>, vector<256x4xbf16>
      tpu.vector_store %arg7[%c0_58, %c24], %50 {strides = array<i32>} : memref<256x36xbf16, #tpu.memory_space<vmem>>, vector<256x4xbf16>,
      %c0_59 = arith.constant 0 : index
      %c2_60 = arith.constant 2 : index
      %c1_61 = arith.constant 1 : index
      %c0_62 = arith.constant 0 : index
      %52 = vector.load %arg3[%c0_59, %c2_60, %c1_61, %c0_62] : memref<1x18x18x4xbf16, #tpu.memory_space<vmem>>, vector<1x16x16x4xbf16>
      %53 = vector.shape_cast %52 : vector<1x16x16x4xbf16> to vector<16x16x4xbf16>
      %54 = vector.shape_cast %53 : vector<16x16x4xbf16> to vector<256x4xbf16>
      %c0_63 = arith.constant 0 : index
      %c28 = arith.constant 28 : index
      %55 = vector.load %arg7[%c0_63, %c28] : memref<256x36xbf16, #tpu.memory_space<vmem>>, vector<256x4xbf16>
      tpu.vector_store %arg7[%c0_63, %c28], %54 {strides = array<i32>} : memref<256x36xbf16, #tpu.memory_space<vmem>>, vector<256x4xbf16>,
      %c0_64 = arith.constant 0 : index
      %c2_65 = arith.constant 2 : index
      %c2_66 = arith.constant 2 : index
      %c0_67 = arith.constant 0 : index
      %56 = vector.load %arg3[%c0_64, %c2_65, %c2_66, %c0_67] : memref<1x18x18x4xbf16, #tpu.memory_space<vmem>>, vector<1x16x16x4xbf16>
      %57 = vector.shape_cast %56 : vector<1x16x16x4xbf16> to vector<16x16x4xbf16>
      %58 = vector.shape_cast %57 : vector<16x16x4xbf16> to vector<256x4xbf16>
      %c0_68 = arith.constant 0 : index
      %c32 = arith.constant 32 : index
      %59 = vector.load %arg7[%c0_68, %c32] : memref<256x36xbf16, #tpu.memory_space<vmem>>, vector<256x4xbf16>
      tpu.vector_store %arg7[%c0_68, %c32], %58 {strides = array<i32>} : memref<256x36xbf16, #tpu.memory_space<vmem>>, vector<256x4xbf16>,
    } else {
    }
    %c0 = arith.constant 0 : index
    %c0_1 = arith.constant 0 : index
    %3 = vector.load %arg7[%c0, %c0_1] : memref<256x36xbf16, #tpu.memory_space<vmem>>, vector<256x36xbf16>
    %c0_2 = arith.constant 0 : index
    %c0_3 = arith.constant 0 : index
    %4 = vector.load %arg4[%c0_2, %c0_3] : memref<36x128xbf16, #tpu.memory_space<vmem>>, vector<36x128xbf16>
    %cst = arith.constant dense<0.000000e+00> : vector<256x128xf32>
    %5 = tpu.matmul %3, %4, %cst {dimension_numbers = #tpu.dot_dimension_numbers<[1], [0], [0], [1], [0, 0, 1, 1], [], []>} : vector<256x36xbf16>, vector<36x128xbf16>, vector<256x128xf32> -> vector<256x128xf32>
    %c0_4 = arith.constant 0 : index
    %c0_5 = arith.constant 0 : index
    %6 = vector.load %arg8[%c0_4, %c0_5] : memref<256x128xf32, #tpu.memory_space<vmem>>, vector<256x128xf32>
    tpu.vector_store %arg8[%c0_4, %c0_5], %5 {strides = array<i32>} : memref<256x128xf32, #tpu.memory_space<vmem>>, vector<256x128xf32>,
    %c0_6 = arith.constant 0 : index
    %c0_7 = arith.constant 0 : index
    %7 = vector.load %arg8[%c0_6, %c0_7] : memref<256x128xf32, #tpu.memory_space<vmem>>, vector<256x128xf32>
    %8 = arith.truncf %7 : vector<256x128xf32> to vector<256x128xbf16>
    %9 = vector.shape_cast %8 : vector<256x128xbf16> to vector<1x256x128xbf16>
    %c0_8 = arith.constant 0 : index
    %c0_9 = arith.constant 0 : index
    %c0_10 = arith.constant 0 : index
    %10 = vector.load %arg5[%c0_8, %c0_9, %c0_10] : memref<1x256x128xbf16, #tpu.memory_space<vmem>>, vector<1x256x128xbf16>
    tpu.vector_store %arg5[%c0_8, %c0_9, %c0_10], %9 {strides = array<i32>} : memref<1x256x128xbf16, #tpu.memory_space<vmem>>, vector<1x256x128xbf16>,
    %c0_11 = arith.constant 0 : index
    %c0_12 = arith.constant 0 : index
    %11 = vector.load %arg8[%c0_11, %c0_12] : memref<256x128xf32, #tpu.memory_space<vmem>>, vector<256x128xf32>
    %cst_13 = arith.constant dense<0.000000e+00> : vector<128xf32>
    %12 = vector.multi_reduction <add>, %11, %cst_13 [0] : vector<256x128xf32> to vector<128xf32>
    %13 = vector.shape_cast %12 : vector<128xf32> to vector<1x128xf32>
    %c0_14 = arith.constant 0 : index
    %c0_15 = arith.constant 0 : index
    %c0_16 = arith.constant 0 : index
    %c0_17 = arith.constant 0 : index
    %14 = vector.load %arg6[%c0_14, %c0_15, %c0_16, %c0_17] : memref<1x1x2x128xf32, #tpu.memory_space<vmem>>, vector<1x1x1x128xf32>
    %15 = vector.shape_cast %14 : vector<1x1x1x128xf32> to vector<1x128xf32>
    %16 = vector.shape_cast %13 : vector<1x128xf32> to vector<1x1x1x128xf32>
    tpu.vector_store %arg6[%c0_14, %c0_15, %c0_16, %c0_17], %16 {strides = array<i32>} : memref<1x1x2x128xf32, #tpu.memory_space<vmem>>, vector<1x1x1x128xf32>,
    %c0_18 = arith.constant 0 : index
    %c0_19 = arith.constant 0 : index
    %17 = vector.load %arg8[%c0_18, %c0_19] : memref<256x128xf32, #tpu.memory_space<vmem>>, vector<256x128xf32>
    %18 = arith.mulf %17, %17 : vector<256x128xf32>
    %cst_20 = arith.constant dense<0.000000e+00> : vector<128xf32>
    %19 = vector.multi_reduction <add>, %18, %cst_20 [0] : vector<256x128xf32> to vector<128xf32>
    %20 = vector.shape_cast %19 : vector<128xf32> to vector<1x128xf32>
    %c0_21 = arith.constant 0 : index
    %c0_22 = arith.constant 0 : index
    %c1 = arith.constant 1 : index
    %c0_23 = arith.constant 0 : index
    %21 = vector.load %arg6[%c0_21, %c0_22, %c1, %c0_23] : memref<1x1x2x128xf32, #tpu.memory_space<vmem>>, vector<1x1x1x128xf32>
    %22 = vector.shape_cast %21 : vector<1x1x1x128xf32> to vector<1x128xf32>
    %23 = vector.shape_cast %20 : vector<1x128xf32> to vector<1x1x1x128xf32>
    tpu.vector_store %arg6[%c0_21, %c0_22, %c1, %c0_23], %23 {strides = array<i32>} : memref<1x1x2x128xf32, #tpu.memory_space<vmem>>, vector<1x1x1x128xf32>,
    return
  }
  func.func @transform_0(%arg0: i32, %arg1: i32, %arg2: i32) -> (i32, i32, i32, i32) {
    %c0_i32 = arith.constant 0 : i32
    %c0_i32_0 = arith.constant 0 : i32
    %c0_i32_1 = arith.constant 0 : i32
    %c0_i32_2 = arith.constant 0 : i32
    return %arg0, %c0_i32, %c0_i32_0, %c0_i32_1 : i32, i32, i32, i32
  }
  func.func @transform_1(%arg0: i32, %arg1: i32, %arg2: i32) -> (i32, i32) {
    %c0_i32 = arith.constant 0 : i32
    %c0_i32_0 = arith.constant 0 : i32
    return %c0_i32, %arg2 : i32, i32
  }
  func.func @transform_2(%arg0: i32, %arg1: i32, %arg2: i32) -> (i32, i32, i32) {
    %c0_i32 = arith.constant 0 : i32
    return %arg0, %arg1, %arg2 : i32, i32, i32
  }
  func.func @transform_3(%arg0: i32, %arg1: i32, %arg2: i32) -> (i32, i32, i32, i32) {
    %c0_i32 = arith.constant 0 : i32
    %c0_i32_0 = arith.constant 0 : i32
    return %arg0, %arg1, %c0_i32, %arg2 : i32, i32, i32, i32
  }
}

</mosaic_0001>

<llo_original>
// kernel: tpu_custom_call.1
$region0: #{tpu_custom_call.1}
  #allocation0 [shape = 'u32[]', space=smem, size = 0x4, offset = 0x4, fixed_abs, tag = 'smem constant byte address 0x4 - core index']
  #allocation1 [shape = 'u32[144,128]{1,0:T(1,128)}', space=vmem, size = 0x12000, scoped, tag = 'internal scratch']
  #allocation2 [shape = 'bf16[256,36]{1,0:T(16,128)(2,1)}', space=vmem, size = 0x10000, scoped, tag = 'scratch operand']
  #allocation3 [shape = 'f32[256,128]{1,0:T(8,128)}', space=vmem, size = 0x20000, scoped, tag = 'scratch operand']
  %s0 = inlined_call_operand.vmem [shape: bf16[2,18,18,4], index: 0, kind: input, shape index: {}]
  %s1 = inlined_call_operand.vmem [shape: bf16[36,128], index: 1, kind: input, shape index: {}]
  %s2 = inlined_call_operand.hbm [shape: bf16[2,256,128], index: 2, kind: output, shape index: {0}]
  %s3 = inlined_call_operand.hbm [shape: f32[2,1,2,128], index: 3, kind: output, shape index: {1}]
  %4 = xla_tuple %s2, %s3
  %s5 = sld [smem:[#allocation0]]
  $region53: #{tpu_custom_call.1} parent=0
    _
  %s7 = ssub.s32 1, %s5
  %s8 = scalar_select 0, %s7, %s5
  $region1: #{tpu_custom_call.1} parent=0
    #allocation4 [shape = 'u8[131072]{0}', space=vmem, size = 0x20000, scoped, tag = 'output window, operand 0']
    #allocation5 [shape = 's32[2]{0}', space=sflag, size = 0x8, scoped, tag = 'scoped memory for tpu_custom_call.1']
    #allocation6 [shape = 'u8[2048]{0}', space=vmem, size = 0x800, scoped, tag = 'output window, operand 1']
    #allocation7 [shape = 's32[2]{0}', space=sflag, size = 0x8, scoped, tag = 'scoped memory for tpu_custom_call.1']
    %9 = vsyncpa [#allocation5], 0
    %s10 = scalar_lea.sflag [#allocation5], 1
    %11 = vsyncpa %s10, 0
    %12 = vsyncpa [#allocation7], 0
    %s13 = scalar_lea.sflag [#allocation7], 1
    %14 = vsyncpa %s13, 0
    loop: start=0, step=1, limit=4
    $region2: #{tpu_custom_call.1} parent=1 // loop_pre_header
      _
    $region3: #{tpu_custom_call.1} parent=1 // loop_header
      %s16 = sphi 0, %s20
      %p17 = scmp.ge.s32.totalorder %s16, 4
      %s23 = sphi 0, %s42
      %s24 = sphi 0, %s38
      %s25 = sphi 0, %s34
      %s26 = sphi 0, %s23
      %s27 = sphi 0, %s24
      %s28 = sphi 0, %s25
      %s29 = sphi 0, %s26
      %s30 = sphi 0, %s27
      %s31 = sphi 0, %s28
      %s45 = sphi 0, %s47
      %s48 = sphi 0, %s45
      %s49 = sphi 0, %s48
      %s65 = sphi 0, %s49
      %s71 = sphi 0, %s73
      %s74 = sphi 0, %s71
      %s75 = sphi 0, %s74
      %s91 = sphi 0, %s75
      %s101 = sphi 0, %s103
      %s104 = sphi 0, %s101
      %s105 = sphi 0, %s104
      %s121 = sphi 0, %s105
      %s131 = sphi 0, %s133
      %s134 = sphi 0, %s131
      %s135 = sphi 0, %s134
      %s151 = sphi 0, %s135
    $region4: #{tpu_custom_call.1} parent=1 // loop_header_branch
      %19 = sbr.rel (%p17) target = $region8
    $region5: #{tpu_custom_call.1} parent=1 // loop_body
      %s21 = ssub.s32 %s16, 1
      %s22 = ssub.s32 %s16, 2
      %s32 = sadd.s32 1, %s25
      %p33 = scmp.ge.s32.totalorder %s32, 1
      %s34 = scalar_select %p33, 0, %s32
      %s35 = sadd.s32 1, %s24
      %s36 = scalar_select %p33, %s35, %s24
      %p37 = scmp.ge.s32.totalorder %s36, 1
      %s38 = scalar_select %p37, 0, %s36
      %s39 = sadd.s32 1, %s23
      %s40 = scalar_select %p37, %s39, %s23
      %p41 = scmp.ge.s32.totalorder %s40, 2
      %s42 = scalar_select %p41, 0, %s40
      %s43 = ssub.s32 %s23, %s42
      %p44 = scmp.eq.s32.totalorder %s43, 0
      %s46 = sadd.s32 %s45, 1
      %s47 = scalar_select %p44, %s45, %s46
      %p50 = pneg %p44
      %p51 = scmp.eq.s32.totalorder %s16, 1
      %p52 = por %p50, %p51
      %p53 = scmp.ne.s32.totalorder %s45, %s48
      %p54 = scmp.eq.s32.totalorder %s16, 0
      %p55 = por %p53, %p54
      %p56 = scmp.ne.s32.totalorder %s45, %s48
      %p57 = scmp.eq.s32.totalorder %s21, 1
      %p58 = por %p56, %p57
      %p59 = scmp.ne.s32.totalorder %s48, %s49
      %p60 = scmp.eq.s32.totalorder %s21, 0
      %p61 = por %p59, %p60
      %p62 = scmp.ne.s32.totalorder %s48, %s49
      %p63 = scmp.eq.s32.totalorder %s22, 1
      %p64 = por %p62, %p63
      %p66 = scmp.ne.s32.totalorder %s49, %s65
      %p67 = scmp.eq.s32.totalorder %s22, 0
      %p68 = por %p66, %p67
      %s69 = ssub.s32 %s25, %s34
      %p70 = scmp.eq.s32.totalorder %s69, 0
      %s72 = sadd.s32 %s71, 1
      %s73 = scalar_select %p70, %s71, %s72
      %p76 = pneg %p70
      %p77 = scmp.eq.s32.totalorder %s16, 1
      %p78 = por %p76, %p77
      %p79 = scmp.ne.s32.totalorder %s71, %s74
      %p80 = scmp.eq.s32.totalorder %s16, 0
      %p81 = por %p79, %p80
      %p82 = scmp.ne.s32.totalorder %s71, %s74
      %p83 = scmp.eq.s32.totalorder %s21, 1
      %p84 = por %p82, %p83
      %p85 = scmp.ne.s32.totalorder %s74, %s75
      %p86 = scmp.eq.s32.totalorder %s21, 0
      %p87 = por %p85, %p86
      %p88 = scmp.ne.s32.totalorder %s74, %s75
      %p89 = scmp.eq.s32.totalorder %s22, 1
      %p90 = por %p88, %p89
      %p92 = scmp.ne.s32.totalorder %s75, %s91
      %p93 = scmp.eq.s32.totalorder %s22, 0
      %p94 = por %p92, %p93
      %s95 = ssub.s32 %s23, %s42
      %s96 = ssub.s32 %s24, %s38
      %s97 = sor.u32 %s95, %s96
      %s98 = ssub.s32 %s25, %s34
      %s99 = sor.u32 %s97, %s98
      %p100 = scmp.eq.s32.totalorder %s99, 0
      %s102 = sadd.s32 %s101, 1
      %s103 = scalar_select %p100, %s101, %s102
      %p106 = pneg %p100
      %p107 = scmp.eq.s32.totalorder %s16, 1
      %p108 = por %p106, %p107
      %p109 = scmp.ne.s32.totalorder %s101, %s104
      %p110 = scmp.eq.s32.totalorder %s16, 0
      %p111 = por %p109, %p110
      %p112 = scmp.ne.s32.totalorder %s101, %s104
      %p113 = scmp.eq.s32.totalorder %s21, 1
      %p114 = por %p112, %p113
      %p115 = scmp.ne.s32.totalorder %s104, %s105
      %p116 = scmp.eq.s32.totalorder %s21, 0
      %p117 = por %p115, %p116
      %p118 = scmp.ne.s32.totalorder %s104, %s105
      %p119 = scmp.eq.s32.totalorder %s22, 1
      %p120 = por %p118, %p119
      %p122 = scmp.ne.s32.totalorder %s105, %s121
      %p123 = scmp.eq.s32.totalorder %s22, 0
      %p124 = por %p122, %p123
      %s125 = ssub.s32 %s23, %s42
      %s126 = ssub.s32 %s24, %s38
      %s127 = sor.u32 %s125, %s126
      %s128 = ssub.s32 %s25, %s34
      %s129 = sor.u32 %s127, %s128
      %p130 = scmp.eq.s32.totalorder %s129, 0
      %s132 = sadd.s32 %s131, 1
      %s133 = scalar_select %p130, %s131, %s132
      %p136 = pneg %p130
      %p137 = scmp.eq.s32.totalorder %s16, 1
      %p138 = por %p136, %p137
      %p139 = scmp.ne.s32.totalorder %s131, %s134
      %p140 = scmp.eq.s32.totalorder %s16, 0
      %p141 = por %p139, %p140
      %p142 = scmp.ne.s32.totalorder %s131, %s134
      %p143 = scmp.eq.s32.totalorder %s21, 1
      %p144 = por %p142, %p143
      %p145 = scmp.ne.s32.totalorder %s134, %s135
      %p146 = scmp.eq.s32.totalorder %s21, 0
      %p147 = por %p145, %p146
      %p148 = scmp.ne.s32.totalorder %s134, %s135
      %p149 = scmp.eq.s32.totalorder %s22, 1
      %p150 = por %p148, %p149
      %p152 = scmp.ne.s32.totalorder %s135, %s151
      %p153 = scmp.eq.s32.totalorder %s22, 0
      %p154 = por %p152, %p153
      %p155 = scmp.le.s32.totalorder 1, %s16
      %p156 = scmp.lt.s32.totalorder %s16, 3
      %p157 = pnand %p155, %p156
      %p158 = pneg %p157
      // Predicated region
      $region9: #{tpu_custom_call.1} parent=5 // pred_check
        _
      $region10: #{tpu_custom_call.1} parent=5 // pred_check_branch
        %160 = sbr.rel (%p157) target = $region12
      $region11: #{tpu_custom_call.1} parent=5 // pred_region
        %s161 = ssub.s32 %s16, 1
        // Predicated region
        $region13: #{tpu_custom_call.1} parent=11 // pred_check
          %p162 = pneg %p87
        $region14: #{tpu_custom_call.1} parent=11 // pred_check_branch
          %164 = sbr.rel (%p162) target = $region16
        $region15: #{tpu_custom_call.1} parent=11 // pred_region
          %p165 = scmp.lt.s32.totalorder %s28, 0
          %s166 = scalar_select %p165, %s28, 0
          %s167 = smul.addr %s166, 4
          %s168 = scalar_lea.vmem %s1, %s167
        $region16: #{tpu_custom_call.1} parent=11 // pred_fallthru
          _
      $region12: #{tpu_custom_call.1} parent=5 // pred_fallthru
        _
      %p169 = scmp.lt.s32.totalorder %s16, 2
      // Predicated region
      $region17: #{tpu_custom_call.1} parent=5 // pred_check
        %p170 = pneg %p169
      $region18: #{tpu_custom_call.1} parent=5 // pred_check_branch
        %172 = sbr.rel (%p170) target = $region20
      $region19: #{tpu_custom_call.1} parent=5 // pred_region
        // Predicated region
        $region21: #{tpu_custom_call.1} parent=19 // pred_check
          %p173 = pneg %p55
        $region22: #{tpu_custom_call.1} parent=19 // pred_check_branch
          %175 = sbr.rel (%p173) target = $region24
        $region23: #{tpu_custom_call.1} parent=19 // pred_region
          %p176 = scmp.lt.s32.totalorder %s23, 1
          %s177 = scalar_select %p176, %s23, 1
          %s178 = smul.addr %s177, 54
          %s179 = smul.addr %s178, 4
          %s180 = scalar_lea.vmem %s0, %s179
        $region24: #{tpu_custom_call.1} parent=19 // pred_fallthru
          _
      $region20: #{tpu_custom_call.1} parent=5 // pred_fallthru
        _
      %p181 = scmp.le.s32.totalorder 1, %s16
      %p182 = scmp.lt.s32.totalorder %s16, 3
      %p183 = pnand %p181, %p182
      %p184 = pneg %p183
      // Predicated region
      $region25: #{tpu_custom_call.1} parent=5 // pred_check
        _
      $region26: #{tpu_custom_call.1} parent=5 // pred_check_branch
        %186 = sbr.rel (%p183) target = $region28
      $region27: #{tpu_custom_call.1} parent=5 // pred_region
        %s187 = ssub.s32 %s16, 1
        %p188 = scmp.lt.s32.totalorder %s26, 1
        %s189 = scalar_select %p188, %s26, 1
        %s190 = smul.addr %s189, 54
        %s191 = smul.addr %s190, 4
        %s192 = scalar_lea.vmem %s0, %s191
        %p193 = pneg %p61
        %p194 = pneg %p58
        %p195 = scmp.lt.s32.totalorder %s28, 0
        %s196 = scalar_select %p195, %s28, 0
        %s197 = smul.addr %s196, 4
        %s198 = scalar_lea.vmem %s1, %s197
        %p199 = pneg %p87
        %p200 = pneg %p84
        %p201 = pneg %p117
        %p202 = pneg %p114
        %s203 = sand.u32 %s104, 1
        %s204 = scalar_lea.sflag [#allocation5], %s203
        %s205 = sand.u32 %s104, 1
        %s206 = smul.addr %s205, 128
        %s207 = scalar_lea.vmem [#allocation4], %s206
        %p208 = pneg %p147
        %p209 = pneg %p144
        %s210 = sand.u32 %s134, 1
        %s211 = scalar_lea.sflag [#allocation7], %s210
        %s212 = sand.u32 %s134, 1
        %s213 = smul.addr %s212, 2
        %s214 = scalar_lea.vmem [#allocation6], %s213
        %p215 = scmp.lt.s32.totalorder %s26, 1
        %s216 = scalar_select %p215, %s26, 1
        %s217 = smul.addr %s216, 54
        %s218 = smul.addr %s217, 4
        %s219 = scalar_lea.vmem %s0, %s218
        %p220 = scmp.lt.s32.totalorder %s28, 0
        %s221 = scalar_select %p220, %s28, 0
        %s222 = smul.addr %s221, 4
        %s223 = scalar_lea.vmem %s1, %s222
        %s224 = smul.u32 32, %s27
        %p226 = scmp.eq.s32.totalorder %s28, 0
        // Predicated region
        $region29: #{tpu_custom_call.1} parent=27 // pred_check
          %p227 = pneg %p226
        $region30: #{tpu_custom_call.1} parent=27 // pred_check_branch
          %229 = sbr.rel (%p227) target = $region32
        $region31: #{tpu_custom_call.1} parent=27 // pred_region
          %v230 = vld [vmem:[%s219] sm:$0xf]
          %v231 = vld [vmem:[%s219 + $0x4] sm:$0xf]
          %v232 = vld [vmem:[%s219 + $0xc] sm:$0xf]
          %v233 = vld [vmem:[%s219 + $0x10] sm:$0xf]
          %v234 = vld [vmem:[%s219 + $0x18] sm:$0xf]
          %v235 = vld [vmem:[%s219 + $0x1c] sm:$0xf]
          %v236 = vld [vmem:[%s219 + $0x24] sm:$0xf]
          %v237 = vld [vmem:[%s219 + $0x28] sm:$0xf]
          %v238 = vld [vmem:[%s219 + $0x30] sm:$0xf]
          %v239 = vld [vmem:[%s219 + $0x34] sm:$0xf]
          %v240 = vld [vmem:[%s219 + $0x3c] sm:$0xf]
          %v241 = vld [vmem:[%s219 + $0x40] sm:$0xf]
          %v242 = vld [vmem:[%s219 + $0x48] sm:$0xf]
          %v243 = vld [vmem:[%s219 + $0x4c] sm:$0xf]
          %v244 = vld [vmem:[%s219 + $0x54] sm:$0xf]
          %v245 = vld [vmem:[%s219 + $0x58] sm:$0xf]
          %v246 = vld [vmem:[%s219 + $0x60] sm:$0xf]
          %v247 = vld [vmem:[%s219 + $0x64] sm:$0xf]
          %v248 = vld [vmem:[%s219 + $0x6c] sm:$0xf]
          %v249 = vld [vmem:[%s219 + $0x70] sm:$0xf]
          %v250 = vld [vmem:[%s219 + $0x78] sm:$0xf]
          %v251 = vld [vmem:[%s219 + $0x7c] sm:$0xf]
          %v252 = vld [vmem:[%s219 + $0x84] sm:$0xf]
          %v253 = vld [vmem:[%s219 + $0x88] sm:$0xf]
          %v254 = vld [vmem:[%s219 + $0x90] sm:$0xf]
          %v255 = vld [vmem:[%s219 + $0x94] sm:$0xf]
          %v256 = vld [vmem:[%s219 + $0x9c] sm:$0xf]
          %v257 = vld [vmem:[%s219 + $0xa0] sm:$0xf]
          %v258 = vld [vmem:[%s219 + $0xa8] sm:$0xf]
          %v259 = vld [vmem:[%s219 + $0xac] sm:$0xf]
          %v260 = vld [vmem:[%s219 + $0xb4] sm:$0xf]
          %v261 = vld [vmem:[%s219 + $0xb8] sm:$0xf]
          %v294 = vunpack.c.l.b16 %v230
          %v295 = vunpack.c.l.b16 %v231
          %v296 = vunpack.c.l.b16 %v232
          %v297 = vunpack.c.l.b16 %v233
          %v298 = vunpack.c.l.b16 %v234
          %v299 = vunpack.c.l.b16 %v235
          %v300 = vunpack.c.l.b16 %v236
          %v301 = vunpack.c.l.b16 %v237
          %v302 = vunpack.c.l.b16 %v238
          %v303 = vunpack.c.l.b16 %v239
          %v304 = vunpack.c.l.b16 %v240
          %v305 = vunpack.c.l.b16 %v241
          %v306 = vunpack.c.l.b16 %v242
          %v307 = vunpack.c.l.b16 %v243
          %v308 = vunpack.c.l.b16 %v244
          %v309 = vunpack.c.l.b16 %v245
          %v310 = vunpack.c.l.b16 %v246
          %v311 = vunpack.c.l.b16 %v247
          %v312 = vunpack.c.l.b16 %v248
          %v313 = vunpack.c.l.b16 %v249
          %v314 = vunpack.c.l.b16 %v250
          %v315 = vunpack.c.l.b16 %v251
          %v316 = vunpack.c.l.b16 %v252
          %v317 = vunpack.c.l.b16 %v253
          %v318 = vunpack.c.l.b16 %v254
          %v319 = vunpack.c.l.b16 %v255
          %v320 = vunpack.c.l.b16 %v256
          %v321 = vunpack.c.l.b16 %v257
          %v322 = vunpack.c.l.b16 %v258
          %v323 = vunpack.c.l.b16 %v259
          %v324 = vunpack.c.l.b16 %v260
          %v325 = vunpack.c.l.b16 %v261
          %v326 = vpack.c.b16 %v295, %v294
          %v327 = vpack.c.b16 %v297, %v296
          %v328 = vpack.c.b16 %v299, %v298
          %v329 = vpack.c.b16 %v301, %v300
          %v330 = vpack.c.b16 %v303, %v302
          %v331 = vpack.c.b16 %v305, %v304
          %v332 = vpack.c.b16 %v307, %v306
          %v333 = vpack.c.b16 %v309, %v308
          %v334 = vpack.c.b16 %v311, %v310
          %v335 = vpack.c.b16 %v313, %v312
          %v336 = vpack.c.b16 %v315, %v314
          %v337 = vpack.c.b16 %v317, %v316
          %v338 = vpack.c.b16 %v319, %v318
          %v339 = vpack.c.b16 %v321, %v320
          %v340 = vpack.c.b16 %v323, %v322
          %v341 = vpack.c.b16 %v325, %v324
          %vm358 = vcmask 31744
          %359 = vst.msk [vmem:[#allocation2] sm:$0xff] %vm358, %v326
          %360 = vst.msk [vmem:[#allocation2 + $0x8] sm:$0xff] %vm358, %v327
          %361 = vst.msk [vmem:[#allocation2 + $0x10] sm:$0xff] %vm358, %v328
          %362 = vst.msk [vmem:[#allocation2 + $0x18] sm:$0xff] %vm358, %v329
          %363 = vst.msk [vmem:[#allocation2 + $0x20] sm:$0xff] %vm358, %v330
          %364 = vst.msk [vmem:[#allocation2 + $0x28] sm:$0xff] %vm358, %v331
          %365 = vst.msk [vmem:[#allocation2 + $0x30] sm:$0xff] %vm358, %v332
          %366 = vst.msk [vmem:[#allocation2 + $0x38] sm:$0xff] %vm358, %v333
          %367 = vst.msk [vmem:[#allocation2 + $0x40] sm:$0xff] %vm358, %v334
          %368 = vst.msk [vmem:[#allocation2 + $0x48] sm:$0xff] %vm358, %v335
          %369 = vst.msk [vmem:[#allocation2 + $0x50] sm:$0xff] %vm358, %v336
          %370 = vst.msk [vmem:[#allocation2 + $0x58] sm:$0xff] %vm358, %v337
          %371 = vst.msk [vmem:[#allocation2 + $0x60] sm:$0xff] %vm358, %v338
          %372 = vst.msk [vmem:[#allocation2 + $0x68] sm:$0xff] %vm358, %v339
          %373 = vst.msk [vmem:[#allocation2 + $0x70] sm:$0xff] %vm358, %v340
          %374 = vst.msk [vmem:[#allocation2 + $0x78] sm:$0xff] %vm358, %v341
          %v375 = vld [vmem:[%s219] sm:$0xf]
          %v376 = vld [vmem:[%s219 + $0x4] sm:$0xf]
          %v377 = vld [vmem:[%s219 + $0x8] sm:$0x1]
          %v378 = vld [vmem:[%s219 + $0xc] sm:$0xf]
          %v379 = vld [vmem:[%s219 + $0x10] sm:$0xf]
          %v380 = vld [vmem:[%s219 + $0x14] sm:$0x1]
          %v381 = vld [vmem:[%s219 + $0x18] sm:$0xf]
          %v382 = vld [vmem:[%s219 + $0x1c] sm:$0xf]
          %v383 = vld [vmem:[%s219 + $0x20] sm:$0x1]
          %v384 = vld [vmem:[%s219 + $0x24] sm:$0xf]
          %v385 = vld [vmem:[%s219 + $0x28] sm:$0xf]
          %v386 = vld [vmem:[%s219 + $0x2c] sm:$0x1]
          %v387 = vld [vmem:[%s219 + $0x30] sm:$0xf]
          %v388 = vld [vmem:[%s219 + $0x34] sm:$0xf]
          %v389 = vld [vmem:[%s219 + $0x38] sm:$0x1]
          %v390 = vld [vmem:[%s219 + $0x3c] sm:$0xf]
          %v391 = vld [vmem:[%s219 + $0x40] sm:$0xf]
          %v392 = vld [vmem:[%s219 + $0x44] sm:$0x1]
          %v393 = vld [vmem:[%s219 + $0x48] sm:$0xf]
          %v394 = vld [vmem:[%s219 + $0x4c] sm:$0xf]
          %v395 = vld [vmem:[%s219 + $0x50] sm:$0x1]
          %v396 = vld [vmem:[%s219 + $0x54] sm:$0xf]
          %v397 = vld [vmem:[%s219 + $0x58] sm:$0xf]
          %v398 = vld [vmem:[%s219 + $0x5c] sm:$0x1]
          %v399 = vld [vmem:[%s219 + $0x60] sm:$0xf]
          %v400 = vld [vmem:[%s219 + $0x64] sm:$0xf]
          %v401 = vld [vmem:[%s219 + $0x68] sm:$0x1]
          %v402 = vld [vmem:[%s219 + $0x6c] sm:$0xf]
          %v403 = vld [vmem:[%s219 + $0x70] sm:$0xf]
          %v404 = vld [vmem:[%s219 + $0x74] sm:$0x1]
          %v405 = vld [vmem:[%s219 + $0x78] sm:$0xf]
          %v406 = vld [vmem:[%s219 + $0x7c] sm:$0xf]
          %v407 = vld [vmem:[%s219 + $0x80] sm:$0x1]
          %v408 = vld [vmem:[%s219 + $0x84] sm:$0xf]
          %v409 = vld [vmem:[%s219 + $0x88] sm:$0xf]
          %v410 = vld [vmem:[%s219 + $0x8c] sm:$0x1]
          %v411 = vld [vmem:[%s219 + $0x90] sm:$0xf]
          %v412 = vld [vmem:[%s219 + $0x94] sm:$0xf]
          %v413 = vld [vmem:[%s219 + $0x98] sm:$0x1]
          %v414 = vld [vmem:[%s219 + $0x9c] sm:$0xf]
          %v415 = vld [vmem:[%s219 + $0xa0] sm:$0xf]
          %v416 = vld [vmem:[%s219 + $0xa4] sm:$0x1]
          %v417 = vld [vmem:[%s219 + $0xa8] sm:$0xf]
          %v418 = vld [vmem:[%s219 + $0xac] sm:$0xf]
          %v419 = vld [vmem:[%s219 + $0xb0] sm:$0x1]
          %v420 = vld [vmem:[%s219 + $0xb4] sm:$0xf]
          %v421 = vld [vmem:[%s219 + $0xb8] sm:$0xf]
          %v422 = vld [vmem:[%s219 + $0xbc] sm:$0x1]
          %vm423 = vsmask.f32 3328
          %vm424 = vsmask.f32 7440
          %vm425 = vmor %vm423, %vm424
          %v427 = vshrl.u32 %v375, 16
          %v429 = vrot.slane %v427, 4
          %v430 = vshll.u32 %v375, 16
          %v432 = vrot.slane %v430, 5
          %v433 = vor.u32 %v429, %v432
          %v434 = vrot.slane %v433, 4
          %v436 = vshll.u32 %v376, 16
          %v438 = vrot.slane %v436, 5
          %v439 = vsel %vm425, %v434, %v438
          %v440 = vshrl.u32 %v376, 16
          %v442 = vrot.slane %v440, 4
          %v443 = vor.u32 %v442, %v438
          %v444 = vrot.slane %v443, 4
          %v446 = vshll.u32 %v377, 16
          %v448 = vrot.slane %v446, 5
          %v449 = vsel %vm425, %v444, %v448
          %v451 = vshrl.u32 %v378, 16
          %v453 = vrot.slane %v451, 4
          %v454 = vshll.u32 %v378, 16
          %v456 = vrot.slane %v454, 5
          %v457 = vor.u32 %v453, %v456
          %v458 = vrot.slane %v457, 4
          %v460 = vshll.u32 %v379, 16
          %v462 = vrot.slane %v460, 5
          %v463 = vsel %vm425, %v458, %v462
          %v464 = vshrl.u32 %v379, 16
          %v466 = vrot.slane %v464, 4
          %v467 = vor.u32 %v466, %v462
          %v468 = vrot.slane %v467, 4
          %v470 = vshll.u32 %v380, 16
          %v472 = vrot.slane %v470, 5
          %v473 = vsel %vm425, %v468, %v472
          %v475 = vshrl.u32 %v381, 16
          %v477 = vrot.slane %v475, 4
          %v478 = vshll.u32 %v381, 16
          %v480 = vrot.slane %v478, 5
          %v481 = vor.u32 %v477, %v480
          %v482 = vrot.slane %v481, 4
          %v484 = vshll.u32 %v382, 16
          %v486 = vrot.slane %v484, 5
          %v487 = vsel %vm425, %v482, %v486
          %v488 = vshrl.u32 %v382, 16
          %v490 = vrot.slane %v488, 4
          %v491 = vor.u32 %v490, %v486
          %v492 = vrot.slane %v491, 4
          %v494 = vshll.u32 %v383, 16
          %v496 = vrot.slane %v494, 5
          %v497 = vsel %vm425, %v492, %v496
          %v499 = vshrl.u32 %v384, 16
          %v501 = vrot.slane %v499, 4
          %v502 = vshll.u32 %v384, 16
          %v504 = vrot.slane %v502, 5
          %v505 = vor.u32 %v501, %v504
          %v506 = vrot.slane %v505, 4
          %v508 = vshll.u32 %v385, 16
          %v510 = vrot.slane %v508, 5
          %v511 = vsel %vm425, %v506, %v510
          %v512 = vshrl.u32 %v385, 16
          %v514 = vrot.slane %v512, 4
          %v515 = vor.u32 %v514, %v510
          %v516 = vrot.slane %v515, 4
          %v518 = vshll.u32 %v386, 16
          %v520 = vrot.slane %v518, 5
          %v521 = vsel %vm425, %v516, %v520
          %v523 = vshrl.u32 %v387, 16
          %v525 = vrot.slane %v523, 4
          %v526 = vshll.u32 %v387, 16
          %v528 = vrot.slane %v526, 5
          %v529 = vor.u32 %v525, %v528
          %v530 = vrot.slane %v529, 4
          %v532 = vshll.u32 %v388, 16
          %v534 = vrot.slane %v532, 5
          %v535 = vsel %vm425, %v530, %v534
          %v536 = vshrl.u32 %v388, 16
          %v538 = vrot.slane %v536, 4
          %v539 = vor.u32 %v538, %v534
          %v540 = vrot.slane %v539, 4
          %v542 = vshll.u32 %v389, 16
          %v544 = vrot.slane %v542, 5
          %v545 = vsel %vm425, %v540, %v544
          %v547 = vshrl.u32 %v390, 16
          %v549 = vrot.slane %v547, 4
          %v550 = vshll.u32 %v390, 16
          %v552 = vrot.slane %v550, 5
          %v553 = vor.u32 %v549, %v552
          %v554 = vrot.slane %v553, 4
          %v556 = vshll.u32 %v391, 16
          %v558 = vrot.slane %v556, 5
          %v559 = vsel %vm425, %v554, %v558
          %v560 = vshrl.u32 %v391, 16
          %v562 = vrot.slane %v560, 4
          %v563 = vor.u32 %v562, %v558
          %v564 = vrot.slane %v563, 4
          %v566 = vshll.u32 %v392, 16
          %v568 = vrot.slane %v566, 5
          %v569 = vsel %vm425, %v564, %v568
          %v571 = vshrl.u32 %v393, 16
          %v573 = vrot.slane %v571, 4
          %v574 = vshll.u32 %v393, 16
          %v576 = vrot.slane %v574, 5
          %v577 = vor.u32 %v573, %v576
          %v578 = vrot.slane %v577, 4
          %v580 = vshll.u32 %v394, 16
          %v582 = vrot.slane %v580, 5
          %v583 = vsel %vm425, %v578, %v582
          %v584 = vshrl.u32 %v394, 16
          %v586 = vrot.slane %v584, 4
          %v587 = vor.u32 %v586, %v582
          %v588 = vrot.slane %v587, 4
          %v590 = vshll.u32 %v395, 16
          %v592 = vrot.slane %v590, 5
          %v593 = vsel %vm425, %v588, %v592
          %v595 = vshrl.u32 %v396, 16
          %v597 = vrot.slane %v595, 4
          %v598 = vshll.u32 %v396, 16
          %v600 = vrot.slane %v598, 5
          %v601 = vor.u32 %v597, %v600
          %v602 = vrot.slane %v601, 4
          %v604 = vshll.u32 %v397, 16
          %v606 = vrot.slane %v604, 5
          %v607 = vsel %vm425, %v602, %v606
          %v608 = vshrl.u32 %v397, 16
          %v610 = vrot.slane %v608, 4
          %v611 = vor.u32 %v610, %v606
          %v612 = vrot.slane %v611, 4
          %v614 = vshll.u32 %v398, 16
          %v616 = vrot.slane %v614, 5
          %v617 = vsel %vm425, %v612, %v616
          %v619 = vshrl.u32 %v399, 16
          %v621 = vrot.slane %v619, 4
          %v622 = vshll.u32 %v399, 16
          %v624 = vrot.slane %v622, 5
          %v625 = vor.u32 %v621, %v624
          %v626 = vrot.slane %v625, 4
          %v628 = vshll.u32 %v400, 16
          %v630 = vrot.slane %v628, 5
          %v631 = vsel %vm425, %v626, %v630
          %v632 = vshrl.u32 %v400, 16
          %v634 = vrot.slane %v632, 4
          %v635 = vor.u32 %v634, %v630
          %v636 = vrot.slane %v635, 4
          %v638 = vshll.u32 %v401, 16
          %v640 = vrot.slane %v638, 5
          %v641 = vsel %vm425, %v636, %v640
          %v643 = vshrl.u32 %v402, 16
          %v645 = vrot.slane %v643, 4
          %v646 = vshll.u32 %v402, 16
          %v648 = vrot.slane %v646, 5
          %v649 = vor.u32 %v645, %v648
          %v650 = vrot.slane %v649, 4
          %v652 = vshll.u32 %v403, 16
          %v654 = vrot.slane %v652, 5
          %v655 = vsel %vm425, %v650, %v654
          %v656 = vshrl.u32 %v403, 16
          %v658 = vrot.slane %v656, 4
          %v659 = vor.u32 %v658, %v654
          %v660 = vrot.slane %v659, 4
          %v662 = vshll.u32 %v404, 16
          %v664 = vrot.slane %v662, 5
          %v665 = vsel %vm425, %v660, %v664
          %v667 = vshrl.u32 %v405, 16
          %v669 = vrot.slane %v667, 4
          %v670 = vshll.u32 %v405, 16
          %v672 = vrot.slane %v670, 5
          %v673 = vor.u32 %v669, %v672
          %v674 = vrot.slane %v673, 4
          %v676 = vshll.u32 %v406, 16
          %v678 = vrot.slane %v676, 5
          %v679 = vsel %vm425, %v674, %v678
          %v680 = vshrl.u32 %v406, 16
          %v682 = vrot.slane %v680, 4
          %v683 = vor.u32 %v682, %v678
          %v684 = vrot.slane %v683, 4
          %v686 = vshll.u32 %v407, 16
          %v688 = vrot.slane %v686, 5
          %v689 = vsel %vm425, %v684, %v688
          %v691 = vshrl.u32 %v408, 16
          %v693 = vrot.slane %v691, 4
          %v694 = vshll.u32 %v408, 16
          %v696 = vrot.slane %v694, 5
          %v697 = vor.u32 %v693, %v696
          %v698 = vrot.slane %v697, 4
          %v700 = vshll.u32 %v409, 16
          %v702 = vrot.slane %v700, 5
          %v703 = vsel %vm425, %v698, %v702
          %v704 = vshrl.u32 %v409, 16
          %v706 = vrot.slane %v704, 4
          %v707 = vor.u32 %v706, %v702
          %v708 = vrot.slane %v707, 4
          %v710 = vshll.u32 %v410, 16
          %v712 = vrot.slane %v710, 5
          %v713 = vsel %vm425, %v708, %v712
          %v715 = vshrl.u32 %v411, 16
          %v717 = vrot.slane %v715, 4
          %v718 = vshll.u32 %v411, 16
          %v720 = vrot.slane %v718, 5
          %v721 = vor.u32 %v717, %v720
          %v722 = vrot.slane %v721, 4
          %v724 = vshll.u32 %v412, 16
          %v726 = vrot.slane %v724, 5
          %v727 = vsel %vm425, %v722, %v726
          %v728 = vshrl.u32 %v412, 16
          %v730 = vrot.slane %v728, 4
          %v731 = vor.u32 %v730, %v726
          %v732 = vrot.slane %v731, 4
          %v734 = vshll.u32 %v413, 16
          %v736 = vrot.slane %v734, 5
          %v737 = vsel %vm425, %v732, %v736
          %v739 = vshrl.u32 %v414, 16
          %v741 = vrot.slane %v739, 4
          %v742 = vshll.u32 %v414, 16
          %v744 = vrot.slane %v742, 5
          %v745 = vor.u32 %v741, %v744
          %v746 = vrot.slane %v745, 4
          %v748 = vshll.u32 %v415, 16
          %v750 = vrot.slane %v748, 5
          %v751 = vsel %vm425, %v746, %v750
          %v752 = vshrl.u32 %v415, 16
          %v754 = vrot.slane %v752, 4
          %v755 = vor.u32 %v754, %v750
          %v756 = vrot.slane %v755, 4
          %v758 = vshll.u32 %v416, 16
          %v760 = vrot.slane %v758, 5
          %v761 = vsel %vm425, %v756, %v760
          %v763 = vshrl.u32 %v417, 16
          %v765 = vrot.slane %v763, 4
          %v766 = vshll.u32 %v417, 16
          %v768 = vrot.slane %v766, 5
          %v769 = vor.u32 %v765, %v768
          %v770 = vrot.slane %v769, 4
          %v772 = vshll.u32 %v418, 16
          %v774 = vrot.slane %v772, 5
          %v775 = vsel %vm425, %v770, %v774
          %v776 = vshrl.u32 %v418, 16
          %v778 = vrot.slane %v776, 4
          %v779 = vor.u32 %v778, %v774
          %v780 = vrot.slane %v779, 4
          %v782 = vshll.u32 %v419, 16
          %v784 = vrot.slane %v782, 5
          %v785 = vsel %vm425, %v780, %v784
          %v787 = vshrl.u32 %v420, 16
          %v789 = vrot.slane %v787, 4
          %v790 = vshll.u32 %v420, 16
          %v792 = vrot.slane %v790, 5
          %v793 = vor.u32 %v789, %v792
          %v794 = vrot.slane %v793, 4
          %v796 = vshll.u32 %v421, 16
          %v798 = vrot.slane %v796, 5
          %v799 = vsel %vm425, %v794, %v798
          %v800 = vshrl.u32 %v421, 16
          %v802 = vrot.slane %v800, 4
          %v803 = vor.u32 %v802, %v798
          %v804 = vrot.slane %v803, 4
          %v806 = vshll.u32 %v422, 16
          %v808 = vrot.slane %v806, 5
          %v809 = vsel %vm425, %v804, %v808
          %v810 = vunpack.c.l.b16 %v439
          %v811 = vunpack.c.l.b16 %v449
          %v812 = vunpack.c.l.b16 %v463
          %v813 = vunpack.c.l.b16 %v473
          %v814 = vunpack.c.l.b16 %v487
          %v815 = vunpack.c.l.b16 %v497
          %v816 = vunpack.c.l.b16 %v511
          %v817 = vunpack.c.l.b16 %v521
          %v818 = vunpack.c.l.b16 %v535
          %v819 = vunpack.c.l.b16 %v545
          %v820 = vunpack.c.l.b16 %v559
          %v821 = vunpack.c.l.b16 %v569
          %v822 = vunpack.c.l.b16 %v583
          %v823 = vunpack.c.l.b16 %v593
          %v824 = vunpack.c.l.b16 %v607
          %v825 = vunpack.c.l.b16 %v617
          %v826 = vunpack.c.l.b16 %v631
          %v827 = vunpack.c.l.b16 %v641
          %v828 = vunpack.c.l.b16 %v655
          %v829 = vunpack.c.l.b16 %v665
          %v830 = vunpack.c.l.b16 %v679
          %v831 = vunpack.c.l.b16 %v689
          %v832 = vunpack.c.l.b16 %v703
          %v833 = vunpack.c.l.b16 %v713
          %v834 = vunpack.c.l.b16 %v727
          %v835 = vunpack.c.l.b16 %v737
          %v836 = vunpack.c.l.b16 %v751
          %v837 = vunpack.c.l.b16 %v761
          %v838 = vunpack.c.l.b16 %v775
          %v839 = vunpack.c.l.b16 %v785
          %v840 = vunpack.c.l.b16 %v799
          %v841 = vunpack.c.l.b16 %v809
          %v842 = vpack.c.b16 %v811, %v810
          %v843 = vpack.c.b16 %v813, %v812
          %v844 = vpack.c.b16 %v815, %v814
          %v845 = vpack.c.b16 %v817, %v816
          %v846 = vpack.c.b16 %v819, %v818
          %v847 = vpack.c.b16 %v821, %v820
          %v848 = vpack.c.b16 %v823, %v822
          %v849 = vpack.c.b16 %v825, %v824
          %v850 = vpack.c.b16 %v827, %v826
          %v851 = vpack.c.b16 %v829, %v828
          %v852 = vpack.c.b16 %v831, %v830
          %v853 = vpack.c.b16 %v833, %v832
          %v854 = vpack.c.b16 %v835, %v834
          %v855 = vpack.c.b16 %v837, %v836
          %v856 = vpack.c.b16 %v839, %v838
          %v857 = vpack.c.b16 %v841, %v840
          %858 = vrot.lane.b32.xlu0 %v842, 4
          %v859 = vpop.permute.xlu0 %858
          %860 = vrot.lane.b32.xlu0 %v843, 4
          %v861 = vpop.permute.xlu0 %860
          %862 = vrot.lane.b32.xlu0 %v844, 4
          %v863 = vpop.permute.xlu0 %862
          %864 = vrot.lane.b32.xlu0 %v845, 4
          %v865 = vpop.permute.xlu0 %864
          %866 = vrot.lane.b32.xlu0 %v846, 4
          %v867 = vpop.permute.xlu0 %866
          %868 = vrot.lane.b32.xlu0 %v847, 4
          %v869 = vpop.permute.xlu0 %868
          %870 = vrot.lane.b32.xlu0 %v848, 4
          %v871 = vpop.permute.xlu0 %870
          %872 = vrot.lane.b32.xlu0 %v849, 4
          %v873 = vpop.permute.xlu0 %872
          %874 = vrot.lane.b32.xlu0 %v850, 4
          %v875 = vpop.permute.xlu0 %874
          %876 = vrot.lane.b32.xlu0 %v851, 4
          %v877 = vpop.permute.xlu0 %876
          %878 = vrot.lane.b32.xlu0 %v852, 4
          %v879 = vpop.permute.xlu0 %878
          %880 = vrot.lane.b32.xlu0 %v853, 4
          %v881 = vpop.permute.xlu0 %880
          %882 = vrot.lane.b32.xlu0 %v854, 4
          %v883 = vpop.permute.xlu0 %882
          %884 = vrot.lane.b32.xlu0 %v855, 4
          %v885 = vpop.permute.xlu0 %884
          %886 = vrot.lane.b32.xlu0 %v856, 4
          %v887 = vpop.permute.xlu0 %886
          %888 = vrot.lane.b32.xlu0 %v857, 4
          %v889 = vpop.permute.xlu0 %888
          %vm906 = vcmask 64544
          %907 = vst.msk [vmem:[#allocation2] sm:$0xff] %vm906, %v859
          %908 = vst.msk [vmem:[#allocation2 + $0x8] sm:$0xff] %vm906, %v861
          %909 = vst.msk [vmem:[#allocation2 + $0x10] sm:$0xff] %vm906, %v863
          %910 = vst.msk [vmem:[#allocation2 + $0x18] sm:$0xff] %vm906, %v865
          %911 = vst.msk [vmem:[#allocation2 + $0x20] sm:$0xff] %vm906, %v867
          %912 = vst.msk [vmem:[#allocation2 + $0x28] sm:$0xff] %vm906, %v869
          %913 = vst.msk [vmem:[#allocation2 + $0x30] sm:$0xff] %vm906, %v871
          %914 = vst.msk [vmem:[#allocation2 + $0x38] sm:$0xff] %vm906, %v873
          %915 = vst.msk [vmem:[#allocation2 + $0x40] sm:$0xff] %vm906, %v875
          %916 = vst.msk [vmem:[#allocation2 + $0x48] sm:$0xff] %vm906, %v877
          %917 = vst.msk [vmem:[#allocation2 + $0x50] sm:$0xff] %vm906, %v879
          %918 = vst.msk [vmem:[#allocation2 + $0x58] sm:$0xff] %vm906, %v881
          %919 = vst.msk [vmem:[#allocation2 + $0x60] sm:$0xff] %vm906, %v883
          %920 = vst.msk [vmem:[#allocation2 + $0x68] sm:$0xff] %vm906, %v885
          %921 = vst.msk [vmem:[#allocation2 + $0x70] sm:$0xff] %vm906, %v887
          %922 = vst.msk [vmem:[#allocation2 + $0x78] sm:$0xff] %vm906, %v889
          %v923 = vld [vmem:[%s219] sm:$0xe]
          %v924 = vld [vmem:[%s219 + $0x4] sm:$0xf]
          %v925 = vld [vmem:[%s219 + $0x8] sm:$0x1]
          %v926 = vld [vmem:[%s219 + $0xc] sm:$0xe]
          %v927 = vld [vmem:[%s219 + $0x10] sm:$0xf]
          %v928 = vld [vmem:[%s219 + $0x14] sm:$0x1]
          %v929 = vld [vmem:[%s219 + $0x18] sm:$0xe]
          %v930 = vld [vmem:[%s219 + $0x1c] sm:$0xf]
          %v931 = vld [vmem:[%s219 + $0x20] sm:$0x1]
          %v932 = vld [vmem:[%s219 + $0x24] sm:$0xe]
          %v933 = vld [vmem:[%s219 + $0x28] sm:$0xf]
          %v934 = vld [vmem:[%s219 + $0x2c] sm:$0x1]
          %v935 = vld [vmem:[%s219 + $0x30] sm:$0xe]
          %v936 = vld [vmem:[%s219 + $0x34] sm:$0xf]
          %v937 = vld [vmem:[%s219 + $0x38] sm:$0x1]
          %v938 = vld [vmem:[%s219 + $0x3c] sm:$0xe]
          %v939 = vld [vmem:[%s219 + $0x40] sm:$0xf]
          %v940 = vld [vmem:[%s219 + $0x44] sm:$0x1]
          %v941 = vld [vmem:[%s219 + $0x48] sm:$0xe]
          %v942 = vld [vmem:[%s219 + $0x4c] sm:$0xf]
          %v943 = vld [vmem:[%s219 + $0x50] sm:$0x1]
          %v944 = vld [vmem:[%s219 + $0x54] sm:$0xe]
          %v945 = vld [vmem:[%s219 + $0x58] sm:$0xf]
          %v946 = vld [vmem:[%s219 + $0x5c] sm:$0x1]
          %v947 = vld [vmem:[%s219 + $0x60] sm:$0xe]
          %v948 = vld [vmem:[%s219 + $0x64] sm:$0xf]
          %v949 = vld [vmem:[%s219 + $0x68] sm:$0x1]
          %v950 = vld [vmem:[%s219 + $0x6c] sm:$0xe]
          %v951 = vld [vmem:[%s219 + $0x70] sm:$0xf]
          %v952 = vld [vmem:[%s219 + $0x74] sm:$0x1]
          %v953 = vld [vmem:[%s219 + $0x78] sm:$0xe]
          %v954 = vld [vmem:[%s219 + $0x7c] sm:$0xf]
          %v955 = vld [vmem:[%s219 + $0x80] sm:$0x1]
          %v956 = vld [vmem:[%s219 + $0x84] sm:$0xe]
          %v957 = vld [vmem:[%s219 + $0x88] sm:$0xf]
          %v958 = vld [vmem:[%s219 + $0x8c] sm:$0x1]
          %v959 = vld [vmem:[%s219 + $0x90] sm:$0xe]
          %v960 = vld [vmem:[%s219 + $0x94] sm:$0xf]
          %v961 = vld [vmem:[%s219 + $0x98] sm:$0x1]
          %v962 = vld [vmem:[%s219 + $0x9c] sm:$0xe]
          %v963 = vld [vmem:[%s219 + $0xa0] sm:$0xf]
          %v964 = vld [vmem:[%s219 + $0xa4] sm:$0x1]
          %v965 = vld [vmem:[%s219 + $0xa8] sm:$0xe]
          %v966 = vld [vmem:[%s219 + $0xac] sm:$0xf]
          %v967 = vld [vmem:[%s219 + $0xb0] sm:$0x1]
          %v968 = vld [vmem:[%s219 + $0xb4] sm:$0xe]
          %v969 = vld [vmem:[%s219 + $0xb8] sm:$0xf]
          %v970 = vld [vmem:[%s219 + $0xbc] sm:$0x1]
          %vm1019 = vcmask 1042432
          %vm1020 = vcmask 1046532
          %vm1021 = vmor %vm1019, %vm1020
          %v1022 = vrot.slane %v923, 5
          %v1023 = vrot.slane %v1022, 4
          %v1024 = vrot.slane %v924, 5
          %v1025 = vsel %vm1021, %v1023, %v1024
          %v1026 = vrot.slane %v1024, 4
          %v1027 = vrot.slane %v925, 5
          %v1028 = vsel %vm1021, %v1026, %v1027
          %v1029 = vrot.slane %v926, 5
          %v1030 = vrot.slane %v1029, 4
          %v1031 = vrot.slane %v927, 5
          %v1032 = vsel %vm1021, %v1030, %v1031
          %v1033 = vrot.slane %v1031, 4
          %v1034 = vrot.slane %v928, 5
          %v1035 = vsel %vm1021, %v1033, %v1034
          %v1036 = vrot.slane %v929, 5
          %v1037 = vrot.slane %v1036, 4
          %v1038 = vrot.slane %v930, 5
          %v1039 = vsel %vm1021, %v1037, %v1038
          %v1040 = vrot.slane %v1038, 4
          %v1041 = vrot.slane %v931, 5
          %v1042 = vsel %vm1021, %v1040, %v1041
          %v1043 = vrot.slane %v932, 5
          %v1044 = vrot.slane %v1043, 4
          %v1045 = vrot.slane %v933, 5
          %v1046 = vsel %vm1021, %v1044, %v1045
          %v1047 = vrot.slane %v1045, 4
          %v1048 = vrot.slane %v934, 5
          %v1049 = vsel %vm1021, %v1047, %v1048
          %v1050 = vrot.slane %v935, 5
          %v1051 = vrot.slane %v1050, 4
          %v1052 = vrot.slane %v936, 5
          %v1053 = vsel %vm1021, %v1051, %v1052
          %v1054 = vrot.slane %v1052, 4
          %v1055 = vrot.slane %v937, 5
          %v1056 = vsel %vm1021, %v1054, %v1055
          %v1057 = vrot.slane %v938, 5
          %v1058 = vrot.slane %v1057, 4
          %v1059 = vrot.slane %v939, 5
          %v1060 = vsel %vm1021, %v1058, %v1059
          %v1061 = vrot.slane %v1059, 4
          %v1062 = vrot.slane %v940, 5
          %v1063 = vsel %vm1021, %v1061, %v1062
          %v1064 = vrot.slane %v941, 5
          %v1065 = vrot.slane %v1064, 4
          %v1066 = vrot.slane %v942, 5
          %v1067 = vsel %vm1021, %v1065, %v1066
          %v1068 = vrot.slane %v1066, 4
          %v1069 = vrot.slane %v943, 5
          %v1070 = vsel %vm1021, %v1068, %v1069
          %v1071 = vrot.slane %v944, 5
          %v1072 = vrot.slane %v1071, 4
          %v1073 = vrot.slane %v945, 5
          %v1074 = vsel %vm1021, %v1072, %v1073
          %v1075 = vrot.slane %v1073, 4
          %v1076 = vrot.slane %v946, 5
          %v1077 = vsel %vm1021, %v1075, %v1076
          %v1078 = vrot.slane %v947, 5
          %v1079 = vrot.slane %v1078, 4
          %v1080 = vrot.slane %v948, 5
          %v1081 = vsel %vm1021, %v1079, %v1080
          %v1082 = vrot.slane %v1080, 4
          %v1083 = vrot.slane %v949, 5
          %v1084 = vsel %vm1021, %v1082, %v1083
          %v1085 = vrot.slane %v950, 5
          %v1086 = vrot.slane %v1085, 4
          %v1087 = vrot.slane %v951, 5
          %v1088 = vsel %vm1021, %v1086, %v1087
          %v1089 = vrot.slane %v1087, 4
          %v1090 = vrot.slane %v952, 5
          %v1091 = vsel %vm1021, %v1089, %v1090
          %v1092 = vrot.slane %v953, 5
          %v1093 = vrot.slane %v1092, 4
          %v1094 = vrot.slane %v954, 5
          %v1095 = vsel %vm1021, %v1093, %v1094
          %v1096 = vrot.slane %v1094, 4
          %v1097 = vrot.slane %v955, 5
          %v1098 = vsel %vm1021, %v1096, %v1097
          %v1099 = vrot.slane %v956, 5
          %v1100 = vrot.slane %v1099, 4
          %v1101 = vrot.slane %v957, 5
          %v1102 = vsel %vm1021, %v1100, %v1101
          %v1103 = vrot.slane %v1101, 4
          %v1104 = vrot.slane %v958, 5
          %v1105 = vsel %vm1021, %v1103, %v1104
          %v1106 = vrot.slane %v959, 5
          %v1107 = vrot.slane %v1106, 4
          %v1108 = vrot.slane %v960, 5
          %v1109 = vsel %vm1021, %v1107, %v1108
          %v1110 = vrot.slane %v1108, 4
          %v1111 = vrot.slane %v961, 5
          %v1112 = vsel %vm1021, %v1110, %v1111
          %v1113 = vrot.slane %v962, 5
          %v1114 = vrot.slane %v1113, 4
          %v1115 = vrot.slane %v963, 5
          %v1116 = vsel %vm1021, %v1114, %v1115
          %v1117 = vrot.slane %v1115, 4
          %v1118 = vrot.slane %v964, 5
          %v1119 = vsel %vm1021, %v1117, %v1118
          %v1120 = vrot.slane %v965, 5
          %v1121 = vrot.slane %v1120, 4
          %v1122 = vrot.slane %v966, 5
          %v1123 = vsel %vm1021, %v1121, %v1122
          %v1124 = vrot.slane %v1122, 4
          %v1125 = vrot.slane %v967, 5
          %v1126 = vsel %vm1021, %v1124, %v1125
          %v1127 = vrot.slane %v968, 5
          %v1128 = vrot.slane %v1127, 4
          %v1129 = vrot.slane %v969, 5
          %v1130 = vsel %vm1021, %v1128, %v1129
          %v1131 = vrot.slane %v1129, 4
          %v1132 = vrot.slane %v970, 5
          %v1133 = vsel %vm1021, %v1131, %v1132
          %v1134 = vunpack.c.l.b16 %v1025
          %v1135 = vunpack.c.l.b16 %v1028
          %v1136 = vunpack.c.l.b16 %v1032
          %v1137 = vunpack.c.l.b16 %v1035
          %v1138 = vunpack.c.l.b16 %v1039
          %v1139 = vunpack.c.l.b16 %v1042
          %v1140 = vunpack.c.l.b16 %v1046
          %v1141 = vunpack.c.l.b16 %v1049
          %v1142 = vunpack.c.l.b16 %v1053
          %v1143 = vunpack.c.l.b16 %v1056
          %v1144 = vunpack.c.l.b16 %v1060
          %v1145 = vunpack.c.l.b16 %v1063
          %v1146 = vunpack.c.l.b16 %v1067
          %v1147 = vunpack.c.l.b16 %v1070
          %v1148 = vunpack.c.l.b16 %v1074
          %v1149 = vunpack.c.l.b16 %v1077
          %v1150 = vunpack.c.l.b16 %v1081
          %v1151 = vunpack.c.l.b16 %v1084
          %v1152 = vunpack.c.l.b16 %v1088
          %v1153 = vunpack.c.l.b16 %v1091
          %v1154 = vunpack.c.l.b16 %v1095
          %v1155 = vunpack.c.l.b16 %v1098
          %v1156 = vunpack.c.l.b16 %v1102
          %v1157 = vunpack.c.l.b16 %v1105
          %v1158 = vunpack.c.l.b16 %v1109
          %v1159 = vunpack.c.l.b16 %v1112
          %v1160 = vunpack.c.l.b16 %v1116
          %v1161 = vunpack.c.l.b16 %v1119
          %v1162 = vunpack.c.l.b16 %v1123
          %v1163 = vunpack.c.l.b16 %v1126
          %v1164 = vunpack.c.l.b16 %v1130
          %v1165 = vunpack.c.l.b16 %v1133
          %v1166 = vpack.c.b16 %v1135, %v1134
          %v1167 = vpack.c.b16 %v1137, %v1136
          %v1168 = vpack.c.b16 %v1139, %v1138
          %v1169 = vpack.c.b16 %v1141, %v1140
          %v1170 = vpack.c.b16 %v1143, %v1142
          %v1171 = vpack.c.b16 %v1145, %v1144
          %v1172 = vpack.c.b16 %v1147, %v1146
          %v1173 = vpack.c.b16 %v1149, %v1148
          %v1174 = vpack.c.b16 %v1151, %v1150
          %v1175 = vpack.c.b16 %v1153, %v1152
          %v1176 = vpack.c.b16 %v1155, %v1154
          %v1177 = vpack.c.b16 %v1157, %v1156
          %v1178 = vpack.c.b16 %v1159, %v1158
          %v1179 = vpack.c.b16 %v1161, %v1160
          %v1180 = vpack.c.b16 %v1163, %v1162
          %v1181 = vpack.c.b16 %v1165, %v1164
          %1182 = vrot.lane.b32.xlu0 %v1166, 8
          %v1183 = vpop.permute.xlu0 %1182
          %1184 = vrot.lane.b32.xlu0 %v1167, 8
          %v1185 = vpop.permute.xlu0 %1184
          %1186 = vrot.lane.b32.xlu0 %v1168, 8
          %v1187 = vpop.permute.xlu0 %1186
          %1188 = vrot.lane.b32.xlu0 %v1169, 8
          %v1189 = vpop.permute.xlu0 %1188
          %1190 = vrot.lane.b32.xlu0 %v1170, 8
          %v1191 = vpop.permute.xlu0 %1190
          %1192 = vrot.lane.b32.xlu0 %v1171, 8
          %v1193 = vpop.permute.xlu0 %1192
          %1194 = vrot.lane.b32.xlu0 %v1172, 8
          %v1195 = vpop.permute.xlu0 %1194
          %1196 = vrot.lane.b32.xlu0 %v1173, 8
          %v1197 = vpop.permute.xlu0 %1196
          %1198 = vrot.lane.b32.xlu0 %v1174, 8
          %v1199 = vpop.permute.xlu0 %1198
          %1200 = vrot.lane.b32.xlu0 %v1175, 8
          %v1201 = vpop.permute.xlu0 %1200
          %1202 = vrot.lane.b32.xlu0 %v1176, 8
          %v1203 = vpop.permute.xlu0 %1202
          %1204 = vrot.lane.b32.xlu0 %v1177, 8
          %v1205 = vpop.permute.xlu0 %1204
          %1206 = vrot.lane.b32.xlu0 %v1178, 8
          %v1207 = vpop.permute.xlu0 %1206
          %1208 = vrot.lane.b32.xlu0 %v1179, 8
          %v1209 = vpop.permute.xlu0 %1208
          %1210 = vrot.lane.b32.xlu0 %v1180, 8
          %v1211 = vpop.permute.xlu0 %1210
          %1212 = vrot.lane.b32.xlu0 %v1181, 8
          %v1213 = vpop.permute.xlu0 %1212
          %vm1230 = vcmask 97344
          %1231 = vst.msk [vmem:[#allocation2] sm:$0xff] %vm1230, %v1183
          %1232 = vst.msk [vmem:[#allocation2 + $0x8] sm:$0xff] %vm1230, %v1185
          %1233 = vst.msk [vmem:[#allocation2 + $0x10] sm:$0xff] %vm1230, %v1187
          %1234 = vst.msk [vmem:[#allocation2 + $0x18] sm:$0xff] %vm1230, %v1189
          %1235 = vst.msk [vmem:[#allocation2 + $0x20] sm:$0xff] %vm1230, %v1191
          %1236 = vst.msk [vmem:[#allocation2 + $0x28] sm:$0xff] %vm1230, %v1193
          %1237 = vst.msk [vmem:[#allocation2 + $0x30] sm:$0xff] %vm1230, %v1195
          %1238 = vst.msk [vmem:[#allocation2 + $0x38] sm:$0xff] %vm1230, %v1197
          %1239 = vst.msk [vmem:[#allocation2 + $0x40] sm:$0xff] %vm1230, %v1199
          %1240 = vst.msk [vmem:[#allocation2 + $0x48] sm:$0xff] %vm1230, %v1201
          %1241 = vst.msk [vmem:[#allocation2 + $0x50] sm:$0xff] %vm1230, %v1203
          %1242 = vst.msk [vmem:[#allocation2 + $0x58] sm:$0xff] %vm1230, %v1205
          %1243 = vst.msk [vmem:[#allocation2 + $0x60] sm:$0xff] %vm1230, %v1207
          %1244 = vst.msk [vmem:[#allocation2 + $0x68] sm:$0xff] %vm1230, %v1209
          %1245 = vst.msk [vmem:[#allocation2 + $0x70] sm:$0xff] %vm1230, %v1211
          %1246 = vst.msk [vmem:[#allocation2 + $0x78] sm:$0xff] %vm1230, %v1213
          %s1247 = scalar_lea.vmem %s219, 12
          %v1248 = vld [vmem:[%s1247] sm:$0xf]
          %v1249 = vld [vmem:[%s1247 + $0x4] sm:$0xf]
          %v1250 = vld [vmem:[%s1247 + $0xc] sm:$0xf]
          %v1251 = vld [vmem:[%s1247 + $0x10] sm:$0xf]
          %v1252 = vld [vmem:[%s1247 + $0x18] sm:$0xf]
          %v1253 = vld [vmem:[%s1247 + $0x1c] sm:$0xf]
          %v1254 = vld [vmem:[%s1247 + $0x24] sm:$0xf]
          %v1255 = vld [vmem:[%s1247 + $0x28] sm:$0xf]
          %v1256 = vld [vmem:[%s1247 + $0x30] sm:$0xf]
          %v1257 = vld [vmem:[%s1247 + $0x34] sm:$0xf]
          %v1258 = vld [vmem:[%s1247 + $0x3c] sm:$0xf]
          %v1259 = vld [vmem:[%s1247 + $0x40] sm:$0xf]
          %v1260 = vld [vmem:[%s1247 + $0x48] sm:$0xf]
          %v1261 = vld [vmem:[%s1247 + $0x4c] sm:$0xf]
          %v1262 = vld [vmem:[%s1247 + $0x54] sm:$0xf]
          %v1263 = vld [vmem:[%s1247 + $0x58] sm:$0xf]
          %v1264 = vld [vmem:[%s1247 + $0x60] sm:$0xf]
          %v1265 = vld [vmem:[%s1247 + $0x64] sm:$0xf]
          %v1266 = vld [vmem:[%s1247 + $0x6c] sm:$0xf]
          %v1267 = vld [vmem:[%s1247 + $0x70] sm:$0xf]
          %v1268 = vld [vmem:[%s1247 + $0x78] sm:$0xf]
          %v1269 = vld [vmem:[%s1247 + $0x7c] sm:$0xf]
          %v1270 = vld [vmem:[%s1247 + $0x84] sm:$0xf]
          %v1271 = vld [vmem:[%s1247 + $0x88] sm:$0xf]
          %v1272 = vld [vmem:[%s1247 + $0x90] sm:$0xf]
          %v1273 = vld [vmem:[%s1247 + $0x94] sm:$0xf]
          %v1274 = vld [vmem:[%s1247 + $0x9c] sm:$0xf]
          %v1275 = vld [vmem:[%s1247 + $0xa0] sm:$0xf]
          %v1276 = vld [vmem:[%s1247 + $0xa8] sm:$0xf]
          %v1277 = vld [vmem:[%s1247 + $0xac] sm:$0xf]
          %v1278 = vld [vmem:[%s1247 + $0xb4] sm:$0xf]
          %v1279 = vld [vmem:[%s1247 + $0xb8] sm:$0xf]
          %v1312 = vunpack.c.l.b16 %v1248
          %v1313 = vunpack.c.l.b16 %v1249
          %v1314 = vunpack.c.l.b16 %v1250
          %v1315 = vunpack.c.l.b16 %v1251
          %v1316 = vunpack.c.l.b16 %v1252
          %v1317 = vunpack.c.l.b16 %v1253
          %v1318 = vunpack.c.l.b16 %v1254
          %v1319 = vunpack.c.l.b16 %v1255
          %v1320 = vunpack.c.l.b16 %v1256
          %v1321 = vunpack.c.l.b16 %v1257
          %v1322 = vunpack.c.l.b16 %v1258
          %v1323 = vunpack.c.l.b16 %v1259
          %v1324 = vunpack.c.l.b16 %v1260
          %v1325 = vunpack.c.l.b16 %v1261
          %v1326 = vunpack.c.l.b16 %v1262
          %v1327 = vunpack.c.l.b16 %v1263
          %v1328 = vunpack.c.l.b16 %v1264
          %v1329 = vunpack.c.l.b16 %v1265
          %v1330 = vunpack.c.l.b16 %v1266
          %v1331 = vunpack.c.l.b16 %v1267
          %v1332 = vunpack.c.l.b16 %v1268
          %v1333 = vunpack.c.l.b16 %v1269
          %v1334 = vunpack.c.l.b16 %v1270
          %v1335 = vunpack.c.l.b16 %v1271
          %v1336 = vunpack.c.l.b16 %v1272
          %v1337 = vunpack.c.l.b16 %v1273
          %v1338 = vunpack.c.l.b16 %v1274
          %v1339 = vunpack.c.l.b16 %v1275
          %v1340 = vunpack.c.l.b16 %v1276
          %v1341 = vunpack.c.l.b16 %v1277
          %v1342 = vunpack.c.l.b16 %v1278
          %v1343 = vunpack.c.l.b16 %v1279
          %v1344 = vpack.c.b16 %v1313, %v1312
          %v1345 = vpack.c.b16 %v1315, %v1314
          %v1346 = vpack.c.b16 %v1317, %v1316
          %v1347 = vpack.c.b16 %v1319, %v1318
          %v1348 = vpack.c.b16 %v1321, %v1320
          %v1349 = vpack.c.b16 %v1323, %v1322
          %v1350 = vpack.c.b16 %v1325, %v1324
          %v1351 = vpack.c.b16 %v1327, %v1326
          %v1352 = vpack.c.b16 %v1329, %v1328
          %v1353 = vpack.c.b16 %v1331, %v1330
          %v1354 = vpack.c.b16 %v1333, %v1332
          %v1355 = vpack.c.b16 %v1335, %v1334
          %v1356 = vpack.c.b16 %v1337, %v1336
          %v1357 = vpack.c.b16 %v1339, %v1338
          %v1358 = vpack.c.b16 %v1341, %v1340
          %v1359 = vpack.c.b16 %v1343, %v1342
          %1360 = vrot.lane.b32.xlu0 %v1344, 12
          %v1361 = vpop.permute.xlu0 %1360
          %1362 = vrot.lane.b32.xlu0 %v1345, 12
          %v1363 = vpop.permute.xlu0 %1362
          %1364 = vrot.lane.b32.xlu0 %v1346, 12
          %v1365 = vpop.permute.xlu0 %1364
          %1366 = vrot.lane.b32.xlu0 %v1347, 12
          %v1367 = vpop.permute.xlu0 %1366
          %1368 = vrot.lane.b32.xlu0 %v1348, 12
          %v1369 = vpop.permute.xlu0 %1368
          %1370 = vrot.lane.b32.xlu0 %v1349, 12
          %v1371 = vpop.permute.xlu0 %1370
          %1372 = vrot.lane.b32.xlu0 %v1350, 12
          %v1373 = vpop.permute.xlu0 %1372
          %1374 = vrot.lane.b32.xlu0 %v1351, 12
          %v1375 = vpop.permute.xlu0 %1374
          %1376 = vrot.lane.b32.xlu0 %v1352, 12
          %v1377 = vpop.permute.xlu0 %1376
          %1378 = vrot.lane.b32.xlu0 %v1353, 12
          %v1379 = vpop.permute.xlu0 %1378
          %1380 = vrot.lane.b32.xlu0 %v1354, 12
          %v1381 = vpop.permute.xlu0 %1380
          %1382 = vrot.lane.b32.xlu0 %v1355, 12
          %v1383 = vpop.permute.xlu0 %1382
          %1384 = vrot.lane.b32.xlu0 %v1356, 12
          %v1385 = vpop.permute.xlu0 %1384
          %1386 = vrot.lane.b32.xlu0 %v1357, 12
          %v1387 = vpop.permute.xlu0 %1386
          %1388 = vrot.lane.b32.xlu0 %v1358, 12
          %v1389 = vpop.permute.xlu0 %1388
          %1390 = vrot.lane.b32.xlu0 %v1359, 12
          %v1391 = vpop.permute.xlu0 %1390
          %vm1408 = vcmask 130144
          %1409 = vst.msk [vmem:[#allocation2] sm:$0xff] %vm1408, %v1361
          %1410 = vst.msk [vmem:[#allocation2 + $0x8] sm:$0xff] %vm1408, %v1363
          %1411 = vst.msk [vmem:[#allocation2 + $0x10] sm:$0xff] %vm1408, %v1365
          %1412 = vst.msk [vmem:[#allocation2 + $0x18] sm:$0xff] %vm1408, %v1367
          %1413 = vst.msk [vmem:[#allocation2 + $0x20] sm:$0xff] %vm1408, %v1369
          %1414 = vst.msk [vmem:[#allocation2 + $0x28] sm:$0xff] %vm1408, %v1371
          %1415 = vst.msk [vmem:[#allocation2 + $0x30] sm:$0xff] %vm1408, %v1373
          %1416 = vst.msk [vmem:[#allocation2 + $0x38] sm:$0xff] %vm1408, %v1375
          %1417 = vst.msk [vmem:[#allocation2 + $0x40] sm:$0xff] %vm1408, %v1377
          %1418 = vst.msk [vmem:[#allocation2 + $0x48] sm:$0xff] %vm1408, %v1379
          %1419 = vst.msk [vmem:[#allocation2 + $0x50] sm:$0xff] %vm1408, %v1381
          %1420 = vst.msk [vmem:[#allocation2 + $0x58] sm:$0xff] %vm1408, %v1383
          %1421 = vst.msk [vmem:[#allocation2 + $0x60] sm:$0xff] %vm1408, %v1385
          %1422 = vst.msk [vmem:[#allocation2 + $0x68] sm:$0xff] %vm1408, %v1387
          %1423 = vst.msk [vmem:[#allocation2 + $0x70] sm:$0xff] %vm1408, %v1389
          %1424 = vst.msk [vmem:[#allocation2 + $0x78] sm:$0xff] %vm1408, %v1391
          %v1425 = vld [vmem:[%s1247] sm:$0xf]
          %v1426 = vld [vmem:[%s1247 + $0x4] sm:$0xf]
          %v1427 = vld [vmem:[%s1247 + $0x8] sm:$0x1]
          %v1428 = vld [vmem:[%s1247 + $0xc] sm:$0xf]
          %v1429 = vld [vmem:[%s1247 + $0x10] sm:$0xf]
          %v1430 = vld [vmem:[%s1247 + $0x14] sm:$0x1]
          %v1431 = vld [vmem:[%s1247 + $0x18] sm:$0xf]
          %v1432 = vld [vmem:[%s1247 + $0x1c] sm:$0xf]
          %v1433 = vld [vmem:[%s1247 + $0x20] sm:$0x1]
          %v1434 = vld [vmem:[%s1247 + $0x24] sm:$0xf]
          %v1435 = vld [vmem:[%s1247 + $0x28] sm:$0xf]
          %v1436 = vld [vmem:[%s1247 + $0x2c] sm:$0x1]
          %v1437 = vld [vmem:[%s1247 + $0x30] sm:$0xf]
          %v1438 = vld [vmem:[%s1247 + $0x34] sm:$0xf]
          %v1439 = vld [vmem:[%s1247 + $0x38] sm:$0x1]
          %v1440 = vld [vmem:[%s1247 + $0x3c] sm:$0xf]
          %v1441 = vld [vmem:[%s1247 + $0x40] sm:$0xf]
          %v1442 = vld [vmem:[%s1247 + $0x44] sm:$0x1]
          %v1443 = vld [vmem:[%s1247 + $0x48] sm:$0xf]
          %v1444 = vld [vmem:[%s1247 + $0x4c] sm:$0xf]
          %v1445 = vld [vmem:[%s1247 + $0x50] sm:$0x1]
          %v1446 = vld [vmem:[%s1247 + $0x54] sm:$0xf]
          %v1447 = vld [vmem:[%s1247 + $0x58] sm:$0xf]
          %v1448 = vld [vmem:[%s1247 + $0x5c] sm:$0x1]
          %v1449 = vld [vmem:[%s1247 + $0x60] sm:$0xf]
          %v1450 = vld [vmem:[%s1247 + $0x64] sm:$0xf]
          %v1451 = vld [vmem:[%s1247 + $0x68] sm:$0x1]
          %v1452 = vld [vmem:[%s1247 + $0x6c] sm:$0xf]
          %v1453 = vld [vmem:[%s1247 + $0x70] sm:$0xf]
          %v1454 = vld [vmem:[%s1247 + $0x74] sm:$0x1]
          %v1455 = vld [vmem:[%s1247 + $0x78] sm:$0xf]
          %v1456 = vld [vmem:[%s1247 + $0x7c] sm:$0xf]
          %v1457 = vld [vmem:[%s1247 + $0x80] sm:$0x1]
          %v1458 = vld [vmem:[%s1247 + $0x84] sm:$0xf]
          %v1459 = vld [vmem:[%s1247 + $0x88] sm:$0xf]
          %v1460 = vld [vmem:[%s1247 + $0x8c] sm:$0x1]
          %v1461 = vld [vmem:[%s1247 + $0x90] sm:$0xf]
          %v1462 = vld [vmem:[%s1247 + $0x94] sm:$0xf]
          %v1463 = vld [vmem:[%s1247 + $0x98] sm:$0x1]
          %v1464 = vld [vmem:[%s1247 + $0x9c] sm:$0xf]
          %v1465 = vld [vmem:[%s1247 + $0xa0] sm:$0xf]
          %v1466 = vld [vmem:[%s1247 + $0xa4] sm:$0x1]
          %v1467 = vld [vmem:[%s1247 + $0xa8] sm:$0xf]
          %v1468 = vld [vmem:[%s1247 + $0xac] sm:$0xf]
          %v1469 = vld [vmem:[%s1247 + $0xb0] sm:$0x1]
          %v1470 = vld [vmem:[%s1247 + $0xb4] sm:$0xf]
          %v1471 = vld [vmem:[%s1247 + $0xb8] sm:$0xf]
          %v1472 = vld [vmem:[%s1247 + $0xbc] sm:$0x1]
          %v1474 = vshrl.u32 %v1425, 16
          %v1476 = vrot.slane %v1474, 4
          %v1477 = vshll.u32 %v1425, 16
          %v1479 = vrot.slane %v1477, 5
          %v1480 = vor.u32 %v1476, %v1479
          %v1481 = vrot.slane %v1480, 4
          %v1483 = vshll.u32 %v1426, 16
          %v1485 = vrot.slane %v1483, 5
          %v1486 = vsel %vm425, %v1481, %v1485
          %v1487 = vshrl.u32 %v1426, 16
          %v1489 = vrot.slane %v1487, 4
          %v1490 = vor.u32 %v1489, %v1485
          %v1491 = vrot.slane %v1490, 4
          %v1493 = vshll.u32 %v1427, 16
          %v1495 = vrot.slane %v1493, 5
          %v1496 = vsel %vm425, %v1491, %v1495
          %v1498 = vshrl.u32 %v1428, 16
          %v1500 = vrot.slane %v1498, 4
          %v1501 = vshll.u32 %v1428, 16
          %v1503 = vrot.slane %v1501, 5
          %v1504 = vor.u32 %v1500, %v1503
          %v1505 = vrot.slane %v1504, 4
          %v1507 = vshll.u32 %v1429, 16
          %v1509 = vrot.slane %v1507, 5
          %v1510 = vsel %vm425, %v1505, %v1509
          %v1511 = vshrl.u32 %v1429, 16
          %v1513 = vrot.slane %v1511, 4
          %v1514 = vor.u32 %v1513, %v1509
          %v1515 = vrot.slane %v1514, 4
          %v1517 = vshll.u32 %v1430, 16
          %v1519 = vrot.slane %v1517, 5
          %v1520 = vsel %vm425, %v1515, %v1519
          %v1522 = vshrl.u32 %v1431, 16
          %v1524 = vrot.slane %v1522, 4
          %v1525 = vshll.u32 %v1431, 16
          %v1527 = vrot.slane %v1525, 5
          %v1528 = vor.u32 %v1524, %v1527
          %v1529 = vrot.slane %v1528, 4
          %v1531 = vshll.u32 %v1432, 16
          %v1533 = vrot.slane %v1531, 5
          %v1534 = vsel %vm425, %v1529, %v1533
          %v1535 = vshrl.u32 %v1432, 16
          %v1537 = vrot.slane %v1535, 4
          %v1538 = vor.u32 %v1537, %v1533
          %v1539 = vrot.slane %v1538, 4
          %v1541 = vshll.u32 %v1433, 16
          %v1543 = vrot.slane %v1541, 5
          %v1544 = vsel %vm425, %v1539, %v1543
          %v1546 = vshrl.u32 %v1434, 16
          %v1548 = vrot.slane %v1546, 4
          %v1549 = vshll.u32 %v1434, 16
          %v1551 = vrot.slane %v1549, 5
          %v1552 = vor.u32 %v1548, %v1551
          %v1553 = vrot.slane %v1552, 4
          %v1555 = vshll.u32 %v1435, 16
          %v1557 = vrot.slane %v1555, 5
          %v1558 = vsel %vm425, %v1553, %v1557
          %v1559 = vshrl.u32 %v1435, 16
          %v1561 = vrot.slane %v1559, 4
          %v1562 = vor.u32 %v1561, %v1557
          %v1563 = vrot.slane %v1562, 4
          %v1565 = vshll.u32 %v1436, 16
          %v1567 = vrot.slane %v1565, 5
          %v1568 = vsel %vm425, %v1563, %v1567
          %v1570 = vshrl.u32 %v1437, 16
          %v1572 = vrot.slane %v1570, 4
          %v1573 = vshll.u32 %v1437, 16
          %v1575 = vrot.slane %v1573, 5
          %v1576 = vor.u32 %v1572, %v1575
          %v1577 = vrot.slane %v1576, 4
          %v1579 = vshll.u32 %v1438, 16
          %v1581 = vrot.slane %v1579, 5
          %v1582 = vsel %vm425, %v1577, %v1581
          %v1583 = vshrl.u32 %v1438, 16
          %v1585 = vrot.slane %v1583, 4
          %v1586 = vor.u32 %v1585, %v1581
          %v1587 = vrot.slane %v1586, 4
          %v1589 = vshll.u32 %v1439, 16
          %v1591 = vrot.slane %v1589, 5
          %v1592 = vsel %vm425, %v1587, %v1591
          %v1594 = vshrl.u32 %v1440, 16
          %v1596 = vrot.slane %v1594, 4
          %v1597 = vshll.u32 %v1440, 16
          %v1599 = vrot.slane %v1597, 5
          %v1600 = vor.u32 %v1596, %v1599
          %v1601 = vrot.slane %v1600, 4
          %v1603 = vshll.u32 %v1441, 16
          %v1605 = vrot.slane %v1603, 5
          %v1606 = vsel %vm425, %v1601, %v1605
          %v1607 = vshrl.u32 %v1441, 16
          %v1609 = vrot.slane %v1607, 4
          %v1610 = vor.u32 %v1609, %v1605
          %v1611 = vrot.slane %v1610, 4
          %v1613 = vshll.u32 %v1442, 16
          %v1615 = vrot.slane %v1613, 5
          %v1616 = vsel %vm425, %v1611, %v1615
          %v1618 = vshrl.u32 %v1443, 16
          %v1620 = vrot.slane %v1618, 4
          %v1621 = vshll.u32 %v1443, 16
          %v1623 = vrot.slane %v1621, 5
          %v1624 = vor.u32 %v1620, %v1623
          %v1625 = vrot.slane %v1624, 4
          %v1627 = vshll.u32 %v1444, 16
          %v1629 = vrot.slane %v1627, 5
          %v1630 = vsel %vm425, %v1625, %v1629
          %v1631 = vshrl.u32 %v1444, 16
          %v1633 = vrot.slane %v1631, 4
          %v1634 = vor.u32 %v1633, %v1629
          %v1635 = vrot.slane %v1634, 4
          %v1637 = vshll.u32 %v1445, 16
          %v1639 = vrot.slane %v1637, 5
          %v1640 = vsel %vm425, %v1635, %v1639
          %v1642 = vshrl.u32 %v1446, 16
          %v1644 = vrot.slane %v1642, 4
          %v1645 = vshll.u32 %v1446, 16
          %v1647 = vrot.slane %v1645, 5
          %v1648 = vor.u32 %v1644, %v1647
          %v1649 = vrot.slane %v1648, 4
          %v1651 = vshll.u32 %v1447, 16
          %v1653 = vrot.slane %v1651, 5
          %v1654 = vsel %vm425, %v1649, %v1653
          %v1655 = vshrl.u32 %v1447, 16
          %v1657 = vrot.slane %v1655, 4
          %v1658 = vor.u32 %v1657, %v1653
          %v1659 = vrot.slane %v1658, 4
          %v1661 = vshll.u32 %v1448, 16
          %v1663 = vrot.slane %v1661, 5
          %v1664 = vsel %vm425, %v1659, %v1663
          %v1666 = vshrl.u32 %v1449, 16
          %v1668 = vrot.slane %v1666, 4
          %v1669 = vshll.u32 %v1449, 16
          %v1671 = vrot.slane %v1669, 5
          %v1672 = vor.u32 %v1668, %v1671
          %v1673 = vrot.slane %v1672, 4
          %v1675 = vshll.u32 %v1450, 16
          %v1677 = vrot.slane %v1675, 5
          %v1678 = vsel %vm425, %v1673, %v1677
          %v1679 = vshrl.u32 %v1450, 16
          %v1681 = vrot.slane %v1679, 4
          %v1682 = vor.u32 %v1681, %v1677
          %v1683 = vrot.slane %v1682, 4
          %v1685 = vshll.u32 %v1451, 16
          %v1687 = vrot.slane %v1685, 5
          %v1688 = vsel %vm425, %v1683, %v1687
          %v1690 = vshrl.u32 %v1452, 16
          %v1692 = vrot.slane %v1690, 4
          %v1693 = vshll.u32 %v1452, 16
          %v1695 = vrot.slane %v1693, 5
          %v1696 = vor.u32 %v1692, %v1695
          %v1697 = vrot.slane %v1696, 4
          %v1699 = vshll.u32 %v1453, 16
          %v1701 = vrot.slane %v1699, 5
          %v1702 = vsel %vm425, %v1697, %v1701
          %v1703 = vshrl.u32 %v1453, 16
          %v1705 = vrot.slane %v1703, 4
          %v1706 = vor.u32 %v1705, %v1701
          %v1707 = vrot.slane %v1706, 4
          %v1709 = vshll.u32 %v1454, 16
          %v1711 = vrot.slane %v1709, 5
          %v1712 = vsel %vm425, %v1707, %v1711
          %v1714 = vshrl.u32 %v1455, 16
          %v1716 = vrot.slane %v1714, 4
          %v1717 = vshll.u32 %v1455, 16
          %v1719 = vrot.slane %v1717, 5
          %v1720 = vor.u32 %v1716, %v1719
          %v1721 = vrot.slane %v1720, 4
          %v1723 = vshll.u32 %v1456, 16
          %v1725 = vrot.slane %v1723, 5
          %v1726 = vsel %vm425, %v1721, %v1725
          %v1727 = vshrl.u32 %v1456, 16
          %v1729 = vrot.slane %v1727, 4
          %v1730 = vor.u32 %v1729, %v1725
          %v1731 = vrot.slane %v1730, 4
          %v1733 = vshll.u32 %v1457, 16
          %v1735 = vrot.slane %v1733, 5
          %v1736 = vsel %vm425, %v1731, %v1735
          %v1738 = vshrl.u32 %v1458, 16
          %v1740 = vrot.slane %v1738, 4
          %v1741 = vshll.u32 %v1458, 16
          %v1743 = vrot.slane %v1741, 5
          %v1744 = vor.u32 %v1740, %v1743
          %v1745 = vrot.slane %v1744, 4
          %v1747 = vshll.u32 %v1459, 16
          %v1749 = vrot.slane %v1747, 5
          %v1750 = vsel %vm425, %v1745, %v1749
          %v1751 = vshrl.u32 %v1459, 16
          %v1753 = vrot.slane %v1751, 4
          %v1754 = vor.u32 %v1753, %v1749
          %v1755 = vrot.slane %v1754, 4
          %v1757 = vshll.u32 %v1460, 16
          %v1759 = vrot.slane %v1757, 5
          %v1760 = vsel %vm425, %v1755, %v1759
          %v1762 = vshrl.u32 %v1461, 16
          %v1764 = vrot.slane %v1762, 4
          %v1765 = vshll.u32 %v1461, 16
          %v1767 = vrot.slane %v1765, 5
          %v1768 = vor.u32 %v1764, %v1767
          %v1769 = vrot.slane %v1768, 4
          %v1771 = vshll.u32 %v1462, 16
          %v1773 = vrot.slane %v1771, 5
          %v1774 = vsel %vm425, %v1769, %v1773
          %v1775 = vshrl.u32 %v1462, 16
          %v1777 = vrot.slane %v1775, 4
          %v1778 = vor.u32 %v1777, %v1773
          %v1779 = vrot.slane %v1778, 4
          %v1781 = vshll.u32 %v1463, 16
          %v1783 = vrot.slane %v1781, 5
          %v1784 = vsel %vm425, %v1779, %v1783
          %v1786 = vshrl.u32 %v1464, 16
          %v1788 = vrot.slane %v1786, 4
          %v1789 = vshll.u32 %v1464, 16
          %v1791 = vrot.slane %v1789, 5
          %v1792 = vor.u32 %v1788, %v1791
          %v1793 = vrot.slane %v1792, 4
          %v1795 = vshll.u32 %v1465, 16
          %v1797 = vrot.slane %v1795, 5
          %v1798 = vsel %vm425, %v1793, %v1797
          %v1799 = vshrl.u32 %v1465, 16
          %v1801 = vrot.slane %v1799, 4
          %v1802 = vor.u32 %v1801, %v1797
          %v1803 = vrot.slane %v1802, 4
          %v1805 = vshll.u32 %v1466, 16
          %v1807 = vrot.slane %v1805, 5
          %v1808 = vsel %vm425, %v1803, %v1807
          %v1810 = vshrl.u32 %v1467, 16
          %v1812 = vrot.slane %v1810, 4
          %v1813 = vshll.u32 %v1467, 16
          %v1815 = vrot.slane %v1813, 5
          %v1816 = vor.u32 %v1812, %v1815
          %v1817 = vrot.slane %v1816, 4
          %v1819 = vshll.u32 %v1468, 16
          %v1821 = vrot.slane %v1819, 5
          %v1822 = vsel %vm425, %v1817, %v1821
          %v1823 = vshrl.u32 %v1468, 16
          %v1825 = vrot.slane %v1823, 4
          %v1826 = vor.u32 %v1825, %v1821
          %v1827 = vrot.slane %v1826, 4
          %v1829 = vshll.u32 %v1469, 16
          %v1831 = vrot.slane %v1829, 5
          %v1832 = vsel %vm425, %v1827, %v1831
          %v1834 = vshrl.u32 %v1470, 16
          %v1836 = vrot.slane %v1834, 4
          %v1837 = vshll.u32 %v1470, 16
          %v1839 = vrot.slane %v1837, 5
          %v1840 = vor.u32 %v1836, %v1839
          %v1841 = vrot.slane %v1840, 4
          %v1843 = vshll.u32 %v1471, 16
          %v1845 = vrot.slane %v1843, 5
          %v1846 = vsel %vm425, %v1841, %v1845
          %v1847 = vshrl.u32 %v1471, 16
          %v1849 = vrot.slane %v1847, 4
          %v1850 = vor.u32 %v1849, %v1845
          %v1851 = vrot.slane %v1850, 4
          %v1853 = vshll.u32 %v1472, 16
          %v1855 = vrot.slane %v1853, 5
          %v1856 = vsel %vm425, %v1851, %v1855
          %v1857 = vunpack.c.l.b16 %v1486
          %v1858 = vunpack.c.l.b16 %v1496
          %v1859 = vunpack.c.l.b16 %v1510
          %v1860 = vunpack.c.l.b16 %v1520
          %v1861 = vunpack.c.l.b16 %v1534
          %v1862 = vunpack.c.l.b16 %v1544
          %v1863 = vunpack.c.l.b16 %v1558
          %v1864 = vunpack.c.l.b16 %v1568
          %v1865 = vunpack.c.l.b16 %v1582
          %v1866 = vunpack.c.l.b16 %v1592
          %v1867 = vunpack.c.l.b16 %v1606
          %v1868 = vunpack.c.l.b16 %v1616
          %v1869 = vunpack.c.l.b16 %v1630
          %v1870 = vunpack.c.l.b16 %v1640
          %v1871 = vunpack.c.l.b16 %v1654
          %v1872 = vunpack.c.l.b16 %v1664
          %v1873 = vunpack.c.l.b16 %v1678
          %v1874 = vunpack.c.l.b16 %v1688
          %v1875 = vunpack.c.l.b16 %v1702
          %v1876 = vunpack.c.l.b16 %v1712
          %v1877 = vunpack.c.l.b16 %v1726
          %v1878 = vunpack.c.l.b16 %v1736
          %v1879 = vunpack.c.l.b16 %v1750
          %v1880 = vunpack.c.l.b16 %v1760
          %v1881 = vunpack.c.l.b16 %v1774
          %v1882 = vunpack.c.l.b16 %v1784
          %v1883 = vunpack.c.l.b16 %v1798
          %v1884 = vunpack.c.l.b16 %v1808
          %v1885 = vunpack.c.l.b16 %v1822
          %v1886 = vunpack.c.l.b16 %v1832
          %v1887 = vunpack.c.l.b16 %v1846
          %v1888 = vunpack.c.l.b16 %v1856
          %v1889 = vpack.c.b16 %v1858, %v1857
          %v1890 = vpack.c.b16 %v1860, %v1859
          %v1891 = vpack.c.b16 %v1862, %v1861
          %v1892 = vpack.c.b16 %v1864, %v1863
          %v1893 = vpack.c.b16 %v1866, %v1865
          %v1894 = vpack.c.b16 %v1868, %v1867
          %v1895 = vpack.c.b16 %v1870, %v1869
          %v1896 = vpack.c.b16 %v1872, %v1871
          %v1897 = vpack.c.b16 %v1874, %v1873
          %v1898 = vpack.c.b16 %v1876, %v1875
          %v1899 = vpack.c.b16 %v1878, %v1877
          %v1900 = vpack.c.b16 %v1880, %v1879
          %v1901 = vpack.c.b16 %v1882, %v1881
          %v1902 = vpack.c.b16 %v1884, %v1883
          %v1903 = vpack.c.b16 %v1886, %v1885
          %v1904 = vpack.c.b16 %v1888, %v1887
          %1905 = vrot.lane.b32.xlu0 %v1889, 16
          %v1906 = vpop.permute.xlu0 %1905
          %1907 = vrot.lane.b32.xlu0 %v1890, 16
          %v1908 = vpop.permute.xlu0 %1907
          %1909 = vrot.lane.b32.xlu0 %v1891, 16
          %v1910 = vpop.permute.xlu0 %1909
          %1911 = vrot.lane.b32.xlu0 %v1892, 16
          %v1912 = vpop.permute.xlu0 %1911
          %1913 = vrot.lane.b32.xlu0 %v1893, 16
          %v1914 = vpop.permute.xlu0 %1913
          %1915 = vrot.lane.b32.xlu0 %v1894, 16
          %v1916 = vpop.permute.xlu0 %1915
          %1917 = vrot.lane.b32.xlu0 %v1895, 16
          %v1918 = vpop.permute.xlu0 %1917
          %1919 = vrot.lane.b32.xlu0 %v1896, 16
          %v1920 = vpop.permute.xlu0 %1919
          %1921 = vrot.lane.b32.xlu0 %v1897, 16
          %v1922 = vpop.permute.xlu0 %1921
          %1923 = vrot.lane.b32.xlu0 %v1898, 16
          %v1924 = vpop.permute.xlu0 %1923
          %1925 = vrot.lane.b32.xlu0 %v1899, 16
          %v1926 = vpop.permute.xlu0 %1925
          %1927 = vrot.lane.b32.xlu0 %v1900, 16
          %v1928 = vpop.permute.xlu0 %1927
          %1929 = vrot.lane.b32.xlu0 %v1901, 16
          %v1930 = vpop.permute.xlu0 %1929
          %1931 = vrot.lane.b32.xlu0 %v1902, 16
          %v1932 = vpop.permute.xlu0 %1931
          %1933 = vrot.lane.b32.xlu0 %v1903, 16
          %v1934 = vpop.permute.xlu0 %1933
          %1935 = vrot.lane.b32.xlu0 %v1904, 16
          %v1936 = vpop.permute.xlu0 %1935
          %vm1953 = vcmask 162944
          %1954 = vst.msk [vmem:[#allocation2] sm:$0xff] %vm1953, %v1906
          %1955 = vst.msk [vmem:[#allocation2 + $0x8] sm:$0xff] %vm1953, %v1908
          %1956 = vst.msk [vmem:[#allocation2 + $0x10] sm:$0xff] %vm1953, %v1910
          %1957 = vst.msk [vmem:[#allocation2 + $0x18] sm:$0xff] %vm1953, %v1912
          %1958 = vst.msk [vmem:[#allocation2 + $0x20] sm:$0xff] %vm1953, %v1914
          %1959 = vst.msk [vmem:[#allocation2 + $0x28] sm:$0xff] %vm1953, %v1916
          %1960 = vst.msk [vmem:[#allocation2 + $0x30] sm:$0xff] %vm1953, %v1918
          %1961 = vst.msk [vmem:[#allocation2 + $0x38] sm:$0xff] %vm1953, %v1920
          %1962 = vst.msk [vmem:[#allocation2 + $0x40] sm:$0xff] %vm1953, %v1922
          %1963 = vst.msk [vmem:[#allocation2 + $0x48] sm:$0xff] %vm1953, %v1924
          %1964 = vst.msk [vmem:[#allocation2 + $0x50] sm:$0xff] %vm1953, %v1926
          %1965 = vst.msk [vmem:[#allocation2 + $0x58] sm:$0xff] %vm1953, %v1928
          %1966 = vst.msk [vmem:[#allocation2 + $0x60] sm:$0xff] %vm1953, %v1930
          %1967 = vst.msk [vmem:[#allocation2 + $0x68] sm:$0xff] %vm1953, %v1932
          %1968 = vst.msk [vmem:[#allocation2 + $0x70] sm:$0xff] %vm1953, %v1934
          %1969 = vst.msk [vmem:[#allocation2 + $0x78] sm:$0xff] %vm1953, %v1936
          %v1970 = vld [vmem:[%s1247] sm:$0xe]
          %v1971 = vld [vmem:[%s1247 + $0x4] sm:$0xf]
          %v1972 = vld [vmem:[%s1247 + $0x8] sm:$0x1]
          %v1973 = vld [vmem:[%s1247 + $0xc] sm:$0xe]
          %v1974 = vld [vmem:[%s1247 + $0x10] sm:$0xf]
          %v1975 = vld [vmem:[%s1247 + $0x14] sm:$0x1]
          %v1976 = vld [vmem:[%s1247 + $0x18] sm:$0xe]
          %v1977 = vld [vmem:[%s1247 + $0x1c] sm:$0xf]
          %v1978 = vld [vmem:[%s1247 + $0x20] sm:$0x1]
          %v1979 = vld [vmem:[%s1247 + $0x24] sm:$0xe]
          %v1980 = vld [vmem:[%s1247 + $0x28] sm:$0xf]
          %v1981 = vld [vmem:[%s1247 + $0x2c] sm:$0x1]
          %v1982 = vld [vmem:[%s1247 + $0x30] sm:$0xe]
          %v1983 = vld [vmem:[%s1247 + $0x34] sm:$0xf]
          %v1984 = vld [vmem:[%s1247 + $0x38] sm:$0x1]
          %v1985 = vld [vmem:[%s1247 + $0x3c] sm:$0xe]
          %v1986 = vld [vmem:[%s1247 + $0x40] sm:$0xf]
          %v1987 = vld [vmem:[%s1247 + $0x44] sm:$0x1]
          %v1988 = vld [vmem:[%s1247 + $0x48] sm:$0xe]
          %v1989 = vld [vmem:[%s1247 + $0x4c] sm:$0xf]
          %v1990 = vld [vmem:[%s1247 + $0x50] sm:$0x1]
          %v1991 = vld [vmem:[%s1247 + $0x54] sm:$0xe]
          %v1992 = vld [vmem:[%s1247 + $0x58] sm:$0xf]
          %v1993 = vld [vmem:[%s1247 + $0x5c] sm:$0x1]
          %v1994 = vld [vmem:[%s1247 + $0x60] sm:$0xe]
          %v1995 = vld [vmem:[%s1247 + $0x64] sm:$0xf]
          %v1996 = vld [vmem:[%s1247 + $0x68] sm:$0x1]
          %v1997 = vld [vmem:[%s1247 + $0x6c] sm:$0xe]
          %v1998 = vld [vmem:[%s1247 + $0x70] sm:$0xf]
          %v1999 = vld [vmem:[%s1247 + $0x74] sm:$0x1]
          %v2000 = vld [vmem:[%s1247 + $0x78] sm:$0xe]
          %v2001 = vld [vmem:[%s1247 + $0x7c] sm:$0xf]
          %v2002 = vld [vmem:[%s1247 + $0x80] sm:$0x1]
          %v2003 = vld [vmem:[%s1247 + $0x84] sm:$0xe]
          %v2004 = vld [vmem:[%s1247 + $0x88] sm:$0xf]
          %v2005 = vld [vmem:[%s1247 + $0x8c] sm:$0x1]
          %v2006 = vld [vmem:[%s1247 + $0x90] sm:$0xe]
          %v2007 = vld [vmem:[%s1247 + $0x94] sm:$0xf]
          %v2008 = vld [vmem:[%s1247 + $0x98] sm:$0x1]
          %v2009 = vld [vmem:[%s1247 + $0x9c] sm:$0xe]
          %v2010 = vld [vmem:[%s1247 + $0xa0] sm:$0xf]
          %v2011 = vld [vmem:[%s1247 + $0xa4] sm:$0x1]
          %v2012 = vld [vmem:[%s1247 + $0xa8] sm:$0xe]
          %v2013 = vld [vmem:[%s1247 + $0xac] sm:$0xf]
          %v2014 = vld [vmem:[%s1247 + $0xb0] sm:$0x1]
          %v2015 = vld [vmem:[%s1247 + $0xb4] sm:$0xe]
          %v2016 = vld [vmem:[%s1247 + $0xb8] sm:$0xf]
          %v2017 = vld [vmem:[%s1247 + $0xbc] sm:$0x1]
          %v2066 = vrot.slane %v1970, 5
          %v2067 = vrot.slane %v2066, 4
          %v2068 = vrot.slane %v1971, 5
          %v2069 = vsel %vm1021, %v2067, %v2068
          %v2070 = vrot.slane %v2068, 4
          %v2071 = vrot.slane %v1972, 5
          %v2072 = vsel %vm1021, %v2070, %v2071
          %v2073 = vrot.slane %v1973, 5
          %v2074 = vrot.slane %v2073, 4
          %v2075 = vrot.slane %v1974, 5
          %v2076 = vsel %vm1021, %v2074, %v2075
          %v2077 = vrot.slane %v2075, 4
          %v2078 = vrot.slane %v1975, 5
          %v2079 = vsel %vm1021, %v2077, %v2078
          %v2080 = vrot.slane %v1976, 5
          %v2081 = vrot.slane %v2080, 4
          %v2082 = vrot.slane %v1977, 5
          %v2083 = vsel %vm1021, %v2081, %v2082
          %v2084 = vrot.slane %v2082, 4
          %v2085 = vrot.slane %v1978, 5
          %v2086 = vsel %vm1021, %v2084, %v2085
          %v2087 = vrot.slane %v1979, 5
          %v2088 = vrot.slane %v2087, 4
          %v2089 = vrot.slane %v1980, 5
          %v2090 = vsel %vm1021, %v2088, %v2089
          %v2091 = vrot.slane %v2089, 4
          %v2092 = vrot.slane %v1981, 5
          %v2093 = vsel %vm1021, %v2091, %v2092
          %v2094 = vrot.slane %v1982, 5
          %v2095 = vrot.slane %v2094, 4
          %v2096 = vrot.slane %v1983, 5
          %v2097 = vsel %vm1021, %v2095, %v2096
          %v2098 = vrot.slane %v2096, 4
          %v2099 = vrot.slane %v1984, 5
          %v2100 = vsel %vm1021, %v2098, %v2099
          %v2101 = vrot.slane %v1985, 5
          %v2102 = vrot.slane %v2101, 4
          %v2103 = vrot.slane %v1986, 5
          %v2104 = vsel %vm1021, %v2102, %v2103
          %v2105 = vrot.slane %v2103, 4
          %v2106 = vrot.slane %v1987, 5
          %v2107 = vsel %vm1021, %v2105, %v2106
          %v2108 = vrot.slane %v1988, 5
          %v2109 = vrot.slane %v2108, 4
          %v2110 = vrot.slane %v1989, 5
          %v2111 = vsel %vm1021, %v2109, %v2110
          %v2112 = vrot.slane %v2110, 4
          %v2113 = vrot.slane %v1990, 5
          %v2114 = vsel %vm1021, %v2112, %v2113
          %v2115 = vrot.slane %v1991, 5
          %v2116 = vrot.slane %v2115, 4
          %v2117 = vrot.slane %v1992, 5
          %v2118 = vsel %vm1021, %v2116, %v2117
          %v2119 = vrot.slane %v2117, 4
          %v2120 = vrot.slane %v1993, 5
          %v2121 = vsel %vm1021, %v2119, %v2120
          %v2122 = vrot.slane %v1994, 5
          %v2123 = vrot.slane %v2122, 4
          %v2124 = vrot.slane %v1995, 5
          %v2125 = vsel %vm1021, %v2123, %v2124
          %v2126 = vrot.slane %v2124, 4
          %v2127 = vrot.slane %v1996, 5
          %v2128 = vsel %vm1021, %v2126, %v2127
          %v2129 = vrot.slane %v1997, 5
          %v2130 = vrot.slane %v2129, 4
          %v2131 = vrot.slane %v1998, 5
          %v2132 = vsel %vm1021, %v2130, %v2131
          %v2133 = vrot.slane %v2131, 4
          %v2134 = vrot.slane %v1999, 5
          %v2135 = vsel %vm1021, %v2133, %v2134
          %v2136 = vrot.slane %v2000, 5
          %v2137 = vrot.slane %v2136, 4
          %v2138 = vrot.slane %v2001, 5
          %v2139 = vsel %vm1021, %v2137, %v2138
          %v2140 = vrot.slane %v2138, 4
          %v2141 = vrot.slane %v2002, 5
          %v2142 = vsel %vm1021, %v2140, %v2141
          %v2143 = vrot.slane %v2003, 5
          %v2144 = vrot.slane %v2143, 4
          %v2145 = vrot.slane %v2004, 5
          %v2146 = vsel %vm1021, %v2144, %v2145
          %v2147 = vrot.slane %v2145, 4
          %v2148 = vrot.slane %v2005, 5
          %v2149 = vsel %vm1021, %v2147, %v2148
          %v2150 = vrot.slane %v2006, 5
          %v2151 = vrot.slane %v2150, 4
          %v2152 = vrot.slane %v2007, 5
          %v2153 = vsel %vm1021, %v2151, %v2152
          %v2154 = vrot.slane %v2152, 4
          %v2155 = vrot.slane %v2008, 5
          %v2156 = vsel %vm1021, %v2154, %v2155
          %v2157 = vrot.slane %v2009, 5
          %v2158 = vrot.slane %v2157, 4
          %v2159 = vrot.slane %v2010, 5
          %v2160 = vsel %vm1021, %v2158, %v2159
          %v2161 = vrot.slane %v2159, 4
          %v2162 = vrot.slane %v2011, 5
          %v2163 = vsel %vm1021, %v2161, %v2162
          %v2164 = vrot.slane %v2012, 5
          %v2165 = vrot.slane %v2164, 4
          %v2166 = vrot.slane %v2013, 5
          %v2167 = vsel %vm1021, %v2165, %v2166
          %v2168 = vrot.slane %v2166, 4
          %v2169 = vrot.slane %v2014, 5
          %v2170 = vsel %vm1021, %v2168, %v2169
          %v2171 = vrot.slane %v2015, 5
          %v2172 = vrot.slane %v2171, 4
          %v2173 = vrot.slane %v2016, 5
          %v2174 = vsel %vm1021, %v2172, %v2173
          %v2175 = vrot.slane %v2173, 4
          %v2176 = vrot.slane %v2017, 5
          %v2177 = vsel %vm1021, %v2175, %v2176
          %v2178 = vunpack.c.l.b16 %v2069
          %v2179 = vunpack.c.l.b16 %v2072
          %v2180 = vunpack.c.l.b16 %v2076
          %v2181 = vunpack.c.l.b16 %v2079
          %v2182 = vunpack.c.l.b16 %v2083
          %v2183 = vunpack.c.l.b16 %v2086
          %v2184 = vunpack.c.l.b16 %v2090
          %v2185 = vunpack.c.l.b16 %v2093
          %v2186 = vunpack.c.l.b16 %v2097
          %v2187 = vunpack.c.l.b16 %v2100
          %v2188 = vunpack.c.l.b16 %v2104
          %v2189 = vunpack.c.l.b16 %v2107
          %v2190 = vunpack.c.l.b16 %v2111
          %v2191 = vunpack.c.l.b16 %v2114
          %v2192 = vunpack.c.l.b16 %v2118
          %v2193 = vunpack.c.l.b16 %v2121
          %v2194 = vunpack.c.l.b16 %v2125
          %v2195 = vunpack.c.l.b16 %v2128
          %v2196 = vunpack.c.l.b16 %v2132
          %v2197 = vunpack.c.l.b16 %v2135
          %v2198 = vunpack.c.l.b16 %v2139
          %v2199 = vunpack.c.l.b16 %v2142
          %v2200 = vunpack.c.l.b16 %v2146
          %v2201 = vunpack.c.l.b16 %v2149
          %v2202 = vunpack.c.l.b16 %v2153
          %v2203 = vunpack.c.l.b16 %v2156
          %v2204 = vunpack.c.l.b16 %v2160
          %v2205 = vunpack.c.l.b16 %v2163
          %v2206 = vunpack.c.l.b16 %v2167
          %v2207 = vunpack.c.l.b16 %v2170
          %v2208 = vunpack.c.l.b16 %v2174
          %v2209 = vunpack.c.l.b16 %v2177
          %v2210 = vpack.c.b16 %v2179, %v2178
          %v2211 = vpack.c.b16 %v2181, %v2180
          %v2212 = vpack.c.b16 %v2183, %v2182
          %v2213 = vpack.c.b16 %v2185, %v2184
          %v2214 = vpack.c.b16 %v2187, %v2186
          %v2215 = vpack.c.b16 %v2189, %v2188
          %v2216 = vpack.c.b16 %v2191, %v2190
          %v2217 = vpack.c.b16 %v2193, %v2192
          %v2218 = vpack.c.b16 %v2195, %v2194
          %v2219 = vpack.c.b16 %v2197, %v2196
          %v2220 = vpack.c.b16 %v2199, %v2198
          %v2221 = vpack.c.b16 %v2201, %v2200
          %v2222 = vpack.c.b16 %v2203, %v2202
          %v2223 = vpack.c.b16 %v2205, %v2204
          %v2224 = vpack.c.b16 %v2207, %v2206
          %v2225 = vpack.c.b16 %v2209, %v2208
          %2226 = vrot.lane.b32.xlu0 %v2210, 20
          %v2227 = vpop.permute.xlu0 %2226
          %2228 = vrot.lane.b32.xlu0 %v2211, 20
          %v2229 = vpop.permute.xlu0 %2228
          %2230 = vrot.lane.b32.xlu0 %v2212, 20
          %v2231 = vpop.permute.xlu0 %2230
          %2232 = vrot.lane.b32.xlu0 %v2213, 20
          %v2233 = vpop.permute.xlu0 %2232
          %2234 = vrot.lane.b32.xlu0 %v2214, 20
          %v2235 = vpop.permute.xlu0 %2234
          %2236 = vrot.lane.b32.xlu0 %v2215, 20
          %v2237 = vpop.permute.xlu0 %2236
          %2238 = vrot.lane.b32.xlu0 %v2216, 20
          %v2239 = vpop.permute.xlu0 %2238
          %2240 = vrot.lane.b32.xlu0 %v2217, 20
          %v2241 = vpop.permute.xlu0 %2240
          %2242 = vrot.lane.b32.xlu0 %v2218, 20
          %v2243 = vpop.permute.xlu0 %2242
          %2244 = vrot.lane.b32.xlu0 %v2219, 20
          %v2245 = vpop.permute.xlu0 %2244
          %2246 = vrot.lane.b32.xlu0 %v2220, 20
          %v2247 = vpop.permute.xlu0 %2246
          %2248 = vrot.lane.b32.xlu0 %v2221, 20
          %v2249 = vpop.permute.xlu0 %2248
          %2250 = vrot.lane.b32.xlu0 %v2222, 20
          %v2251 = vpop.permute.xlu0 %2250
          %2252 = vrot.lane.b32.xlu0 %v2223, 20
          %v2253 = vpop.permute.xlu0 %2252
          %2254 = vrot.lane.b32.xlu0 %v2224, 20
          %v2255 = vpop.permute.xlu0 %2254
          %2256 = vrot.lane.b32.xlu0 %v2225, 20
          %v2257 = vpop.permute.xlu0 %2256
          %vm2274 = vcmask 195744
          %2275 = vst.msk [vmem:[#allocation2] sm:$0xff] %vm2274, %v2227
          %2276 = vst.msk [vmem:[#allocation2 + $0x8] sm:$0xff] %vm2274, %v2229
          %2277 = vst.msk [vmem:[#allocation2 + $0x10] sm:$0xff] %vm2274, %v2231
          %2278 = vst.msk [vmem:[#allocation2 + $0x18] sm:$0xff] %vm2274, %v2233
          %2279 = vst.msk [vmem:[#allocation2 + $0x20] sm:$0xff] %vm2274, %v2235
          %2280 = vst.msk [vmem:[#allocation2 + $0x28] sm:$0xff] %vm2274, %v2237
          %2281 = vst.msk [vmem:[#allocation2 + $0x30] sm:$0xff] %vm2274, %v2239
          %2282 = vst.msk [vmem:[#allocation2 + $0x38] sm:$0xff] %vm2274, %v2241
          %2283 = vst.msk [vmem:[#allocation2 + $0x40] sm:$0xff] %vm2274, %v2243
          %2284 = vst.msk [vmem:[#allocation2 + $0x48] sm:$0xff] %vm2274, %v2245
          %2285 = vst.msk [vmem:[#allocation2 + $0x50] sm:$0xff] %vm2274, %v2247
          %2286 = vst.msk [vmem:[#allocation2 + $0x58] sm:$0xff] %vm2274, %v2249
          %2287 = vst.msk [vmem:[#allocation2 + $0x60] sm:$0xff] %vm2274, %v2251
          %2288 = vst.msk [vmem:[#allocation2 + $0x68] sm:$0xff] %vm2274, %v2253
          %2289 = vst.msk [vmem:[#allocation2 + $0x70] sm:$0xff] %vm2274, %v2255
          %2290 = vst.msk [vmem:[#allocation2 + $0x78] sm:$0xff] %vm2274, %v2257
          %s2291 = scalar_lea.vmem %s219, 24
          %v2292 = vld [vmem:[%s2291] sm:$0xf]
          %v2293 = vld [vmem:[%s2291 + $0x4] sm:$0xf]
          %v2294 = vld [vmem:[%s2291 + $0xc] sm:$0xf]
          %v2295 = vld [vmem:[%s2291 + $0x10] sm:$0xf]
          %v2296 = vld [vmem:[%s2291 + $0x18] sm:$0xf]
          %v2297 = vld [vmem:[%s2291 + $0x1c] sm:$0xf]
          %v2298 = vld [vmem:[%s2291 + $0x24] sm:$0xf]
          %v2299 = vld [vmem:[%s2291 + $0x28] sm:$0xf]
          %v2300 = vld [vmem:[%s2291 + $0x30] sm:$0xf]
          %v2301 = vld [vmem:[%s2291 + $0x34] sm:$0xf]
          %v2302 = vld [vmem:[%s2291 + $0x3c] sm:$0xf]
          %v2303 = vld [vmem:[%s2291 + $0x40] sm:$0xf]
          %v2304 = vld [vmem:[%s2291 + $0x48] sm:$0xf]
          %v2305 = vld [vmem:[%s2291 + $0x4c] sm:$0xf]
          %v2306 = vld [vmem:[%s2291 + $0x54] sm:$0xf]
          %v2307 = vld [vmem:[%s2291 + $0x58] sm:$0xf]
          %v2308 = vld [vmem:[%s2291 + $0x60] sm:$0xf]
          %v2309 = vld [vmem:[%s2291 + $0x64] sm:$0xf]
          %v2310 = vld [vmem:[%s2291 + $0x6c] sm:$0xf]
          %v2311 = vld [vmem:[%s2291 + $0x70] sm:$0xf]
          %v2312 = vld [vmem:[%s2291 + $0x78] sm:$0xf]
          %v2313 = vld [vmem:[%s2291 + $0x7c] sm:$0xf]
          %v2314 = vld [vmem:[%s2291 + $0x84] sm:$0xf]
          %v2315 = vld [vmem:[%s2291 + $0x88] sm:$0xf]
          %v2316 = vld [vmem:[%s2291 + $0x90] sm:$0xf]
          %v2317 = vld [vmem:[%s2291 + $0x94] sm:$0xf]
          %v2318 = vld [vmem:[%s2291 + $0x9c] sm:$0xf]
          %v2319 = vld [vmem:[%s2291 + $0xa0] sm:$0xf]
          %v2320 = vld [vmem:[%s2291 + $0xa8] sm:$0xf]
          %v2321 = vld [vmem:[%s2291 + $0xac] sm:$0xf]
          %v2322 = vld [vmem:[%s2291 + $0xb4] sm:$0xf]
          %v2323 = vld [vmem:[%s2291 + $0xb8] sm:$0xf]
          %v2356 = vunpack.c.l.b16 %v2292
          %v2357 = vunpack.c.l.b16 %v2293
          %v2358 = vunpack.c.l.b16 %v2294
          %v2359 = vunpack.c.l.b16 %v2295
          %v2360 = vunpack.c.l.b16 %v2296
          %v2361 = vunpack.c.l.b16 %v2297
          %v2362 = vunpack.c.l.b16 %v2298
          %v2363 = vunpack.c.l.b16 %v2299
          %v2364 = vunpack.c.l.b16 %v2300
          %v2365 = vunpack.c.l.b16 %v2301
          %v2366 = vunpack.c.l.b16 %v2302
          %v2367 = vunpack.c.l.b16 %v2303
          %v2368 = vunpack.c.l.b16 %v2304
          %v2369 = vunpack.c.l.b16 %v2305
          %v2370 = vunpack.c.l.b16 %v2306
          %v2371 = vunpack.c.l.b16 %v2307
          %v2372 = vunpack.c.l.b16 %v2308
          %v2373 = vunpack.c.l.b16 %v2309
          %v2374 = vunpack.c.l.b16 %v2310
          %v2375 = vunpack.c.l.b16 %v2311
          %v2376 = vunpack.c.l.b16 %v2312
          %v2377 = vunpack.c.l.b16 %v2313
          %v2378 = vunpack.c.l.b16 %v2314
          %v2379 = vunpack.c.l.b16 %v2315
          %v2380 = vunpack.c.l.b16 %v2316
          %v2381 = vunpack.c.l.b16 %v2317
          %v2382 = vunpack.c.l.b16 %v2318
          %v2383 = vunpack.c.l.b16 %v2319
          %v2384 = vunpack.c.l.b16 %v2320
          %v2385 = vunpack.c.l.b16 %v2321
          %v2386 = vunpack.c.l.b16 %v2322
          %v2387 = vunpack.c.l.b16 %v2323
          %v2388 = vpack.c.b16 %v2357, %v2356
          %v2389 = vpack.c.b16 %v2359, %v2358
          %v2390 = vpack.c.b16 %v2361, %v2360
          %v2391 = vpack.c.b16 %v2363, %v2362
          %v2392 = vpack.c.b16 %v2365, %v2364
          %v2393 = vpack.c.b16 %v2367, %v2366
          %v2394 = vpack.c.b16 %v2369, %v2368
          %v2395 = vpack.c.b16 %v2371, %v2370
          %v2396 = vpack.c.b16 %v2373, %v2372
          %v2397 = vpack.c.b16 %v2375, %v2374
          %v2398 = vpack.c.b16 %v2377, %v2376
          %v2399 = vpack.c.b16 %v2379, %v2378
          %v2400 = vpack.c.b16 %v2381, %v2380
          %v2401 = vpack.c.b16 %v2383, %v2382
          %v2402 = vpack.c.b16 %v2385, %v2384
          %v2403 = vpack.c.b16 %v2387, %v2386
          %2404 = vrot.lane.b32.xlu0 %v2388, 24
          %v2405 = vpop.permute.xlu0 %2404
          %2406 = vrot.lane.b32.xlu0 %v2389, 24
          %v2407 = vpop.permute.xlu0 %2406
          %2408 = vrot.lane.b32.xlu0 %v2390, 24
          %v2409 = vpop.permute.xlu0 %2408
          %2410 = vrot.lane.b32.xlu0 %v2391, 24
          %v2411 = vpop.permute.xlu0 %2410
          %2412 = vrot.lane.b32.xlu0 %v2392, 24
          %v2413 = vpop.permute.xlu0 %2412
          %2414 = vrot.lane.b32.xlu0 %v2393, 24
          %v2415 = vpop.permute.xlu0 %2414
          %2416 = vrot.lane.b32.xlu0 %v2394, 24
          %v2417 = vpop.permute.xlu0 %2416
          %2418 = vrot.lane.b32.xlu0 %v2395, 24
          %v2419 = vpop.permute.xlu0 %2418
          %2420 = vrot.lane.b32.xlu0 %v2396, 24
          %v2421 = vpop.permute.xlu0 %2420
          %2422 = vrot.lane.b32.xlu0 %v2397, 24
          %v2423 = vpop.permute.xlu0 %2422
          %2424 = vrot.lane.b32.xlu0 %v2398, 24
          %v2425 = vpop.permute.xlu0 %2424
          %2426 = vrot.lane.b32.xlu0 %v2399, 24
          %v2427 = vpop.permute.xlu0 %2426
          %2428 = vrot.lane.b32.xlu0 %v2400, 24
          %v2429 = vpop.permute.xlu0 %2428
          %2430 = vrot.lane.b32.xlu0 %v2401, 24
          %v2431 = vpop.permute.xlu0 %2430
          %2432 = vrot.lane.b32.xlu0 %v2402, 24
          %v2433 = vpop.permute.xlu0 %2432
          %2434 = vrot.lane.b32.xlu0 %v2403, 24
          %v2435 = vpop.permute.xlu0 %2434
          %vm2452 = vcmask 228544
          %2453 = vst.msk [vmem:[#allocation2] sm:$0xff] %vm2452, %v2405
          %2454 = vst.msk [vmem:[#allocation2 + $0x8] sm:$0xff] %vm2452, %v2407
          %2455 = vst.msk [vmem:[#allocation2 + $0x10] sm:$0xff] %vm2452, %v2409
          %2456 = vst.msk [vmem:[#allocation2 + $0x18] sm:$0xff] %vm2452, %v2411
          %2457 = vst.msk [vmem:[#allocation2 + $0x20] sm:$0xff] %vm2452, %v2413
          %2458 = vst.msk [vmem:[#allocation2 + $0x28] sm:$0xff] %vm2452, %v2415
          %2459 = vst.msk [vmem:[#allocation2 + $0x30] sm:$0xff] %vm2452, %v2417
          %2460 = vst.msk [vmem:[#allocation2 + $0x38] sm:$0xff] %vm2452, %v2419
          %2461 = vst.msk [vmem:[#allocation2 + $0x40] sm:$0xff] %vm2452, %v2421
          %2462 = vst.msk [vmem:[#allocation2 + $0x48] sm:$0xff] %vm2452, %v2423
          %2463 = vst.msk [vmem:[#allocation2 + $0x50] sm:$0xff] %vm2452, %v2425
          %2464 = vst.msk [vmem:[#allocation2 + $0x58] sm:$0xff] %vm2452, %v2427
          %2465 = vst.msk [vmem:[#allocation2 + $0x60] sm:$0xff] %vm2452, %v2429
          %2466 = vst.msk [vmem:[#allocation2 + $0x68] sm:$0xff] %vm2452, %v2431
          %2467 = vst.msk [vmem:[#allocation2 + $0x70] sm:$0xff] %vm2452, %v2433
          %2468 = vst.msk [vmem:[#allocation2 + $0x78] sm:$0xff] %vm2452, %v2435
          %v2469 = vld [vmem:[%s2291] sm:$0xf]
          %v2470 = vld [vmem:[%s2291 + $0x4] sm:$0xf]
          %v2471 = vld [vmem:[%s2291 + $0x8] sm:$0x1]
          %v2472 = vld [vmem:[%s2291 + $0xc] sm:$0xf]
          %v2473 = vld [vmem:[%s2291 + $0x10] sm:$0xf]
          %v2474 = vld [vmem:[%s2291 + $0x14] sm:$0x1]
          %v2475 = vld [vmem:[%s2291 + $0x18] sm:$0xf]
          %v2476 = vld [vmem:[%s2291 + $0x1c] sm:$0xf]
          %v2477 = vld [vmem:[%s2291 + $0x20] sm:$0x1]
          %v2478 = vld [vmem:[%s2291 + $0x24] sm:$0xf]
          %v2479 = vld [vmem:[%s2291 + $0x28] sm:$0xf]
          %v2480 = vld [vmem:[%s2291 + $0x2c] sm:$0x1]
          %v2481 = vld [vmem:[%s2291 + $0x30] sm:$0xf]
          %v2482 = vld [vmem:[%s2291 + $0x34] sm:$0xf]
          %v2483 = vld [vmem:[%s2291 + $0x38] sm:$0x1]
          %v2484 = vld [vmem:[%s2291 + $0x3c] sm:$0xf]
          %v2485 = vld [vmem:[%s2291 + $0x40] sm:$0xf]
          %v2486 = vld [vmem:[%s2291 + $0x44] sm:$0x1]
          %v2487 = vld [vmem:[%s2291 + $0x48] sm:$0xf]
          %v2488 = vld [vmem:[%s2291 + $0x4c] sm:$0xf]
          %v2489 = vld [vmem:[%s2291 + $0x50] sm:$0x1]
          %v2490 = vld [vmem:[%s2291 + $0x54] sm:$0xf]
          %v2491 = vld [vmem:[%s2291 + $0x58] sm:$0xf]
          %v2492 = vld [vmem:[%s2291 + $0x5c] sm:$0x1]
          %v2493 = vld [vmem:[%s2291 + $0x60] sm:$0xf]
          %v2494 = vld [vmem:[%s2291 + $0x64] sm:$0xf]
          %v2495 = vld [vmem:[%s2291 + $0x68] sm:$0x1]
          %v2496 = vld [vmem:[%s2291 + $0x6c] sm:$0xf]
          %v2497 = vld [vmem:[%s2291 + $0x70] sm:$0xf]
          %v2498 = vld [vmem:[%s2291 + $0x74] sm:$0x1]
          %v2499 = vld [vmem:[%s2291 + $0x78] sm:$0xf]
          %v2500 = vld [vmem:[%s2291 + $0x7c] sm:$0xf]
          %v2501 = vld [vmem:[%s2291 + $0x80] sm:$0x1]
          %v2502 = vld [vmem:[%s2291 + $0x84] sm:$0xf]
          %v2503 = vld [vmem:[%s2291 + $0x88] sm:$0xf]
          %v2504 = vld [vmem:[%s2291 + $0x8c] sm:$0x1]
          %v2505 = vld [vmem:[%s2291 + $0x90] sm:$0xf]
          %v2506 = vld [vmem:[%s2291 + $0x94] sm:$0xf]
          %v2507 = vld [vmem:[%s2291 + $0x98] sm:$0x1]
          %v2508 = vld [vmem:[%s2291 + $0x9c] sm:$0xf]
          %v2509 = vld [vmem:[%s2291 + $0xa0] sm:$0xf]
          %v2510 = vld [vmem:[%s2291 + $0xa4] sm:$0x1]
          %v2511 = vld [vmem:[%s2291 + $0xa8] sm:$0xf]
          %v2512 = vld [vmem:[%s2291 + $0xac] sm:$0xf]
          %v2513 = vld [vmem:[%s2291 + $0xb0] sm:$0x1]
          %v2514 = vld [vmem:[%s2291 + $0xb4] sm:$0xf]
          %v2515 = vld [vmem:[%s2291 + $0xb8] sm:$0xf]
          %v2516 = vld [vmem:[%s2291 + $0xbc] sm:$0x1]
          %v2518 = vshrl.u32 %v2469, 16
          %v2520 = vrot.slane %v2518, 4
          %v2521 = vshll.u32 %v2469, 16
          %v2523 = vrot.slane %v2521, 5
          %v2524 = vor.u32 %v2520, %v2523
          %v2525 = vrot.slane %v2524, 4
          %v2527 = vshll.u32 %v2470, 16
          %v2529 = vrot.slane %v2527, 5
          %v2530 = vsel %vm425, %v2525, %v2529
          %v2531 = vshrl.u32 %v2470, 16
          %v2533 = vrot.slane %v2531, 4
          %v2534 = vor.u32 %v2533, %v2529
          %v2535 = vrot.slane %v2534, 4
          %v2537 = vshll.u32 %v2471, 16
          %v2539 = vrot.slane %v2537, 5
          %v2540 = vsel %vm425, %v2535, %v2539
          %v2542 = vshrl.u32 %v2472, 16
          %v2544 = vrot.slane %v2542, 4
          %v2545 = vshll.u32 %v2472, 16
          %v2547 = vrot.slane %v2545, 5
          %v2548 = vor.u32 %v2544, %v2547
          %v2549 = vrot.slane %v2548, 4
          %v2551 = vshll.u32 %v2473, 16
          %v2553 = vrot.slane %v2551, 5
          %v2554 = vsel %vm425, %v2549, %v2553
          %v2555 = vshrl.u32 %v2473, 16
          %v2557 = vrot.slane %v2555, 4
          %v2558 = vor.u32 %v2557, %v2553
          %v2559 = vrot.slane %v2558, 4
          %v2561 = vshll.u32 %v2474, 16
          %v2563 = vrot.slane %v2561, 5
          %v2564 = vsel %vm425, %v2559, %v2563
          %v2566 = vshrl.u32 %v2475, 16
          %v2568 = vrot.slane %v2566, 4
          %v2569 = vshll.u32 %v2475, 16
          %v2571 = vrot.slane %v2569, 5
          %v2572 = vor.u32 %v2568, %v2571
          %v2573 = vrot.slane %v2572, 4
          %v2575 = vshll.u32 %v2476, 16
          %v2577 = vrot.slane %v2575, 5
          %v2578 = vsel %vm425, %v2573, %v2577
          %v2579 = vshrl.u32 %v2476, 16
          %v2581 = vrot.slane %v2579, 4
          %v2582 = vor.u32 %v2581, %v2577
          %v2583 = vrot.slane %v2582, 4
          %v2585 = vshll.u32 %v2477, 16
          %v2587 = vrot.slane %v2585, 5
          %v2588 = vsel %vm425, %v2583, %v2587
          %v2590 = vshrl.u32 %v2478, 16
          %v2592 = vrot.slane %v2590, 4
          %v2593 = vshll.u32 %v2478, 16
          %v2595 = vrot.slane %v2593, 5
          %v2596 = vor.u32 %v2592, %v2595
          %v2597 = vrot.slane %v2596, 4
          %v2599 = vshll.u32 %v2479, 16
          %v2601 = vrot.slane %v2599, 5
          %v2602 = vsel %vm425, %v2597, %v2601
          %v2603 = vshrl.u32 %v2479, 16
          %v2605 = vrot.slane %v2603, 4
          %v2606 = vor.u32 %v2605, %v2601
          %v2607 = vrot.slane %v2606, 4
          %v2609 = vshll.u32 %v2480, 16
          %v2611 = vrot.slane %v2609, 5
          %v2612 = vsel %vm425, %v2607, %v2611
          %v2614 = vshrl.u32 %v2481, 16
          %v2616 = vrot.slane %v2614, 4
          %v2617 = vshll.u32 %v2481, 16
          %v2619 = vrot.slane %v2617, 5
          %v2620 = vor.u32 %v2616, %v2619
          %v2621 = vrot.slane %v2620, 4
          %v2623 = vshll.u32 %v2482, 16
          %v2625 = vrot.slane %v2623, 5
          %v2626 = vsel %vm425, %v2621, %v2625
          %v2627 = vshrl.u32 %v2482, 16
          %v2629 = vrot.slane %v2627, 4
          %v2630 = vor.u32 %v2629, %v2625
          %v2631 = vrot.slane %v2630, 4
          %v2633 = vshll.u32 %v2483, 16
          %v2635 = vrot.slane %v2633, 5
          %v2636 = vsel %vm425, %v2631, %v2635
          %v2638 = vshrl.u32 %v2484, 16
          %v2640 = vrot.slane %v2638, 4
          %v2641 = vshll.u32 %v2484, 16
          %v2643 = vrot.slane %v2641, 5
          %v2644 = vor.u32 %v2640, %v2643
          %v2645 = vrot.slane %v2644, 4
          %v2647 = vshll.u32 %v2485, 16
          %v2649 = vrot.slane %v2647, 5
          %v2650 = vsel %vm425, %v2645, %v2649
          %v2651 = vshrl.u32 %v2485, 16
          %v2653 = vrot.slane %v2651, 4
          %v2654 = vor.u32 %v2653, %v2649
          %v2655 = vrot.slane %v2654, 4
          %v2657 = vshll.u32 %v2486, 16
          %v2659 = vrot.slane %v2657, 5
          %v2660 = vsel %vm425, %v2655, %v2659
          %v2662 = vshrl.u32 %v2487, 16
          %v2664 = vrot.slane %v2662, 4
          %v2665 = vshll.u32 %v2487, 16
          %v2667 = vrot.slane %v2665, 5
          %v2668 = vor.u32 %v2664, %v2667
          %v2669 = vrot.slane %v2668, 4
          %v2671 = vshll.u32 %v2488, 16
          %v2673 = vrot.slane %v2671, 5
          %v2674 = vsel %vm425, %v2669, %v2673
          %v2675 = vshrl.u32 %v2488, 16
          %v2677 = vrot.slane %v2675, 4
          %v2678 = vor.u32 %v2677, %v2673
          %v2679 = vrot.slane %v2678, 4
          %v2681 = vshll.u32 %v2489, 16
          %v2683 = vrot.slane %v2681, 5
          %v2684 = vsel %vm425, %v2679, %v2683
          %v2686 = vshrl.u32 %v2490, 16
          %v2688 = vrot.slane %v2686, 4
          %v2689 = vshll.u32 %v2490, 16
          %v2691 = vrot.slane %v2689, 5
          %v2692 = vor.u32 %v2688, %v2691
          %v2693 = vrot.slane %v2692, 4
          %v2695 = vshll.u32 %v2491, 16
          %v2697 = vrot.slane %v2695, 5
          %v2698 = vsel %vm425, %v2693, %v2697
          %v2699 = vshrl.u32 %v2491, 16
          %v2701 = vrot.slane %v2699, 4
          %v2702 = vor.u32 %v2701, %v2697
          %v2703 = vrot.slane %v2702, 4
          %v2705 = vshll.u32 %v2492, 16
          %v2707 = vrot.slane %v2705, 5
          %v2708 = vsel %vm425, %v2703, %v2707
          %v2710 = vshrl.u32 %v2493, 16
          %v2712 = vrot.slane %v2710, 4
          %v2713 = vshll.u32 %v2493, 16
          %v2715 = vrot.slane %v2713, 5
          %v2716 = vor.u32 %v2712, %v2715
          %v2717 = vrot.slane %v2716, 4
          %v2719 = vshll.u32 %v2494, 16
          %v2721 = vrot.slane %v2719, 5
          %v2722 = vsel %vm425, %v2717, %v2721
          %v2723 = vshrl.u32 %v2494, 16
          %v2725 = vrot.slane %v2723, 4
          %v2726 = vor.u32 %v2725, %v2721
          %v2727 = vrot.slane %v2726, 4
          %v2729 = vshll.u32 %v2495, 16
          %v2731 = vrot.slane %v2729, 5
          %v2732 = vsel %vm425, %v2727, %v2731
          %v2734 = vshrl.u32 %v2496, 16
          %v2736 = vrot.slane %v2734, 4
          %v2737 = vshll.u32 %v2496, 16
          %v2739 = vrot.slane %v2737, 5
          %v2740 = vor.u32 %v2736, %v2739
          %v2741 = vrot.slane %v2740, 4
          %v2743 = vshll.u32 %v2497, 16
          %v2745 = vrot.slane %v2743, 5
          %v2746 = vsel %vm425, %v2741, %v2745
          %v2747 = vshrl.u32 %v2497, 16
          %v2749 = vrot.slane %v2747, 4
          %v2750 = vor.u32 %v2749, %v2745
          %v2751 = vrot.slane %v2750, 4
          %v2753 = vshll.u32 %v2498, 16
          %v2755 = vrot.slane %v2753, 5
          %v2756 = vsel %vm425, %v2751, %v2755
          %v2758 = vshrl.u32 %v2499, 16
          %v2760 = vrot.slane %v2758, 4
          %v2761 = vshll.u32 %v2499, 16
          %v2763 = vrot.slane %v2761, 5
          %v2764 = vor.u32 %v2760, %v2763
          %v2765 = vrot.slane %v2764, 4
          %v2767 = vshll.u32 %v2500, 16
          %v2769 = vrot.slane %v2767, 5
          %v2770 = vsel %vm425, %v2765, %v2769
          %v2771 = vshrl.u32 %v2500, 16
          %v2773 = vrot.slane %v2771, 4
          %v2774 = vor.u32 %v2773, %v2769
          %v2775 = vrot.slane %v2774, 4
          %v2777 = vshll.u32 %v2501, 16
          %v2779 = vrot.slane %v2777, 5
          %v2780 = vsel %vm425, %v2775, %v2779
          %v2782 = vshrl.u32 %v2502, 16
          %v2784 = vrot.slane %v2782, 4
          %v2785 = vshll.u32 %v2502, 16
          %v2787 = vrot.slane %v2785, 5
          %v2788 = vor.u32 %v2784, %v2787
          %v2789 = vrot.slane %v2788, 4
          %v2791 = vshll.u32 %v2503, 16
          %v2793 = vrot.slane %v2791, 5
          %v2794 = vsel %vm425, %v2789, %v2793
          %v2795 = vshrl.u32 %v2503, 16
          %v2797 = vrot.slane %v2795, 4
          %v2798 = vor.u32 %v2797, %v2793
          %v2799 = vrot.slane %v2798, 4
          %v2801 = vshll.u32 %v2504, 16
          %v2803 = vrot.slane %v2801, 5
          %v2804 = vsel %vm425, %v2799, %v2803
          %v2806 = vshrl.u32 %v2505, 16
          %v2808 = vrot.slane %v2806, 4
          %v2809 = vshll.u32 %v2505, 16
          %v2811 = vrot.slane %v2809, 5
          %v2812 = vor.u32 %v2808, %v2811
          %v2813 = vrot.slane %v2812, 4
          %v2815 = vshll.u32 %v2506, 16
          %v2817 = vrot.slane %v2815, 5
          %v2818 = vsel %vm425, %v2813, %v2817
          %v2819 = vshrl.u32 %v2506, 16
          %v2821 = vrot.slane %v2819, 4
          %v2822 = vor.u32 %v2821, %v2817
          %v2823 = vrot.slane %v2822, 4
          %v2825 = vshll.u32 %v2507, 16
          %v2827 = vrot.slane %v2825, 5
          %v2828 = vsel %vm425, %v2823, %v2827
          %v2830 = vshrl.u32 %v2508, 16
          %v2832 = vrot.slane %v2830, 4
          %v2833 = vshll.u32 %v2508, 16
          %v2835 = vrot.slane %v2833, 5
          %v2836 = vor.u32 %v2832, %v2835
          %v2837 = vrot.slane %v2836, 4
          %v2839 = vshll.u32 %v2509, 16
          %v2841 = vrot.slane %v2839, 5
          %v2842 = vsel %vm425, %v2837, %v2841
          %v2843 = vshrl.u32 %v2509, 16
          %v2845 = vrot.slane %v2843, 4
          %v2846 = vor.u32 %v2845, %v2841
          %v2847 = vrot.slane %v2846, 4
          %v2849 = vshll.u32 %v2510, 16
          %v2851 = vrot.slane %v2849, 5
          %v2852 = vsel %vm425, %v2847, %v2851
          %v2854 = vshrl.u32 %v2511, 16
          %v2856 = vrot.slane %v2854, 4
          %v2857 = vshll.u32 %v2511, 16
          %v2859 = vrot.slane %v2857, 5
          %v2860 = vor.u32 %v2856, %v2859
          %v2861 = vrot.slane %v2860, 4
          %v2863 = vshll.u32 %v2512, 16
          %v2865 = vrot.slane %v2863, 5
          %v2866 = vsel %vm425, %v2861, %v2865
          %v2867 = vshrl.u32 %v2512, 16
          %v2869 = vrot.slane %v2867, 4
          %v2870 = vor.u32 %v2869, %v2865
          %v2871 = vrot.slane %v2870, 4
          %v2873 = vshll.u32 %v2513, 16
          %v2875 = vrot.slane %v2873, 5
          %v2876 = vsel %vm425, %v2871, %v2875
          %v2878 = vshrl.u32 %v2514, 16
          %v2880 = vrot.slane %v2878, 4
          %v2881 = vshll.u32 %v2514, 16
          %v2883 = vrot.slane %v2881, 5
          %v2884 = vor.u32 %v2880, %v2883
          %v2885 = vrot.slane %v2884, 4
          %v2887 = vshll.u32 %v2515, 16
          %v2889 = vrot.slane %v2887, 5
          %v2890 = vsel %vm425, %v2885, %v2889
          %v2891 = vshrl.u32 %v2515, 16
          %v2893 = vrot.slane %v2891, 4
          %v2894 = vor.u32 %v2893, %v2889
          %v2895 = vrot.slane %v2894, 4
          %v2897 = vshll.u32 %v2516, 16
          %v2899 = vrot.slane %v2897, 5
          %v2900 = vsel %vm425, %v2895, %v2899
          %v2901 = vunpack.c.l.b16 %v2530
          %v2902 = vunpack.c.l.b16 %v2540
          %v2903 = vunpack.c.l.b16 %v2554
          %v2904 = vunpack.c.l.b16 %v2564
          %v2905 = vunpack.c.l.b16 %v2578
          %v2906 = vunpack.c.l.b16 %v2588
          %v2907 = vunpack.c.l.b16 %v2602
          %v2908 = vunpack.c.l.b16 %v2612
          %v2909 = vunpack.c.l.b16 %v2626
          %v2910 = vunpack.c.l.b16 %v2636
          %v2911 = vunpack.c.l.b16 %v2650
          %v2912 = vunpack.c.l.b16 %v2660
          %v2913 = vunpack.c.l.b16 %v2674
          %v2914 = vunpack.c.l.b16 %v2684
          %v2915 = vunpack.c.l.b16 %v2698
          %v2916 = vunpack.c.l.b16 %v2708
          %v2917 = vunpack.c.l.b16 %v2722
          %v2918 = vunpack.c.l.b16 %v2732
          %v2919 = vunpack.c.l.b16 %v2746
          %v2920 = vunpack.c.l.b16 %v2756
          %v2921 = vunpack.c.l.b16 %v2770
          %v2922 = vunpack.c.l.b16 %v2780
          %v2923 = vunpack.c.l.b16 %v2794
          %v2924 = vunpack.c.l.b16 %v2804
          %v2925 = vunpack.c.l.b16 %v2818
          %v2926 = vunpack.c.l.b16 %v2828
          %v2927 = vunpack.c.l.b16 %v2842
          %v2928 = vunpack.c.l.b16 %v2852
          %v2929 = vunpack.c.l.b16 %v2866
          %v2930 = vunpack.c.l.b16 %v2876
          %v2931 = vunpack.c.l.b16 %v2890
          %v2932 = vunpack.c.l.b16 %v2900
          %v2933 = vpack.c.b16 %v2902, %v2901
          %v2934 = vpack.c.b16 %v2904, %v2903
          %v2935 = vpack.c.b16 %v2906, %v2905
          %v2936 = vpack.c.b16 %v2908, %v2907
          %v2937 = vpack.c.b16 %v2910, %v2909
          %v2938 = vpack.c.b16 %v2912, %v2911
          %v2939 = vpack.c.b16 %v2914, %v2913
          %v2940 = vpack.c.b16 %v2916, %v2915
          %v2941 = vpack.c.b16 %v2918, %v2917
          %v2942 = vpack.c.b16 %v2920, %v2919
          %v2943 = vpack.c.b16 %v2922, %v2921
          %v2944 = vpack.c.b16 %v2924, %v2923
          %v2945 = vpack.c.b16 %v2926, %v2925
          %v2946 = vpack.c.b16 %v2928, %v2927
          %v2947 = vpack.c.b16 %v2930, %v2929
          %v2948 = vpack.c.b16 %v2932, %v2931
          %2949 = vrot.lane.b32.xlu0 %v2933, 28
          %v2950 = vpop.permute.xlu0 %2949
          %2951 = vrot.lane.b32.xlu0 %v2934, 28
          %v2952 = vpop.permute.xlu0 %2951
          %2953 = vrot.lane.b32.xlu0 %v2935, 28
          %v2954 = vpop.permute.xlu0 %2953
          %2955 = vrot.lane.b32.xlu0 %v2936, 28
          %v2956 = vpop.permute.xlu0 %2955
          %2957 = vrot.lane.b32.xlu0 %v2937, 28
          %v2958 = vpop.permute.xlu0 %2957
          %2959 = vrot.lane.b32.xlu0 %v2938, 28
          %v2960 = vpop.permute.xlu0 %2959
          %2961 = vrot.lane.b32.xlu0 %v2939, 28
          %v2962 = vpop.permute.xlu0 %2961
          %2963 = vrot.lane.b32.xlu0 %v2940, 28
          %v2964 = vpop.permute.xlu0 %2963
          %2965 = vrot.lane.b32.xlu0 %v2941, 28
          %v2966 = vpop.permute.xlu0 %2965
          %2967 = vrot.lane.b32.xlu0 %v2942, 28
          %v2968 = vpop.permute.xlu0 %2967
          %2969 = vrot.lane.b32.xlu0 %v2943, 28
          %v2970 = vpop.permute.xlu0 %2969
          %2971 = vrot.lane.b32.xlu0 %v2944, 28
          %v2972 = vpop.permute.xlu0 %2971
          %2973 = vrot.lane.b32.xlu0 %v2945, 28
          %v2974 = vpop.permute.xlu0 %2973
          %2975 = vrot.lane.b32.xlu0 %v2946, 28
          %v2976 = vpop.permute.xlu0 %2975
          %2977 = vrot.lane.b32.xlu0 %v2947, 28
          %v2978 = vpop.permute.xlu0 %2977
          %2979 = vrot.lane.b32.xlu0 %v2948, 28
          %v2980 = vpop.permute.xlu0 %2979
          %vm2997 = vcmask 261344
          %2998 = vst.msk [vmem:[#allocation2] sm:$0xff] %vm2997, %v2950
          %2999 = vst.msk [vmem:[#allocation2 + $0x8] sm:$0xff] %vm2997, %v2952
          %3000 = vst.msk [vmem:[#allocation2 + $0x10] sm:$0xff] %vm2997, %v2954
          %3001 = vst.msk [vmem:[#allocation2 + $0x18] sm:$0xff] %vm2997, %v2956
          %3002 = vst.msk [vmem:[#allocation2 + $0x20] sm:$0xff] %vm2997, %v2958
          %3003 = vst.msk [vmem:[#allocation2 + $0x28] sm:$0xff] %vm2997, %v2960
          %3004 = vst.msk [vmem:[#allocation2 + $0x30] sm:$0xff] %vm2997, %v2962
          %3005 = vst.msk [vmem:[#allocation2 + $0x38] sm:$0xff] %vm2997, %v2964
          %3006 = vst.msk [vmem:[#allocation2 + $0x40] sm:$0xff] %vm2997, %v2966
          %3007 = vst.msk [vmem:[#allocation2 + $0x48] sm:$0xff] %vm2997, %v2968
          %3008 = vst.msk [vmem:[#allocation2 + $0x50] sm:$0xff] %vm2997, %v2970
          %3009 = vst.msk [vmem:[#allocation2 + $0x58] sm:$0xff] %vm2997, %v2972
          %3010 = vst.msk [vmem:[#allocation2 + $0x60] sm:$0xff] %vm2997, %v2974
          %3011 = vst.msk [vmem:[#allocation2 + $0x68] sm:$0xff] %vm2997, %v2976
          %3012 = vst.msk [vmem:[#allocation2 + $0x70] sm:$0xff] %vm2997, %v2978
          %3013 = vst.msk [vmem:[#allocation2 + $0x78] sm:$0xff] %vm2997, %v2980
          %v3014 = vld [vmem:[%s2291] sm:$0xe]
          %v3015 = vld [vmem:[%s2291 + $0x4] sm:$0xf]
          %v3016 = vld [vmem:[%s2291 + $0x8] sm:$0x1]
          %v3017 = vld [vmem:[%s2291 + $0xc] sm:$0xe]
          %v3018 = vld [vmem:[%s2291 + $0x10] sm:$0xf]
          %v3019 = vld [vmem:[%s2291 + $0x14] sm:$0x1]
          %v3020 = vld [vmem:[%s2291 + $0x18] sm:$0xe]
          %v3021 = vld [vmem:[%s2291 + $0x1c] sm:$0xf]
          %v3022 = vld [vmem:[%s2291 + $0x20] sm:$0x1]
          %v3023 = vld [vmem:[%s2291 + $0x24] sm:$0xe]
          %v3024 = vld [vmem:[%s2291 + $0x28] sm:$0xf]
          %v3025 = vld [vmem:[%s2291 + $0x2c] sm:$0x1]
          %v3026 = vld [vmem:[%s2291 + $0x30] sm:$0xe]
          %v3027 = vld [vmem:[%s2291 + $0x34] sm:$0xf]
          %v3028 = vld [vmem:[%s2291 + $0x38] sm:$0x1]
          %v3029 = vld [vmem:[%s2291 + $0x3c] sm:$0xe]
          %v3030 = vld [vmem:[%s2291 + $0x40] sm:$0xf]
          %v3031 = vld [vmem:[%s2291 + $0x44] sm:$0x1]
          %v3032 = vld [vmem:[%s2291 + $0x48] sm:$0xe]
          %v3033 = vld [vmem:[%s2291 + $0x4c] sm:$0xf]
          %v3034 = vld [vmem:[%s2291 + $0x50] sm:$0x1]
          %v3035 = vld [vmem:[%s2291 + $0x54] sm:$0xe]
          %v3036 = vld [vmem:[%s2291 + $0x58] sm:$0xf]
          %v3037 = vld [vmem:[%s2291 + $0x5c] sm:$0x1]
          %v3038 = vld [vmem:[%s2291 + $0x60] sm:$0xe]
          %v3039 = vld [vmem:[%s2291 + $0x64] sm:$0xf]
          %v3040 = vld [vmem:[%s2291 + $0x68] sm:$0x1]
          %v3041 = vld [vmem:[%s2291 + $0x6c] sm:$0xe]
          %v3042 = vld [vmem:[%s2291 + $0x70] sm:$0xf]
          %v3043 = vld [vmem:[%s2291 + $0x74] sm:$0x1]
          %v3044 = vld [vmem:[%s2291 + $0x78] sm:$0xe]
          %v3045 = vld [vmem:[%s2291 + $0x7c] sm:$0xf]
          %v3046 = vld [vmem:[%s2291 + $0x80] sm:$0x1]
          %v3047 = vld [vmem:[%s2291 + $0x84] sm:$0xe]
          %v3048 = vld [vmem:[%s2291 + $0x88] sm:$0xf]
          %v3049 = vld [vmem:[%s2291 + $0x8c] sm:$0x1]
          %v3050 = vld [vmem:[%s2291 + $0x90] sm:$0xe]
          %v3051 = vld [vmem:[%s2291 + $0x94] sm:$0xf]
          %v3052 = vld [vmem:[%s2291 + $0x98] sm:$0x1]
          %v3053 = vld [vmem:[%s2291 + $0x9c] sm:$0xe]
          %v3054 = vld [vmem:[%s2291 + $0xa0] sm:$0xf]
          %v3055 = vld [vmem:[%s2291 + $0xa4] sm:$0x1]
          %v3056 = vld [vmem:[%s2291 + $0xa8] sm:$0xe]
          %v3057 = vld [vmem:[%s2291 + $0xac] sm:$0xf]
          %v3058 = vld [vmem:[%s2291 + $0xb0] sm:$0x1]
          %v3059 = vld [vmem:[%s2291 + $0xb4] sm:$0xe]
          %v3060 = vld [vmem:[%s2291 + $0xb8] sm:$0xf]
          %v3061 = vld [vmem:[%s2291 + $0xbc] sm:$0x1]
          %v3110 = vrot.slane %v3014, 5
          %v3111 = vrot.slane %v3110, 4
          %v3112 = vrot.slane %v3015, 5
          %v3113 = vsel %vm1021, %v3111, %v3112
          %v3114 = vrot.slane %v3112, 4
          %v3115 = vrot.slane %v3016, 5
          %v3116 = vsel %vm1021, %v3114, %v3115
          %v3117 = vrot.slane %v3017, 5
          %v3118 = vrot.slane %v3117, 4
          %v3119 = vrot.slane %v3018, 5
          %v3120 = vsel %vm1021, %v3118, %v3119
          %v3121 = vrot.slane %v3119, 4
          %v3122 = vrot.slane %v3019, 5
          %v3123 = vsel %vm1021, %v3121, %v3122
          %v3124 = vrot.slane %v3020, 5
          %v3125 = vrot.slane %v3124, 4
          %v3126 = vrot.slane %v3021, 5
          %v3127 = vsel %vm1021, %v3125, %v3126
          %v3128 = vrot.slane %v3126, 4
          %v3129 = vrot.slane %v3022, 5
          %v3130 = vsel %vm1021, %v3128, %v3129
          %v3131 = vrot.slane %v3023, 5
          %v3132 = vrot.slane %v3131, 4
          %v3133 = vrot.slane %v3024, 5
          %v3134 = vsel %vm1021, %v3132, %v3133
          %v3135 = vrot.slane %v3133, 4
          %v3136 = vrot.slane %v3025, 5
          %v3137 = vsel %vm1021, %v3135, %v3136
          %v3138 = vrot.slane %v3026, 5
          %v3139 = vrot.slane %v3138, 4
          %v3140 = vrot.slane %v3027, 5
          %v3141 = vsel %vm1021, %v3139, %v3140
          %v3142 = vrot.slane %v3140, 4
          %v3143 = vrot.slane %v3028, 5
          %v3144 = vsel %vm1021, %v3142, %v3143
          %v3145 = vrot.slane %v3029, 5
          %v3146 = vrot.slane %v3145, 4
          %v3147 = vrot.slane %v3030, 5
          %v3148 = vsel %vm1021, %v3146, %v3147
          %v3149 = vrot.slane %v3147, 4
          %v3150 = vrot.slane %v3031, 5
          %v3151 = vsel %vm1021, %v3149, %v3150
          %v3152 = vrot.slane %v3032, 5
          %v3153 = vrot.slane %v3152, 4
          %v3154 = vrot.slane %v3033, 5
          %v3155 = vsel %vm1021, %v3153, %v3154
          %v3156 = vrot.slane %v3154, 4
          %v3157 = vrot.slane %v3034, 5
          %v3158 = vsel %vm1021, %v3156, %v3157
          %v3159 = vrot.slane %v3035, 5
          %v3160 = vrot.slane %v3159, 4
          %v3161 = vrot.slane %v3036, 5
          %v3162 = vsel %vm1021, %v3160, %v3161
          %v3163 = vrot.slane %v3161, 4
          %v3164 = vrot.slane %v3037, 5
          %v3165 = vsel %vm1021, %v3163, %v3164
          %v3166 = vrot.slane %v3038, 5
          %v3167 = vrot.slane %v3166, 4
          %v3168 = vrot.slane %v3039, 5
          %v3169 = vsel %vm1021, %v3167, %v3168
          %v3170 = vrot.slane %v3168, 4
          %v3171 = vrot.slane %v3040, 5
          %v3172 = vsel %vm1021, %v3170, %v3171
          %v3173 = vrot.slane %v3041, 5
          %v3174 = vrot.slane %v3173, 4
          %v3175 = vrot.slane %v3042, 5
          %v3176 = vsel %vm1021, %v3174, %v3175
          %v3177 = vrot.slane %v3175, 4
          %v3178 = vrot.slane %v3043, 5
          %v3179 = vsel %vm1021, %v3177, %v3178
          %v3180 = vrot.slane %v3044, 5
          %v3181 = vrot.slane %v3180, 4
          %v3182 = vrot.slane %v3045, 5
          %v3183 = vsel %vm1021, %v3181, %v3182
          %v3184 = vrot.slane %v3182, 4
          %v3185 = vrot.slane %v3046, 5
          %v3186 = vsel %vm1021, %v3184, %v3185
          %v3187 = vrot.slane %v3047, 5
          %v3188 = vrot.slane %v3187, 4
          %v3189 = vrot.slane %v3048, 5
          %v3190 = vsel %vm1021, %v3188, %v3189
          %v3191 = vrot.slane %v3189, 4
          %v3192 = vrot.slane %v3049, 5
          %v3193 = vsel %vm1021, %v3191, %v3192
          %v3194 = vrot.slane %v3050, 5
          %v3195 = vrot.slane %v3194, 4
          %v3196 = vrot.slane %v3051, 5
          %v3197 = vsel %vm1021, %v3195, %v3196
          %v3198 = vrot.slane %v3196, 4
          %v3199 = vrot.slane %v3052, 5
          %v3200 = vsel %vm1021, %v3198, %v3199
          %v3201 = vrot.slane %v3053, 5
          %v3202 = vrot.slane %v3201, 4
          %v3203 = vrot.slane %v3054, 5
          %v3204 = vsel %vm1021, %v3202, %v3203
          %v3205 = vrot.slane %v3203, 4
          %v3206 = vrot.slane %v3055, 5
          %v3207 = vsel %vm1021, %v3205, %v3206
          %v3208 = vrot.slane %v3056, 5
          %v3209 = vrot.slane %v3208, 4
          %v3210 = vrot.slane %v3057, 5
          %v3211 = vsel %vm1021, %v3209, %v3210
          %v3212 = vrot.slane %v3210, 4
          %v3213 = vrot.slane %v3058, 5
          %v3214 = vsel %vm1021, %v3212, %v3213
          %v3215 = vrot.slane %v3059, 5
          %v3216 = vrot.slane %v3215, 4
          %v3217 = vrot.slane %v3060, 5
          %v3218 = vsel %vm1021, %v3216, %v3217
          %v3219 = vrot.slane %v3217, 4
          %v3220 = vrot.slane %v3061, 5
          %v3221 = vsel %vm1021, %v3219, %v3220
          %v3222 = vunpack.c.l.b16 %v3113
          %v3223 = vunpack.c.l.b16 %v3116
          %v3224 = vunpack.c.l.b16 %v3120
          %v3225 = vunpack.c.l.b16 %v3123
          %v3226 = vunpack.c.l.b16 %v3127
          %v3227 = vunpack.c.l.b16 %v3130
          %v3228 = vunpack.c.l.b16 %v3134
          %v3229 = vunpack.c.l.b16 %v3137
          %v3230 = vunpack.c.l.b16 %v3141
          %v3231 = vunpack.c.l.b16 %v3144
          %v3232 = vunpack.c.l.b16 %v3148
          %v3233 = vunpack.c.l.b16 %v3151
          %v3234 = vunpack.c.l.b16 %v3155
          %v3235 = vunpack.c.l.b16 %v3158
          %v3236 = vunpack.c.l.b16 %v3162
          %v3237 = vunpack.c.l.b16 %v3165
          %v3238 = vunpack.c.l.b16 %v3169
          %v3239 = vunpack.c.l.b16 %v3172
          %v3240 = vunpack.c.l.b16 %v3176
          %v3241 = vunpack.c.l.b16 %v3179
          %v3242 = vunpack.c.l.b16 %v3183
          %v3243 = vunpack.c.l.b16 %v3186
          %v3244 = vunpack.c.l.b16 %v3190
          %v3245 = vunpack.c.l.b16 %v3193
          %v3246 = vunpack.c.l.b16 %v3197
          %v3247 = vunpack.c.l.b16 %v3200
          %v3248 = vunpack.c.l.b16 %v3204
          %v3249 = vunpack.c.l.b16 %v3207
          %v3250 = vunpack.c.l.b16 %v3211
          %v3251 = vunpack.c.l.b16 %v3214
          %v3252 = vunpack.c.l.b16 %v3218
          %v3253 = vunpack.c.l.b16 %v3221
          %v3254 = vpack.c.b16 %v3223, %v3222
          %v3255 = vpack.c.b16 %v3225, %v3224
          %v3256 = vpack.c.b16 %v3227, %v3226
          %v3257 = vpack.c.b16 %v3229, %v3228
          %v3258 = vpack.c.b16 %v3231, %v3230
          %v3259 = vpack.c.b16 %v3233, %v3232
          %v3260 = vpack.c.b16 %v3235, %v3234
          %v3261 = vpack.c.b16 %v3237, %v3236
          %v3262 = vpack.c.b16 %v3239, %v3238
          %v3263 = vpack.c.b16 %v3241, %v3240
          %v3264 = vpack.c.b16 %v3243, %v3242
          %v3265 = vpack.c.b16 %v3245, %v3244
          %v3266 = vpack.c.b16 %v3247, %v3246
          %v3267 = vpack.c.b16 %v3249, %v3248
          %v3268 = vpack.c.b16 %v3251, %v3250
          %v3269 = vpack.c.b16 %v3253, %v3252
          %3270 = vrot.lane.b32.xlu0 %v3254, 32
          %v3271 = vpop.permute.xlu0 %3270
          %3272 = vrot.lane.b32.xlu0 %v3255, 32
          %v3273 = vpop.permute.xlu0 %3272
          %3274 = vrot.lane.b32.xlu0 %v3256, 32
          %v3275 = vpop.permute.xlu0 %3274
          %3276 = vrot.lane.b32.xlu0 %v3257, 32
          %v3277 = vpop.permute.xlu0 %3276
          %3278 = vrot.lane.b32.xlu0 %v3258, 32
          %v3279 = vpop.permute.xlu0 %3278
          %3280 = vrot.lane.b32.xlu0 %v3259, 32
          %v3281 = vpop.permute.xlu0 %3280
          %3282 = vrot.lane.b32.xlu0 %v3260, 32
          %v3283 = vpop.permute.xlu0 %3282
          %3284 = vrot.lane.b32.xlu0 %v3261, 32
          %v3285 = vpop.permute.xlu0 %3284
          %3286 = vrot.lane.b32.xlu0 %v3262, 32
          %v3287 = vpop.permute.xlu0 %3286
          %3288 = vrot.lane.b32.xlu0 %v3263, 32
          %v3289 = vpop.permute.xlu0 %3288
          %3290 = vrot.lane.b32.xlu0 %v3264, 32
          %v3291 = vpop.permute.xlu0 %3290
          %3292 = vrot.lane.b32.xlu0 %v3265, 32
          %v3293 = vpop.permute.xlu0 %3292
          %3294 = vrot.lane.b32.xlu0 %v3266, 32
          %v3295 = vpop.permute.xlu0 %3294
          %3296 = vrot.lane.b32.xlu0 %v3267, 32
          %v3297 = vpop.permute.xlu0 %3296
          %3298 = vrot.lane.b32.xlu0 %v3268, 32
          %v3299 = vpop.permute.xlu0 %3298
          %3300 = vrot.lane.b32.xlu0 %v3269, 32
          %v3301 = vpop.permute.xlu0 %3300
          %vm3318 = vcmask 294144
          %3319 = vst.msk [vmem:[#allocation2] sm:$0xff] %vm3318, %v3271
          %3320 = vst.msk [vmem:[#allocation2 + $0x8] sm:$0xff] %vm3318, %v3273
          %3321 = vst.msk [vmem:[#allocation2 + $0x10] sm:$0xff] %vm3318, %v3275
          %3322 = vst.msk [vmem:[#allocation2 + $0x18] sm:$0xff] %vm3318, %v3277
          %3323 = vst.msk [vmem:[#allocation2 + $0x20] sm:$0xff] %vm3318, %v3279
          %3324 = vst.msk [vmem:[#allocation2 + $0x28] sm:$0xff] %vm3318, %v3281
          %3325 = vst.msk [vmem:[#allocation2 + $0x30] sm:$0xff] %vm3318, %v3283
          %3326 = vst.msk [vmem:[#allocation2 + $0x38] sm:$0xff] %vm3318, %v3285
          %3327 = vst.msk [vmem:[#allocation2 + $0x40] sm:$0xff] %vm3318, %v3287
          %3328 = vst.msk [vmem:[#allocation2 + $0x48] sm:$0xff] %vm3318, %v3289
          %3329 = vst.msk [vmem:[#allocation2 + $0x50] sm:$0xff] %vm3318, %v3291
          %3330 = vst.msk [vmem:[#allocation2 + $0x58] sm:$0xff] %vm3318, %v3293
          %3331 = vst.msk [vmem:[#allocation2 + $0x60] sm:$0xff] %vm3318, %v3295
          %3332 = vst.msk [vmem:[#allocation2 + $0x68] sm:$0xff] %vm3318, %v3297
          %3333 = vst.msk [vmem:[#allocation2 + $0x70] sm:$0xff] %vm3318, %v3299
          %3334 = vst.msk [vmem:[#allocation2 + $0x78] sm:$0xff] %vm3318, %v3301
        $region32: #{tpu_custom_call.1} parent=27 // pred_fallthru
          _
        %v3335 = vld [vmem:[#allocation2] sm:$0xff]
        %v3336 = vld [vmem:[#allocation2 + $0x8] sm:$0xff]
        %v3337 = vld [vmem:[#allocation2 + $0x10] sm:$0xff]
        %v3338 = vld [vmem:[#allocation2 + $0x18] sm:$0xff]
        %v3339 = vld [vmem:[#allocation2 + $0x20] sm:$0xff]
        %v3340 = vld [vmem:[#allocation2 + $0x28] sm:$0xff]
        %v3341 = vld [vmem:[#allocation2 + $0x30] sm:$0xff]
        %v3342 = vld [vmem:[#allocation2 + $0x38] sm:$0xff]
        %v3343 = vld [vmem:[#allocation2 + $0x40] sm:$0xff]
        %v3344 = vld [vmem:[#allocation2 + $0x48] sm:$0xff]
        %v3345 = vld [vmem:[#allocation2 + $0x50] sm:$0xff]
        %v3346 = vld [vmem:[#allocation2 + $0x58] sm:$0xff]
        %v3347 = vld [vmem:[#allocation2 + $0x60] sm:$0xff]
        %v3348 = vld [vmem:[#allocation2 + $0x68] sm:$0xff]
        %v3349 = vld [vmem:[#allocation2 + $0x70] sm:$0xff]
        %v3350 = vld [vmem:[#allocation2 + $0x78] sm:$0xff]
        %v3351 = vld [vmem:[%s223] sm:$0xf]
        %v3352 = vld [vmem:[%s223 + $0x4] sm:$0xf]
        %v3353 = vld [vmem:[%s223 + $0x8] sm:$0xf]
        %v3354 = vld [vmem:[%s223 + $0xc] sm:$0xf]
        %v3355 = vld [vmem:[%s223 + $0x10] sm:$0x3]
        %v3361 = vunpack.c.l.b16 %v3351
        %v3362 = vunpack.c.l.b16 %v3352
        %v3363 = vunpack.c.l.b16 %v3353
        %v3364 = vunpack.c.l.b16 %v3354
        %v3365 = vunpack.c.l.b16 %v3355
        %v3366 = vpack.c.b16 %v3362, %v3361
        %v3367 = vpack.c.b16 %v3364, %v3363
        %v3368 = vpack.c.b16 %v3365, %v3365
        %vm3371 = vcmask 293888
        %v3373 = vsel %vm3371, %v3335, 0
        %v3376 = vsel %vm3371, %v3336, 0
        %v3379 = vsel %vm3371, %v3337, 0
        %v3382 = vsel %vm3371, %v3338, 0
        %v3385 = vsel %vm3371, %v3339, 0
        %v3388 = vsel %vm3371, %v3340, 0
        %v3391 = vsel %vm3371, %v3341, 0
        %v3394 = vsel %vm3371, %v3342, 0
        %v3397 = vsel %vm3371, %v3343, 0
        %v3400 = vsel %vm3371, %v3344, 0
        %v3403 = vsel %vm3371, %v3345, 0
        %v3406 = vsel %vm3371, %v3346, 0
        %v3409 = vsel %vm3371, %v3347, 0
        %v3412 = vsel %vm3371, %v3348, 0
        %v3415 = vsel %vm3371, %v3349, 0
        %v3418 = vsel %vm3371, %v3350, 0
        %vm3420 = vcmask 1041408
        %v3422 = vsel %vm3420, %v3368, 0
        %3424 = vmatprep.subr.bf16.mxu0 0
        %3425 = vmatpush1.bf16.msra.mxu0 %v3366
        %3426 = vmatprep.subr.bf16.mxu0 0
        %3427 = vmatpush1.bf16.msra.mxu0 %v3367
        %3428 = vmatprep.subr.bf16.mxu0 0
        %3429 = vmatpush1.bf16.msra.mxu0 %v3422
        %3430 = vmatprep.subr.bf16.mxu0 0
        %3431 = vmatpush1.bf16.msra.mxu0 0
        %3432 = vmatprep.subr.bf16.mxu0 0
        %3433 = vmatpush1.bf16.msra.mxu0 0
        %3434 = vmatprep.subr.bf16.mxu0 0
        %3435 = vmatpush1.bf16.msra.mxu0 0
        %3436 = vmatprep.subr.bf16.mxu0 0
        %3437 = vmatpush1.bf16.msra.mxu0 0
        %3438 = vmatprep.subr.bf16.mxu0 0
        %3439 = vmatpush1.bf16.msra.mxu0 0
        %3440 = vmatprep.subr.bf16.mxu0 0
        %3441 = vmatpush1.bf16.msra.mxu0 0
        %3442 = vmatprep.subr.bf16.mxu0 0
        %3443 = vmatpush1.bf16.msra.mxu0 0
        %3444 = vmatprep.subr.bf16.mxu0 0
        %3445 = vmatpush1.bf16.msra.mxu0 0
        %3446 = vmatprep.subr.bf16.mxu0 0
        %3447 = vmatpush1.bf16.msra.mxu0 0
        %3448 = vmatprep.subr.bf16.mxu0 0
        %3449 = vmatpush1.bf16.msra.mxu0 0
        %3450 = vmatprep.subr.bf16.mxu0 0
        %3451 = vmatpush1.bf16.msra.mxu0 0
        %3452 = vmatprep.subr.bf16.mxu0 0
        %3453 = vmatpush1.bf16.msra.mxu0 0
        %3454 = vmatprep.subr.bf16.mxu0 0
        %3455 = vmatpush1.bf16.msra.mxu0 0
        %3456 = vmatprep.mubr.bf16.mxu0 0
        %3457 = vmatmul.mubr.bf16.gmra.mrb[0].mxu0 %v3373
        %v3458 = vpop.f32.mrb[0].mxu0
        %v3459 = vadd.f32 0.0, %v3458
        %v3460 = vpop.f32.mrb[0].mxu0
        %v3461 = vpop.f32.mrb[0].mxu0
        %v3462 = vadd.f32 0.0, %v3461
        %v3463 = vpop.f32.mrb[0].mxu0
        %3464 = vmatprep.mubr.bf16.mxu0 0
        %3465 = vmatmul.mubr.bf16.gmra.mrb[0].mxu0 %v3376
        %v3466 = vpop.f32.mrb[0].mxu0
        %v3467 = vadd.f32 0.0, %v3466
        %v3468 = vpop.f32.mrb[0].mxu0
        %v3469 = vpop.f32.mrb[0].mxu0
        %v3470 = vadd.f32 0.0, %v3469
        %v3471 = vpop.f32.mrb[0].mxu0
        %3472 = vmatprep.mubr.bf16.mxu0 0
        %3473 = vmatmul.mubr.bf16.gmra.mrb[0].mxu0 %v3379
        %v3474 = vpop.f32.mrb[0].mxu0
        %v3475 = vadd.f32 0.0, %v3474
        %v3476 = vpop.f32.mrb[0].mxu0
        %v3477 = vpop.f32.mrb[0].mxu0
        %v3478 = vadd.f32 0.0, %v3477
        %v3479 = vpop.f32.mrb[0].mxu0
        %3480 = vmatprep.mubr.bf16.mxu0 0
        %3481 = vmatmul.mubr.bf16.gmra.mrb[0].mxu0 %v3382
        %v3482 = vpop.f32.mrb[0].mxu0
        %v3483 = vadd.f32 0.0, %v3482
        %v3484 = vpop.f32.mrb[0].mxu0
        %v3485 = vpop.f32.mrb[0].mxu0
        %v3486 = vadd.f32 0.0, %v3485
        %v3487 = vpop.f32.mrb[0].mxu0
        %3488 = vmatprep.mubr.bf16.mxu0 0
        %3489 = vmatmul.mubr.bf16.gmra.mrb[0].mxu0 %v3385
        %v3490 = vpop.f32.mrb[0].mxu0
        %v3491 = vadd.f32 0.0, %v3490
        %v3492 = vpop.f32.mrb[0].mxu0
        %v3493 = vpop.f32.mrb[0].mxu0
        %v3494 = vadd.f32 0.0, %v3493
        %v3495 = vpop.f32.mrb[0].mxu0
        %3496 = vmatprep.mubr.bf16.mxu0 0
        %3497 = vmatmul.mubr.bf16.gmra.mrb[0].mxu0 %v3388
        %v3498 = vpop.f32.mrb[0].mxu0
        %v3499 = vadd.f32 0.0, %v3498
        %v3500 = vpop.f32.mrb[0].mxu0
        %v3501 = vpop.f32.mrb[0].mxu0
        %v3502 = vadd.f32 0.0, %v3501
        %v3503 = vpop.f32.mrb[0].mxu0
        %3504 = vmatprep.mubr.bf16.mxu0 0
        %3505 = vmatmul.mubr.bf16.gmra.mrb[0].mxu0 %v3391
        %v3506 = vpop.f32.mrb[0].mxu0
        %v3507 = vadd.f32 0.0, %v3506
        %v3508 = vpop.f32.mrb[0].mxu0
        %v3509 = vpop.f32.mrb[0].mxu0
        %v3510 = vadd.f32 0.0, %v3509
        %v3511 = vpop.f32.mrb[0].mxu0
        %3512 = vmatprep.mubr.bf16.mxu0 0
        %3513 = vmatmul.mubr.bf16.gmra.mrb[0].mxu0 %v3394
        %v3514 = vpop.f32.mrb[0].mxu0
        %v3515 = vadd.f32 0.0, %v3514
        %v3516 = vpop.f32.mrb[0].mxu0
        %v3517 = vpop.f32.mrb[0].mxu0
        %v3518 = vadd.f32 0.0, %v3517
        %v3519 = vpop.f32.mrb[0].mxu0
        %3520 = vmatprep.mubr.bf16.mxu0 0
        %3521 = vmatmul.mubr.bf16.gmra.mrb[0].mxu0 %v3397
        %v3522 = vpop.f32.mrb[0].mxu0
        %v3523 = vadd.f32 0.0, %v3522
        %v3524 = vpop.f32.mrb[0].mxu0
        %v3525 = vpop.f32.mrb[0].mxu0
        %v3526 = vadd.f32 0.0, %v3525
        %v3527 = vpop.f32.mrb[0].mxu0
        %3528 = vmatprep.mubr.bf16.mxu0 0
        %3529 = vmatmul.mubr.bf16.gmra.mrb[0].mxu0 %v3400
        %v3530 = vpop.f32.mrb[0].mxu0
        %v3531 = vadd.f32 0.0, %v3530
        %v3532 = vpop.f32.mrb[0].mxu0
        %v3533 = vpop.f32.mrb[0].mxu0
        %v3534 = vadd.f32 0.0, %v3533
        %v3535 = vpop.f32.mrb[0].mxu0
        %3536 = vmatprep.mubr.bf16.mxu0 0
        %3537 = vmatmul.mubr.bf16.gmra.mrb[0].mxu0 %v3403
        %v3538 = vpop.f32.mrb[0].mxu0
        %v3539 = vadd.f32 0.0, %v3538
        %v3540 = vpop.f32.mrb[0].mxu0
        %v3541 = vpop.f32.mrb[0].mxu0
        %v3542 = vadd.f32 0.0, %v3541
        %v3543 = vpop.f32.mrb[0].mxu0
        %3544 = vmatprep.mubr.bf16.mxu0 0
        %3545 = vmatmul.mubr.bf16.gmra.mrb[0].mxu0 %v3406
        %v3546 = vpop.f32.mrb[0].mxu0
        %v3547 = vadd.f32 0.0, %v3546
        %v3548 = vpop.f32.mrb[0].mxu0
        %v3549 = vpop.f32.mrb[0].mxu0
        %v3550 = vadd.f32 0.0, %v3549
        %v3551 = vpop.f32.mrb[0].mxu0
        %3552 = vmatprep.mubr.bf16.mxu0 0
        %3553 = vmatmul.mubr.bf16.gmra.mrb[0].mxu0 %v3409
        %v3554 = vpop.f32.mrb[0].mxu0
        %v3555 = vadd.f32 0.0, %v3554
        %v3556 = vpop.f32.mrb[0].mxu0
        %v3557 = vpop.f32.mrb[0].mxu0
        %v3558 = vadd.f32 0.0, %v3557
        %v3559 = vpop.f32.mrb[0].mxu0
        %3560 = vmatprep.mubr.bf16.mxu0 0
        %3561 = vmatmul.mubr.bf16.gmra.mrb[0].mxu0 %v3412
        %v3562 = vpop.f32.mrb[0].mxu0
        %v3563 = vadd.f32 0.0, %v3562
        %v3564 = vpop.f32.mrb[0].mxu0
        %v3565 = vpop.f32.mrb[0].mxu0
        %v3566 = vadd.f32 0.0, %v3565
        %v3567 = vpop.f32.mrb[0].mxu0
        %3568 = vmatprep.mubr.bf16.mxu0 0
        %3569 = vmatmul.mubr.bf16.gmra.mrb[0].mxu0 %v3415
        %v3570 = vpop.f32.mrb[0].mxu0
        %v3571 = vadd.f32 0.0, %v3570
        %v3572 = vpop.f32.mrb[0].mxu0
        %v3573 = vpop.f32.mrb[0].mxu0
        %v3574 = vadd.f32 0.0, %v3573
        %v3575 = vpop.f32.mrb[0].mxu0
        %3576 = vmatprep.mubr.bf16.mxu0 0
        %3577 = vmatmul.mubr.bf16.gmra.mrb[0].mxu0 %v3418
        %v3578 = vpop.f32.mrb[0].mxu0
        %v3579 = vadd.f32 0.0, %v3578
        %v3580 = vpop.f32.mrb[0].mxu0
        %v3581 = vpop.f32.mrb[0].mxu0
        %v3582 = vadd.f32 0.0, %v3581
        %v3583 = vpop.f32.mrb[0].mxu0
        %3584 = vdwg.mxu0
        %3585 = vst [vmem:[#allocation3] sm:$0xff] %v3459
        %3586 = vst [vmem:[#allocation3 + $0x8] sm:$0xff] %v3462
        %3587 = vst [vmem:[#allocation3 + $0x10] sm:$0xff] %v3467
        %3588 = vst [vmem:[#allocation3 + $0x18] sm:$0xff] %v3470
        %3589 = vst [vmem:[#allocation3 + $0x20] sm:$0xff] %v3475
        %3590 = vst [vmem:[#allocation3 + $0x28] sm:$0xff] %v3478
        %3591 = vst [vmem:[#allocation3 + $0x30] sm:$0xff] %v3483
        %3592 = vst [vmem:[#allocation3 + $0x38] sm:$0xff] %v3486
        %3593 = vst [vmem:[#allocation3 + $0x40] sm:$0xff] %v3491
        %3594 = vst [vmem:[#allocation3 + $0x48] sm:$0xff] %v3494
        %3595 = vst [vmem:[#allocation3 + $0x50] sm:$0xff] %v3499
        %3596 = vst [vmem:[#allocation3 + $0x58] sm:$0xff] %v3502
        %3597 = vst [vmem:[#allocation3 + $0x60] sm:$0xff] %v3507
        %3598 = vst [vmem:[#allocation3 + $0x68] sm:$0xff] %v3510
        %3599 = vst [vmem:[#allocation3 + $0x70] sm:$0xff] %v3515
        %3600 = vst [vmem:[#allocation3 + $0x78] sm:$0xff] %v3518
        %3601 = vst [vmem:[#allocation3 + $0x80] sm:$0xff] %v3523
        %3602 = vst [vmem:[#allocation3 + $0x88] sm:$0xff] %v3526
        %3603 = vst [vmem:[#allocation3 + $0x90] sm:$0xff] %v3531
        %3604 = vst [vmem:[#allocation3 + $0x98] sm:$0xff] %v3534
        %3605 = vst [vmem:[#allocation3 + $0xa0] sm:$0xff] %v3539
        %3606 = vst [vmem:[#allocation3 + $0xa8] sm:$0xff] %v3542
        %3607 = vst [vmem:[#allocation3 + $0xb0] sm:$0xff] %v3547
        %3608 = vst [vmem:[#allocation3 + $0xb8] sm:$0xff] %v3550
        %3609 = vst [vmem:[#allocation3 + $0xc0] sm:$0xff] %v3555
        %3610 = vst [vmem:[#allocation3 + $0xc8] sm:$0xff] %v3558
        %3611 = vst [vmem:[#allocation3 + $0xd0] sm:$0xff] %v3563
        %3612 = vst [vmem:[#allocation3 + $0xd8] sm:$0xff] %v3566
        %3613 = vst [vmem:[#allocation3 + $0xe0] sm:$0xff] %v3571
        %3614 = vst [vmem:[#allocation3 + $0xe8] sm:$0xff] %v3574
        %3615 = vst [vmem:[#allocation3 + $0xf0] sm:$0xff] %v3579
        %3616 = vst [vmem:[#allocation3 + $0xf8] sm:$0xff] %v3582
        %v3617 = vld [vmem:[#allocation3] sm:$0xff]
        %v3618 = vld [vmem:[#allocation3 + $0x8] sm:$0xff]
        %v3619 = vld [vmem:[#allocation3 + $0x10] sm:$0xff]
        %v3620 = vld [vmem:[#allocation3 + $0x18] sm:$0xff]
        %v3621 = vld [vmem:[#allocation3 + $0x20] sm:$0xff]
        %v3622 = vld [vmem:[#allocation3 + $0x28] sm:$0xff]
        %v3623 = vld [vmem:[#allocation3 + $0x30] sm:$0xff]
        %v3624 = vld [vmem:[#allocation3 + $0x38] sm:$0xff]
        %v3625 = vld [vmem:[#allocation3 + $0x40] sm:$0xff]
        %v3626 = vld [vmem:[#allocation3 + $0x48] sm:$0xff]
        %v3627 = vld [vmem:[#allocation3 + $0x50] sm:$0xff]
        %v3628 = vld [vmem:[#allocation3 + $0x58] sm:$0xff]
        %v3629 = vld [vmem:[#allocation3 + $0x60] sm:$0xff]
        %v3630 = vld [vmem:[#allocation3 + $0x68] sm:$0xff]
        %v3631 = vld [vmem:[#allocation3 + $0x70] sm:$0xff]
        %v3632 = vld [vmem:[#allocation3 + $0x78] sm:$0xff]
        %v3633 = vld [vmem:[#allocation3 + $0x80] sm:$0xff]
        %v3634 = vld [vmem:[#allocation3 + $0x88] sm:$0xff]
        %v3635 = vld [vmem:[#allocation3 + $0x90] sm:$0xff]
        %v3636 = vld [vmem:[#allocation3 + $0x98] sm:$0xff]
        %v3637 = vld [vmem:[#allocation3 + $0xa0] sm:$0xff]
        %v3638 = vld [vmem:[#allocation3 + $0xa8] sm:$0xff]
        %v3639 = vld [vmem:[#allocation3 + $0xb0] sm:$0xff]
        %v3640 = vld [vmem:[#allocation3 + $0xb8] sm:$0xff]
        %v3641 = vld [vmem:[#allocation3 + $0xc0] sm:$0xff]
        %v3642 = vld [vmem:[#allocation3 + $0xc8] sm:$0xff]
        %v3643 = vld [vmem:[#allocation3 + $0xd0] sm:$0xff]
        %v3644 = vld [vmem:[#allocation3 + $0xd8] sm:$0xff]
        %v3645 = vld [vmem:[#allocation3 + $0xe0] sm:$0xff]
        %v3646 = vld [vmem:[#allocation3 + $0xe8] sm:$0xff]
        %v3647 = vld [vmem:[#allocation3 + $0xf0] sm:$0xff]
        %v3648 = vld [vmem:[#allocation3 + $0xf8] sm:$0xff]
        %v3649 = vpack.c.bf16 %v3618, %v3617
        %v3650 = vpack.c.bf16 %v3620, %v3619
        %v3651 = vpack.c.bf16 %v3622, %v3621
        %v3652 = vpack.c.bf16 %v3624, %v3623
        %v3653 = vpack.c.bf16 %v3626, %v3625
        %v3654 = vpack.c.bf16 %v3628, %v3627
        %v3655 = vpack.c.bf16 %v3630, %v3629
        %v3656 = vpack.c.bf16 %v3632, %v3631
        %v3657 = vpack.c.bf16 %v3634, %v3633
        %v3658 = vpack.c.bf16 %v3636, %v3635
        %v3659 = vpack.c.bf16 %v3638, %v3637
        %v3660 = vpack.c.bf16 %v3640, %v3639
        %v3661 = vpack.c.bf16 %v3642, %v3641
        %v3662 = vpack.c.bf16 %v3644, %v3643
        %v3663 = vpack.c.bf16 %v3646, %v3645
        %v3664 = vpack.c.bf16 %v3648, %v3647
        %v3681 = vunpack.c.l.b16 %v3649
        %v3682 = vunpack.c.h.b16 %v3649
        %v3683 = vunpack.c.l.b16 %v3650
        %v3684 = vunpack.c.h.b16 %v3650
        %v3685 = vunpack.c.l.b16 %v3651
        %v3686 = vunpack.c.h.b16 %v3651
        %v3687 = vunpack.c.l.b16 %v3652
        %v3688 = vunpack.c.h.b16 %v3652
        %v3689 = vunpack.c.l.b16 %v3653
        %v3690 = vunpack.c.h.b16 %v3653
        %v3691 = vunpack.c.l.b16 %v3654
        %v3692 = vunpack.c.h.b16 %v3654
        %v3693 = vunpack.c.l.b16 %v3655
        %v3694 = vunpack.c.h.b16 %v3655
        %v3695 = vunpack.c.l.b16 %v3656
        %v3696 = vunpack.c.h.b16 %v3656
        %v3697 = vunpack.c.l.b16 %v3657
        %v3698 = vunpack.c.h.b16 %v3657
        %v3699 = vunpack.c.l.b16 %v3658
        %v3700 = vunpack.c.h.b16 %v3658
        %v3701 = vunpack.c.l.b16 %v3659
        %v3702 = vunpack.c.h.b16 %v3659
        %v3703 = vunpack.c.l.b16 %v3660
        %v3704 = vunpack.c.h.b16 %v3660
        %v3705 = vunpack.c.l.b16 %v3661
        %v3706 = vunpack.c.h.b16 %v3661
        %v3707 = vunpack.c.l.b16 %v3662
        %v3708 = vunpack.c.h.b16 %v3662
        %v3709 = vunpack.c.l.b16 %v3663
        %v3710 = vunpack.c.h.b16 %v3663
        %v3711 = vunpack.c.l.b16 %v3664
        %v3712 = vunpack.c.h.b16 %v3664
        %v3713 = vpack.c.b16 %v3681, %v3681
        %v3714 = vpack.c.b16 %v3682, %v3682
        %v3715 = vpack.c.b16 %v3683, %v3683
        %v3716 = vpack.c.b16 %v3684, %v3684
        %v3717 = vpack.c.b16 %v3685, %v3685
        %v3718 = vpack.c.b16 %v3686, %v3686
        %v3719 = vpack.c.b16 %v3687, %v3687
        %v3720 = vpack.c.b16 %v3688, %v3688
        %v3721 = vpack.c.b16 %v3689, %v3689
        %v3722 = vpack.c.b16 %v3690, %v3690
        %v3723 = vpack.c.b16 %v3691, %v3691
        %v3724 = vpack.c.b16 %v3692, %v3692
        %v3725 = vpack.c.b16 %v3693, %v3693
        %v3726 = vpack.c.b16 %v3694, %v3694
        %v3727 = vpack.c.b16 %v3695, %v3695
        %v3728 = vpack.c.b16 %v3696, %v3696
        %v3729 = vpack.c.b16 %v3697, %v3697
        %v3730 = vpack.c.b16 %v3698, %v3698
        %v3731 = vpack.c.b16 %v3699, %v3699
        %v3732 = vpack.c.b16 %v3700, %v3700
        %v3733 = vpack.c.b16 %v3701, %v3701
        %v3734 = vpack.c.b16 %v3702, %v3702
        %v3735 = vpack.c.b16 %v3703, %v3703
        %v3736 = vpack.c.b16 %v3704, %v3704
        %v3737 = vpack.c.b16 %v3705, %v3705
        %v3738 = vpack.c.b16 %v3706, %v3706
        %v3739 = vpack.c.b16 %v3707, %v3707
        %v3740 = vpack.c.b16 %v3708, %v3708
        %v3741 = vpack.c.b16 %v3709, %v3709
        %v3742 = vpack.c.b16 %v3710, %v3710
        %v3743 = vpack.c.b16 %v3711, %v3711
        %v3744 = vpack.c.b16 %v3712, %v3712
        %3777 = vst [vmem:[%s207] sm:$0xf] %v3713
        %3778 = vst [vmem:[%s207 + $0x4] sm:$0xf] %v3714
        %3779 = vst [vmem:[%s207 + $0x8] sm:$0xf] %v3715
        %3780 = vst [vmem:[%s207 + $0xc] sm:$0xf] %v3716
        %3781 = vst [vmem:[%s207 + $0x10] sm:$0xf] %v3717
        %3782 = vst [vmem:[%s207 + $0x14] sm:$0xf] %v3718
        %3783 = vst [vmem:[%s207 + $0x18] sm:$0xf] %v3719
        %3784 = vst [vmem:[%s207 + $0x1c] sm:$0xf] %v3720
        %3785 = vst [vmem:[%s207 + $0x20] sm:$0xf] %v3721
        %3786 = vst [vmem:[%s207 + $0x24] sm:$0xf] %v3722
        %3787 = vst [vmem:[%s207 + $0x28] sm:$0xf] %v3723
        %3788 = vst [vmem:[%s207 + $0x2c] sm:$0xf] %v3724
        %3789 = vst [vmem:[%s207 + $0x30] sm:$0xf] %v3725
        %3790 = vst [vmem:[%s207 + $0x34] sm:$0xf] %v3726
        %3791 = vst [vmem:[%s207 + $0x38] sm:$0xf] %v3727
        %3792 = vst [vmem:[%s207 + $0x3c] sm:$0xf] %v3728
        %3793 = vst [vmem:[%s207 + $0x40] sm:$0xf] %v3729
        %3794 = vst [vmem:[%s207 + $0x44] sm:$0xf] %v3730
        %3795 = vst [vmem:[%s207 + $0x48] sm:$0xf] %v3731
        %3796 = vst [vmem:[%s207 + $0x4c] sm:$0xf] %v3732
        %3797 = vst [vmem:[%s207 + $0x50] sm:$0xf] %v3733
        %3798 = vst [vmem:[%s207 + $0x54] sm:$0xf] %v3734
        %3799 = vst [vmem:[%s207 + $0x58] sm:$0xf] %v3735
        %3800 = vst [vmem:[%s207 + $0x5c] sm:$0xf] %v3736
        %3801 = vst [vmem:[%s207 + $0x60] sm:$0xf] %v3737
        %3802 = vst [vmem:[%s207 + $0x64] sm:$0xf] %v3738
        %3803 = vst [vmem:[%s207 + $0x68] sm:$0xf] %v3739
        %3804 = vst [vmem:[%s207 + $0x6c] sm:$0xf] %v3740
        %3805 = vst [vmem:[%s207 + $0x70] sm:$0xf] %v3741
        %3806 = vst [vmem:[%s207 + $0x74] sm:$0xf] %v3742
        %3807 = vst [vmem:[%s207 + $0x78] sm:$0xf] %v3743
        %3808 = vst [vmem:[%s207 + $0x7c] sm:$0xf] %v3744
        %v3809 = vld [vmem:[#allocation3] sm:$0xff]
        %v3810 = vld [vmem:[#allocation3 + $0x8] sm:$0xff]
        %v3811 = vld [vmem:[#allocation3 + $0x10] sm:$0xff]
        %v3812 = vld [vmem:[#allocation3 + $0x18] sm:$0xff]
        %v3813 = vld [vmem:[#allocation3 + $0x20] sm:$0xff]
        %v3814 = vld [vmem:[#allocation3 + $0x28] sm:$0xff]
        %v3815 = vld [vmem:[#allocation3 + $0x30] sm:$0xff]
        %v3816 = vld [vmem:[#allocation3 + $0x38] sm:$0xff]
        %v3817 = vld [vmem:[#allocation3 + $0x40] sm:$0xff]
        %v3818 = vld [vmem:[#allocation3 + $0x48] sm:$0xff]
        %v3819 = vld [vmem:[#allocation3 + $0x50] sm:$0xff]
        %v3820 = vld [vmem:[#allocation3 + $0x58] sm:$0xff]
        %v3821 = vld [vmem:[#allocation3 + $0x60] sm:$0xff]
        %v3822 = vld [vmem:[#allocation3 + $0x68] sm:$0xff]
        %v3823 = vld [vmem:[#allocation3 + $0x70] sm:$0xff]
        %v3824 = vld [vmem:[#allocation3 + $0x78] sm:$0xff]
        %v3825 = vld [vmem:[#allocation3 + $0x80] sm:$0xff]
        %v3826 = vld [vmem:[#allocation3 + $0x88] sm:$0xff]
        %v3827 = vld [vmem:[#allocation3 + $0x90] sm:$0xff]
        %v3828 = vld [vmem:[#allocation3 + $0x98] sm:$0xff]
        %v3829 = vld [vmem:[#allocation3 + $0xa0] sm:$0xff]
        %v3830 = vld [vmem:[#allocation3 + $0xa8] sm:$0xff]
        %v3831 = vld [vmem:[#allocation3 + $0xb0] sm:$0xff]
        %v3832 = vld [vmem:[#allocation3 + $0xb8] sm:$0xff]
        %v3833 = vld [vmem:[#allocation3 + $0xc0] sm:$0xff]
        %v3834 = vld [vmem:[#allocation3 + $0xc8] sm:$0xff]
        %v3835 = vld [vmem:[#allocation3 + $0xd0] sm:$0xff]
        %v3836 = vld [vmem:[#allocation3 + $0xd8] sm:$0xff]
        %v3837 = vld [vmem:[#allocation3 + $0xe0] sm:$0xff]
        %v3838 = vld [vmem:[#allocation3 + $0xe8] sm:$0xff]
        %v3839 = vld [vmem:[#allocation3 + $0xf0] sm:$0xff]
        %v3840 = vld [vmem:[#allocation3 + $0xf8] sm:$0xff]
        %v3841 = vadd.f32 %v3809, %v3810
        %v3842 = vadd.f32 %v3841, %v3811
        %v3843 = vadd.f32 %v3842, %v3812
        %v3844 = vadd.f32 %v3843, %v3813
        %v3845 = vadd.f32 %v3844, %v3814
        %v3846 = vadd.f32 %v3845, %v3815
        %v3847 = vadd.f32 %v3846, %v3816
        %v3848 = vadd.f32 %v3847, %v3817
        %v3849 = vadd.f32 %v3848, %v3818
        %v3850 = vadd.f32 %v3849, %v3819
        %v3851 = vadd.f32 %v3850, %v3820
        %v3852 = vadd.f32 %v3851, %v3821
        %v3853 = vadd.f32 %v3852, %v3822
        %v3854 = vadd.f32 %v3853, %v3823
        %v3855 = vadd.f32 %v3854, %v3824
        %v3856 = vadd.f32 %v3855, %v3825
        %v3857 = vadd.f32 %v3856, %v3826
        %v3858 = vadd.f32 %v3857, %v3827
        %v3859 = vadd.f32 %v3858, %v3828
        %v3860 = vadd.f32 %v3859, %v3829
        %v3861 = vadd.f32 %v3860, %v3830
        %v3862 = vadd.f32 %v3861, %v3831
        %v3863 = vadd.f32 %v3862, %v3832
        %v3864 = vadd.f32 %v3863, %v3833
        %v3865 = vadd.f32 %v3864, %v3834
        %v3866 = vadd.f32 %v3865, %v3835
        %v3867 = vadd.f32 %v3866, %v3836
        %v3868 = vadd.f32 %v3867, %v3837
        %v3869 = vadd.f32 %v3868, %v3838
        %v3870 = vadd.f32 %v3869, %v3839
        %v3871 = vadd.f32 %v3870, %v3840
        %v3872 = vrot.slane %v3871, 4
        %v3873 = vadd.f32 %v3871, %v3872
        %v3874 = vrot.slane %v3873, 2
        %v3875 = vadd.f32 %v3873, %v3874
        %v3876 = vrot.slane %v3875, 1
        %v3877 = vadd.f32 %v3875, %v3876
        %3878 = vst [vmem:[%s214] sm:$0x1] %v3877
        %v3879 = vld [vmem:[#allocation3] sm:$0xff]
        %v3880 = vld [vmem:[#allocation3 + $0x8] sm:$0xff]
        %v3881 = vld [vmem:[#allocation3 + $0x10] sm:$0xff]
        %v3882 = vld [vmem:[#allocation3 + $0x18] sm:$0xff]
        %v3883 = vld [vmem:[#allocation3 + $0x20] sm:$0xff]
        %v3884 = vld [vmem:[#allocation3 + $0x28] sm:$0xff]
        %v3885 = vld [vmem:[#allocation3 + $0x30] sm:$0xff]
        %v3886 = vld [vmem:[#allocation3 + $0x38] sm:$0xff]
        %v3887 = vld [vmem:[#allocation3 + $0x40] sm:$0xff]
        %v3888 = vld [vmem:[#allocation3 + $0x48] sm:$0xff]
        %v3889 = vld [vmem:[#allocation3 + $0x50] sm:$0xff]
        %v3890 = vld [vmem:[#allocation3 + $0x58] sm:$0xff]
        %v3891 = vld [vmem:[#allocation3 + $0x60] sm:$0xff]
        %v3892 = vld [vmem:[#allocation3 + $0x68] sm:$0xff]
        %v3893 = vld [vmem:[#allocation3 + $0x70] sm:$0xff]
        %v3894 = vld [vmem:[#allocation3 + $0x78] sm:$0xff]
        %v3895 = vld [vmem:[#allocation3 + $0x80] sm:$0xff]
        %v3896 = vld [vmem:[#allocation3 + $0x88] sm:$0xff]
        %v3897 = vld [vmem:[#allocation3 + $0x90] sm:$0xff]
        %v3898 = vld [vmem:[#allocation3 + $0x98] sm:$0xff]
        %v3899 = vld [vmem:[#allocation3 + $0xa0] sm:$0xff]
        %v3900 = vld [vmem:[#allocation3 + $0xa8] sm:$0xff]
        %v3901 = vld [vmem:[#allocation3 + $0xb0] sm:$0xff]
        %v3902 = vld [vmem:[#allocation3 + $0xb8] sm:$0xff]
        %v3903 = vld [vmem:[#allocation3 + $0xc0] sm:$0xff]
        %v3904 = vld [vmem:[#allocation3 + $0xc8] sm:$0xff]
        %v3905 = vld [vmem:[#allocation3 + $0xd0] sm:$0xff]
        %v3906 = vld [vmem:[#allocation3 + $0xd8] sm:$0xff]
        %v3907 = vld [vmem:[#allocation3 + $0xe0] sm:$0xff]
        %v3908 = vld [vmem:[#allocation3 + $0xe8] sm:$0xff]
        %v3909 = vld [vmem:[#allocation3 + $0xf0] sm:$0xff]
        %v3910 = vld [vmem:[#allocation3 + $0xf8] sm:$0xff]
        %v3911 = vmul.f32 %v3879, %v3879
        %v3912 = vmul.f32 %v3880, %v3880
        %v3913 = vmul.f32 %v3881, %v3881
        %v3914 = vmul.f32 %v3882, %v3882
        %v3915 = vmul.f32 %v3883, %v3883
        %v3916 = vmul.f32 %v3884, %v3884
        %v3917 = vmul.f32 %v3885, %v3885
        %v3918 = vmul.f32 %v3886, %v3886
        %v3919 = vmul.f32 %v3887, %v3887
        %v3920 = vmul.f32 %v3888, %v3888
        %v3921 = vmul.f32 %v3889, %v3889
        %v3922 = vmul.f32 %v3890, %v3890
        %v3923 = vmul.f32 %v3891, %v3891
        %v3924 = vmul.f32 %v3892, %v3892
        %v3925 = vmul.f32 %v3893, %v3893
        %v3926 = vmul.f32 %v3894, %v3894
        %v3927 = vmul.f32 %v3895, %v3895
        %v3928 = vmul.f32 %v3896, %v3896
        %v3929 = vmul.f32 %v3897, %v3897
        %v3930 = vmul.f32 %v3898, %v3898
        %v3931 = vmul.f32 %v3899, %v3899
        %v3932 = vmul.f32 %v3900, %v3900
        %v3933 = vmul.f32 %v3901, %v3901
        %v3934 = vmul.f32 %v3902, %v3902
        %v3935 = vmul.f32 %v3903, %v3903
        %v3936 = vmul.f32 %v3904, %v3904
        %v3937 = vmul.f32 %v3905, %v3905
        %v3938 = vmul.f32 %v3906, %v3906
        %v3939 = vmul.f32 %v3907, %v3907
        %v3940 = vmul.f32 %v3908, %v3908
        %v3941 = vmul.f32 %v3909, %v3909
        %v3942 = vmul.f32 %v3910, %v3910
        %v3943 = vadd.f32 %v3911, %v3912
        %v3944 = vadd.f32 %v3943, %v3913
        %v3945 = vadd.f32 %v3944, %v3914
        %v3946 = vadd.f32 %v3945, %v3915
        %v3947 = vadd.f32 %v3946, %v3916
        %v3948 = vadd.f32 %v3947, %v3917
        %v3949 = vadd.f32 %v3948, %v3918
        %v3950 = vadd.f32 %v3949, %v3919
        %v3951 = vadd.f32 %v3950, %v3920
        %v3952 = vadd.f32 %v3951, %v3921
        %v3953 = vadd.f32 %v3952, %v3922
        %v3954 = vadd.f32 %v3953, %v3923
        %v3955 = vadd.f32 %v3954, %v3924
        %v3956 = vadd.f32 %v3955, %v3925
        %v3957 = vadd.f32 %v3956, %v3926
        %v3958 = vadd.f32 %v3957, %v3927
        %v3959 = vadd.f32 %v3958, %v3928
        %v3960 = vadd.f32 %v3959, %v3929
        %v3961 = vadd.f32 %v3960, %v3930
        %v3962 = vadd.f32 %v3961, %v3931
        %v3963 = vadd.f32 %v3962, %v3932
        %v3964 = vadd.f32 %v3963, %v3933
        %v3965 = vadd.f32 %v3964, %v3934
        %v3966 = vadd.f32 %v3965, %v3935
        %v3967 = vadd.f32 %v3966, %v3936
        %v3968 = vadd.f32 %v3967, %v3937
        %v3969 = vadd.f32 %v3968, %v3938
        %v3970 = vadd.f32 %v3969, %v3939
        %v3971 = vadd.f32 %v3970, %v3940
        %v3972 = vadd.f32 %v3971, %v3941
        %v3973 = vadd.f32 %v3972, %v3942
        %v3974 = vrot.slane %v3973, 4
        %v3975 = vadd.f32 %v3973, %v3974
        %v3976 = vrot.slane %v3975, 2
        %v3977 = vadd.f32 %v3975, %v3976
        %v3978 = vrot.slane %v3977, 1
        %v3979 = vadd.f32 %v3977, %v3978
        %3980 = vst [vmem:[%s214 + $0x1] sm:$0x1] %v3979
        %s3981 = sand.u32 %s104, 1
        %s3982 = scalar_lea.sflag [#allocation5], %s3981
        %s3983 = sand.u32 %s104, 1
        %s3984 = smul.addr %s3983, 128
        %s3985 = scalar_lea.vmem [#allocation4], %s3984
        %s3986 = sand.u32 %s134, 1
        %s3987 = scalar_lea.sflag [#allocation7], %s3986
        %s3988 = sand.u32 %s134, 1
        %s3989 = smul.addr %s3988, 2
        %s3990 = scalar_lea.vmem [#allocation6], %s3989
        // Predicated region
        $region33: #{tpu_custom_call.1} parent=27 // pred_check
          %p3991 = pneg %p114
        $region34: #{tpu_custom_call.1} parent=27 // pred_check_branch
          %3993 = sbr.rel (%p3991) target = $region36
        $region35: #{tpu_custom_call.1} parent=27 // pred_region
          %s3994 = smul.u32 32, %s27
          %s3996 = ssub.s32 2048, 2048
          %3997 = vsyncadd %s3982, %s3996
          %s3998 = sadd.s32 %s28, %s3994
          %s3999 = smul.addr %s26, 32
          %s4000 = sadd.s32 %s3998, %s3999
          %s4001 = smul.addr %s4000, 64
          %s4002 = scalar_lea.hbm %s2, %s4001
          %s4003 = sshll.u32 %s3985, 4
          %s4004 = int_to_ptr.vmem [resolvable:$true] %s4003
          %4009 = dma.vmem_to_hbm [thread:$0]  %s4004, 2048, %s4002, %s3982, 64, 64, 4
        $region36: #{tpu_custom_call.1} parent=27 // pred_fallthru
          _
        // Predicated region
        $region37: #{tpu_custom_call.1} parent=27 // pred_check
          %p4010 = pneg %p144
        $region38: #{tpu_custom_call.1} parent=27 // pred_check_branch
          %4012 = sbr.rel (%p4010) target = $region40
        $region39: #{tpu_custom_call.1} parent=27 // pred_region
          %s4014 = ssub.s32 32, 32
          %4015 = vsyncadd %s3987, %s4014
          %s4016 = sadd.s32 %s28, %s27
          %s4017 = sadd.s32 %s4016, %s26
          %s4018 = smul.addr %s4017, 32
          %s4019 = scalar_lea.hbm %s3, %s4018
          %s4021 = sshll.u32 %s3990, 4
          %s4022 = int_to_ptr.vmem [resolvable:$true] %s4021
          %4024 = dma.vmem_to_hbm [thread:$0]  %s4022, 32, %s4019, %s3987
        $region40: #{tpu_custom_call.1} parent=27 // pred_fallthru
          _
      $region28: #{tpu_custom_call.1} parent=5 // pred_fallthru
        _
      %p4025 = scmp.le.s32.totalorder 2, %s16
      // Predicated region
      $region41: #{tpu_custom_call.1} parent=5 // pred_check
        %p4026 = pneg %p4025
      $region42: #{tpu_custom_call.1} parent=5 // pred_check_branch
        %4028 = sbr.rel (%p4026) target = $region44
      $region43: #{tpu_custom_call.1} parent=5 // pred_region
        %s4029 = ssub.s32 %s16, 2
        // Predicated region
        $region45: #{tpu_custom_call.1} parent=43 // pred_check
          %p4030 = pneg %p120
        $region46: #{tpu_custom_call.1} parent=43 // pred_check_branch
          %4032 = sbr.rel (%p4030) target = $region48
        $region47: #{tpu_custom_call.1} parent=43 // pred_region
          %s4033 = sand.u32 %s105, 1
          %s4034 = scalar_lea.sflag [#allocation5], %s4033
          %s4035 = sand.u32 %s105, 1
          %s4036 = smul.addr %s4035, 128
          %s4037 = scalar_lea.vmem [#allocation4], %s4036
          %4038 = dma.done %s4034, 2048
        $region48: #{tpu_custom_call.1} parent=43 // pred_fallthru
          _
        // Predicated region
        $region49: #{tpu_custom_call.1} parent=43 // pred_check
          %p4039 = pneg %p150
        $region50: #{tpu_custom_call.1} parent=43 // pred_check_branch
          %4041 = sbr.rel (%p4039) target = $region52
        $region51: #{tpu_custom_call.1} parent=43 // pred_region
          %s4042 = sand.u32 %s135, 1
          %s4043 = scalar_lea.sflag [#allocation7], %s4042
          %s4044 = sand.u32 %s135, 1
          %s4045 = smul.addr %s4044, 2
          %s4046 = scalar_lea.vmem [#allocation6], %s4045
          %4047 = dma.done %s4043, 32
        $region52: #{tpu_custom_call.1} parent=43 // pred_fallthru
          _
      $region44: #{tpu_custom_call.1} parent=5 // pred_fallthru
        _
    $region6: #{tpu_custom_call.1} parent=1 // loop_footer
      %s20 = sadd.s32 1, %s16
    $region7: #{tpu_custom_call.1} parent=1 // loop_footer_branch
      %15 = sbr.rel target = $region3
    $region8: #{tpu_custom_call.1} parent=1 // loop_exit
      _
    %4048 = vsyncpa [#allocation5], 1
    %s4049 = scalar_lea.sflag [#allocation5], 1
    %4050 = vsyncpa %s4049, 1
    %4051 = vsyncpa [#allocation7], 1
    %s4052 = scalar_lea.sflag [#allocation7], 1
    %4053 = vsyncpa %s4052, 1

</llo_original>
